<compile_context>
chip_gen: v7x
topology: tpu7x:2x2x1
jax: 0.10.0
libtpu: 0.0.40
codegen_flags: <defaults>
</compile_context>

<pallas_src>
import functools

import jax
import jax.numpy as jnp
from jax.experimental import pallas as pl
from jax.experimental.pallas import tpu as pltpu


# ------------------------------ Pallas kernel -------------------------------


def _upsample_conv_kernel(x_ref, w_ee_ref, w_eo_ref, w_oe_ref, w_oo_ref,
                          b_ref, g_ref, beta_ref, o_ref, patch_ref, *,
                          eps, apply_norm):
    """Fused ConvTranspose2d(k=3, s=2, p=1, op=1) [+ InstanceNorm2d(affine)].

    Phase decomposition: output pixel (2i+r, 2j+p) only receives contributions from
    inputs {(i,j), (i,j+1), (i+1,j), (i+1,j+1)} through a parity-dependent tap subset:
        ee: w[1,1]              eo: w[1,2], w[1,0]
        oe: w[0,1], w[2,1]      oo: w[0,2], w[2,2], w[2,0], w[0,0]

    x_ref     : (1, H, W, Cin)       bf16
    w_ee_ref  : (Cin,   CT) bf16     w_eo_ref: (2*Cin, CT) bf16
    w_oe_ref  : (2*Cin, CT) bf16     w_oo_ref: (4*Cin, CT) bf16
    b/g/beta  : (1, CT) f32
    o_ref     : (1, 2, 2, H*W, CT)   bf16;  o_ref[0, r, p, i*W+j, c] = out[2i+r, 2j+p, c]
    patch_ref : VMEM scratch (H, W, 4*Cin) bf16, lane order [x10 | x00 | x01 | x11]
    """
    H, W, Cin = x_ref.shape[1], x_ref.shape[2], x_ref.shape[3]
    HW = H * W

    # ---- in-kernel im2col (built once per image: Cout-tile axis is the fastest grid axis) ----
    @pl.when(pl.program_id(1) == 0)
    def _build_patch():
        xb = x_ref[0]                                                   # (H, W, Cin) bf16
        patch_ref[:, :, 1 * Cin:2 * Cin] = xb                           # x00 = x[i,   j  ]
        patch_ref[0:H - 1, :, 0 * Cin:1 * Cin] = xb[1:H, :, :]          # x10 = x[i+1, j  ]
        patch_ref[:, 0:W - 1, 2 * Cin:3 * Cin] = xb[:, 1:W, :]          # x01 = x[i,   j+1]
        patch_ref[0:H - 1, 0:W - 1, 3 * Cin:4 * Cin] = xb[1:H, 1:W, :]  # x11 = x[i+1, j+1]
        # zero only the bottom/right halo (no full-scratch memset)
        zrow = jnp.zeros((1, W, Cin), jnp.bfloat16)
        zcol = jnp.zeros((H, 1, Cin), jnp.bfloat16)
        patch_ref[H - 1:H, :, 0 * Cin:1 * Cin] = zrow                   # x10: last row
        patch_ref[:, W - 1:W, 2 * Cin:3 * Cin] = zcol                   # x01: last col
        patch_ref[H - 1:H, :, 3 * Cin:4 * Cin] = zrow                   # x11: last row
        patch_ref[:, W - 1:W, 3 * Cin:4 * Cin] = zcol                   # x11: last col

    dot = functools.partial(jnp.dot, preferred_element_type=jnp.float32)
    # per-phase fused-K contractions on the MXU (bf16 in, f32 accumulate)
    ee = dot(x_ref[0].reshape(HW, Cin), w_ee_ref[...])                          # (HW, CT)
    eo = dot(patch_ref[:, :, Cin:3 * Cin].reshape(HW, 2 * Cin), w_eo_ref[...])  # (HW, CT)
    oe = dot(patch_ref[:, :, 0:2 * Cin].reshape(HW, 2 * Cin), w_oe_ref[...])    # (HW, CT)
    oo = dot(patch_ref[...].reshape(HW, 4 * Cin), w_oo_ref[...])                # (HW, CT)

    out_dt = o_ref.dtype
    if apply_norm:
        # InstanceNorm2d stats straight from the f32 phase accumulators.
        # The conv bias cancels exactly under mean subtraction, so it is skipped here.
        s = (jnp.sum(ee, axis=0, keepdims=True) + jnp.sum(eo, axis=0, keepdims=True)
             + jnp.sum(oe, axis=0, keepdims=True) + jnp.sum(oo, axis=0, keepdims=True))
        ss = (jnp.sum(ee * ee, axis=0, keepdims=True)
              + jnp.sum(eo * eo, axis=0, keepdims=True)
              + jnp.sum(oe * oe, axis=0, keepdims=True)
              + jnp.sum(oo * oo, axis=0, keepdims=True))
        inv_n = 1.0 / (4 * HW)
        mean = s * inv_n
        var = jnp.maximum(ss * inv_n - mean * mean, 0.0)        # biased var (torch IN)
        scale = g_ref[...] * jax.lax.rsqrt(var + eps)           # (1, CT), f32
        shift = beta_ref[...] - mean * scale                    # (1, CT), f32
        # normalize + affine fused into the phase stores (no interleave temporaries)
        o_ref[0, 0, 0, :, :] = (ee * scale + shift).astype(out_dt)
        o_ref[0, 0, 1, :, :] = (eo * scale + shift).astype(out_dt)
        o_ref[0, 1, 0, :, :] = (oe * scale + shift).astype(out_dt)
        o_ref[0, 1, 1, :, :] = (oo * scale + shift).astype(out_dt)
    else:
        b = b_ref[...]                                          # (1, CT), f32
        o_ref[0, 0, 0, :, :] = (ee + b).astype(out_dt)
        o_ref[0, 0, 1, :, :] = (eo + b).astype(out_dt)
        o_ref[0, 1, 0, :, :] = (oe + b).astype(out_dt)
        o_ref[0, 1, 1, :, :] = (oo + b).astype(out_dt)


# ------------------------------ host-side glue -------------------------------


def _pack_deconv_weights(w):
    """Pack torch-layout ConvTranspose2d weights (Cin, Cout, 3, 3) into per-phase bf16
    matrices matching the kernel's patch lane order [x10|x00|x01|x11]."""
    wb = w.astype(jnp.bfloat16)
    t = lambda kh, kw: wb[:, :, kh, kw]                                    # (Cin, Cout)
    w_ee = t(1, 1)                                                         # [x00]
    w_eo = jnp.concatenate([t(1, 2), t(1, 0)], axis=0)                     # [x00, x01]
    w_oe = jnp.concatenate([t(0, 1), t(2, 1)], axis=0)                     # [x10, x00]
    w_oo = jnp.concatenate([t(0, 2), t(2, 2), t(2, 0), t(0, 0)], axis=0)   # [x10, x00, x01, x11]
    return w_ee, w_eo, w_oe, w_oo


def upsample_conv_pallas(x_nhwc_bf16, params, *, norm="instance", eps=1e-5):
    """Returns the phase-separated output (N, 2, 2, H*W, Cout) in bf16."""
    N, H, W, Cin = x_nhwc_bf16.shape
    w = params["w"]
    # TODO(synk): only the (kernel_size=3, stride=2, output_padding=1) UpSampleConv config
    # used by the style-transfer DeConvBlock is implemented; general k/s/op not covered.
    assert w.shape[0] == Cin and w.shape[2:] == (3, 3)
    assert norm in ("instance", "None")
    Cout = w.shape[1]

    w_ee, w_eo, w_oe, w_oo = _pack_deconv_weights(w)
    b = params["b"].reshape(1, Cout).astype(jnp.float32)
    g = params["gamma"].reshape(1, Cout).astype(jnp.float32)
    beta = params["beta"].reshape(1, Cout).astype(jnp.float32)

    CT = Cout if Cout <= 128 else 128            # lane channel tile
    assert Cout % CT == 0
    n_ct = Cout // CT
    HW = H * W

    kernel = functools.partial(_upsample_conv_kernel, eps=eps,
                               apply_norm=(norm == "instance"))

    # explicit VMEM budget: bf16 in/patch/out blocks (double-buffered) + f32 phase accumulators
    bytes_in = HW * Cin * 2
    bytes_patch = HW * 4 * Cin * 2
    bytes_w = 9 * Cin * CT * 2
    bytes_out = 4 * HW * CT * 2
    bytes_acc = 4 * HW * CT * 4
    budget = 2 * bytes_in + bytes_patch + 2 * bytes_w + 2 * bytes_out + bytes_acc
    vmem_limit = int(min(max(int(budget * 1.25) + (8 << 20), 32 << 20), 112 << 20))
    # TODO(synk): for v7x (64 MiB VMEM) at large H*W, add a row-band grid axis with a two-pass
    # InstanceNorm (conv+stats pass, normalize pass) instead of full-image residency; that same
    # axis would also feed both v7x TensorCores for batch=1 inference.

    cost = pl.CostEstimate(
        flops=int(2 * N * HW * 9 * Cin * Cout),
        transcendentals=int(N * Cout),
        bytes_accessed=int(N * HW * Cin * 2 + 9 * Cin * Cout * 2 + N * 4 * HW * Cout * 2))

    return pl.pallas_call(
        kernel,
        out_shape=jax.ShapeDtypeStruct((N, 2, 2, HW, Cout), jnp.bfloat16),
        grid=(N, n_ct),
        in_specs=[
            pl.BlockSpec((1, H, W, Cin), lambda n, c: (n, 0, 0, 0)),
            pl.BlockSpec((Cin, CT), lambda n, c: (0, c)),
            pl.BlockSpec((2 * Cin, CT), lambda n, c: (0, c)),
            pl.BlockSpec((2 * Cin, CT), lambda n, c: (0, c)),
            pl.BlockSpec((4 * Cin, CT), lambda n, c: (0, c)),
            pl.BlockSpec((1, CT), lambda n, c: (0, c)),
            pl.BlockSpec((1, CT), lambda n, c: (0, c)),
            pl.BlockSpec((1, CT), lambda n, c: (0, c)),
        ],
        out_specs=pl.BlockSpec((1, 2, 2, HW, CT), lambda n, c: (n, 0, 0, 0, c)),
        scratch_shapes=[pltpu.VMEM((H, W, 4 * Cin), jnp.bfloat16)],
        compiler_params=pltpu.CompilerParams(
            dimension_semantics=("parallel", "arbitrary" if n_ct > 1 else "parallel"),
            vmem_limit_bytes=vmem_limit),
        cost_estimate=cost,
    )(x_nhwc_bf16, w_ee, w_eo, w_oe, w_oo, b, g, beta)


@functools.partial(jax.jit, static_argnames=("norm",))
def upsample_conv_forward(x_nchw, params, norm="instance"):
    """Matches UpSampleConv.forward: NCHW f32 in -> NCHW f32 out."""
    # TODO(synk): norm='batch' (BatchNorm2d with running stats) not implemented.
    N, _, H, W = x_nchw.shape
    x = jnp.transpose(x_nchw, (0, 2, 3, 1)).astype(jnp.bfloat16)   # NCHW -> NHWC, bf16 for MXU
    y = upsample_conv_pallas(x, params, norm=norm)                 # (N, 2, 2, H*W, Cout) bf16
    Cout = y.shape[-1]
    y = y.reshape(N, 2, 2, H, W, Cout)
    # out[n, c, 2i+r, 2j+p] = y[n, r, p, i, j, c] — single XLA transpose, replaces the
    # NHWC->NCHW transpose the wrapper needed anyway (done in bf16, cast to f32 at the end).
    y = jnp.transpose(y, (0, 5, 3, 1, 4, 2)).reshape(N, Cout, 2 * H, 2 * W)
    return y.astype(jnp.float32)


def init_upsample_conv_params(key, in_channels, out_channels, kernel_size=3):
    # TODO(synk): deterministic He init instead of real pretrained weights.
    kw, kb = jax.random.split(key)
    fan = in_channels * kernel_size * kernel_size
    w = jax.random.normal(kw, (in_channels, out_channels, kernel_size, kernel_size),
                          jnp.float32) * (2.0 / fan) ** 0.5
    b = jax.random.normal(kb, (out_channels,), jnp.float32) * 0.05
    return {"w": w, "b": b,
            "gamma": jnp.ones((out_channels,), jnp.float32),
            "beta": jnp.zeros((out_channels,), jnp.float32)}


# --------------------------- pure-JAX reference ------------------------------


def reference_forward(x_nchw, params, eps=1e-5):
    """XLA reference with the same bf16 rounding of inputs/weights as the kernel."""
    x = jnp.transpose(x_nchw, (0, 2, 3, 1)).astype(jnp.bfloat16).astype(jnp.float32)
    w = params["w"].astype(jnp.bfloat16).astype(jnp.float32)         # (Cin, Cout, 3, 3)
    w_hwio = jnp.transpose(w, (2, 3, 0, 1))[::-1, ::-1, :, :]        # flipped, HWIO
    y = jax.lax.conv_general_dilated(
        x, w_hwio, window_strides=(1, 1), padding=[(1, 2), (1, 2)],
        lhs_dilation=(2, 2), rhs_dilation=(1, 1),
        dimension_numbers=("NHWC", "HWIO", "NHWC"),
        preferred_element_type=jnp.float32)
    y = y + params["b"].reshape(1, 1, 1, -1)
    mean = jnp.mean(y, axis=(1, 2), keepdims=True)
    var = jnp.mean((y - mean) ** 2, axis=(1, 2), keepdims=True)
    y = (y - mean) * jax.lax.rsqrt(var + eps)
    y = y * params["gamma"].reshape(1, 1, 1, -1) + params["beta"].reshape(1, 1, 1, -1)
    return jnp.transpose(y, (0, 3, 1, 2))


if __name__ == "__main__":
    key = jax.random.PRNGKey(0)
    kp, kx = jax.random.split(key)
    in_ch, out_ch = 4, 8
    params = init_upsample_conv_params(kp, in_ch, out_ch)
    x = jax.random.normal(kx, (2, in_ch, 16, 16), jnp.float32)   # NCHW, like PyTorch

    out = jax.block_until_ready(upsample_conv_forward(x, params))
    assert out.shape == (2, out_ch, 32, 32), out.shape
    assert bool(jnp.all(jnp.isfinite(out)))

    ref = jax.block_until_ready(reference_forward(x, params))
    max_err = float(jnp.max(jnp.abs(out - ref)))
    # bf16 output storage => tolerance is a couple of bf16 ulps of the (unit-variance) output
    assert max_err < 3e-2, f"mismatch vs reference: {max_err}"
    print("KERNEL_OK")
</pallas_src>

<mosaic_0001>
module attributes {stable_mosaic.version = 11 : i64} {
  func.func @_upsample_conv_kernel(%arg0: i32, %arg1: i32, %arg2: memref<1x16x16x4xbf16, #tpu.memory_space<vmem>>, %arg3: memref<4x8xbf16, #tpu.memory_space<vmem>>, %arg4: memref<8x8xbf16, #tpu.memory_space<vmem>>, %arg5: memref<8x8xbf16, #tpu.memory_space<vmem>>, %arg6: memref<16x8xbf16, #tpu.memory_space<vmem>>, %arg7: memref<1x8xf32, #tpu.memory_space<vmem>>, %arg8: memref<1x8xf32, #tpu.memory_space<vmem>>, %arg9: memref<1x8xf32, #tpu.memory_space<vmem>>, %arg10: memref<1x2x2x256x8xbf16, #tpu.memory_space<vmem>>, %arg11: memref<16x16x16xbf16, #tpu.memory_space<vmem>>) attributes {dimension_semantics = [#tpu.dimension_semantics<parallel>, #tpu.dimension_semantics<parallel>], iteration_bounds = array<i64: 2, 1>, scalar_prefetch = 0 : i64, scratch_operands = 1 : i64, tpu.core_type = #tpu.core_type<tc>, window_params = [{transform_indices = @transform_0, window_bounds = array<i64: 1, 16, 16, 4>}, {transform_indices = @transform_1, window_bounds = array<i64: 4, 8>}, {transform_indices = @transform_2, window_bounds = array<i64: 8, 8>}, {transform_indices = @transform_3, window_bounds = array<i64: 8, 8>}, {transform_indices = @transform_4, window_bounds = array<i64: 16, 8>}, {transform_indices = @transform_5, window_bounds = array<i64: 1, 8>}, {transform_indices = @transform_6, window_bounds = array<i64: 1, 8>}, {transform_indices = @transform_7, window_bounds = array<i64: 1, 8>}, {transform_indices = @transform_8, window_bounds = array<i64: 1, 2, 2, 256, 8>}]} {
    %c0_i32 = arith.constant 0 : i32
    %0 = arith.cmpi eq, %arg1, %c0_i32 : i32
    %1 = arith.extui %0 : i1 to i32
    %c0_i32_0 = arith.constant 0 : i32
    %2 = arith.cmpi ne, %1, %c0_i32_0 : i32
    scf.if %2 {
      %c0_58 = arith.constant 0 : index
      %c0_59 = arith.constant 0 : index
      %c0_60 = arith.constant 0 : index
      %c0_61 = arith.constant 0 : index
      %94 = vector.load %arg2[%c0_58, %c0_59, %c0_60, %c0_61] : memref<1x16x16x4xbf16, #tpu.memory_space<vmem>>, vector<1x16x16x4xbf16>
      %95 = vector.shape_cast %94 : vector<1x16x16x4xbf16> to vector<16x16x4xbf16>
      %c0_62 = arith.constant 0 : index
      %c0_63 = arith.constant 0 : index
      %c4_64 = arith.constant 4 : index
      %96 = vector.load %arg11[%c0_62, %c0_63, %c4_64] : memref<16x16x16xbf16, #tpu.memory_space<vmem>>, vector<16x16x4xbf16>
      tpu.vector_store %arg11[%c0_62, %c0_63, %c4_64], %95 {strides = array<i32>} : memref<16x16x16xbf16, #tpu.memory_space<vmem>>, vector<16x16x4xbf16>,
      %97 = vector.extract_strided_slice %95 {offsets = [1, 0, 0], sizes = [15, 16, 4], strides = [1, 1, 1]} : vector<16x16x4xbf16> to vector<15x16x4xbf16>
      %c0_65 = arith.constant 0 : index
      %c0_66 = arith.constant 0 : index
      %c0_67 = arith.constant 0 : index
      %98 = vector.load %arg11[%c0_65, %c0_66, %c0_67] : memref<16x16x16xbf16, #tpu.memory_space<vmem>>, vector<15x16x4xbf16>
      tpu.vector_store %arg11[%c0_65, %c0_66, %c0_67], %97 {strides = array<i32>} : memref<16x16x16xbf16, #tpu.memory_space<vmem>>, vector<15x16x4xbf16>,
      %99 = vector.extract_strided_slice %95 {offsets = [0, 1, 0], sizes = [16, 15, 4], strides = [1, 1, 1]} : vector<16x16x4xbf16> to vector<16x15x4xbf16>
      %c0_68 = arith.constant 0 : index
      %c0_69 = arith.constant 0 : index
      %c8 = arith.constant 8 : index
      %100 = vector.load %arg11[%c0_68, %c0_69, %c8] : memref<16x16x16xbf16, #tpu.memory_space<vmem>>, vector<16x15x4xbf16>
      tpu.vector_store %arg11[%c0_68, %c0_69, %c8], %99 {strides = array<i32>} : memref<16x16x16xbf16, #tpu.memory_space<vmem>>, vector<16x15x4xbf16>,
      %101 = vector.extract_strided_slice %95 {offsets = [1, 1, 0], sizes = [15, 15, 4], strides = [1, 1, 1]} : vector<16x16x4xbf16> to vector<15x15x4xbf16>
      %c0_70 = arith.constant 0 : index
      %c0_71 = arith.constant 0 : index
      %c12 = arith.constant 12 : index
      %102 = vector.load %arg11[%c0_70, %c0_71, %c12] : memref<16x16x16xbf16, #tpu.memory_space<vmem>>, vector<15x15x4xbf16>
      tpu.vector_store %arg11[%c0_70, %c0_71, %c12], %101 {strides = array<i32>} : memref<16x16x16xbf16, #tpu.memory_space<vmem>>, vector<15x15x4xbf16>,
      %cst_72 = arith.constant 0.000000e+00 : bf16
      %103 = vector.broadcast %cst_72 : bf16 to vector<1x16x4xbf16>
      %cst_73 = arith.constant 0.000000e+00 : bf16
      %104 = vector.broadcast %cst_73 : bf16 to vector<16x1x4xbf16>
      %c15 = arith.constant 15 : index
      %c0_74 = arith.constant 0 : index
      %c0_75 = arith.constant 0 : index
      %105 = vector.load %arg11[%c15, %c0_74, %c0_75] : memref<16x16x16xbf16, #tpu.memory_space<vmem>>, vector<1x16x4xbf16>
      tpu.vector_store %arg11[%c15, %c0_74, %c0_75], %103 {strides = array<i32>} : memref<16x16x16xbf16, #tpu.memory_space<vmem>>, vector<1x16x4xbf16>,
      %c0_76 = arith.constant 0 : index
      %c15_77 = arith.constant 15 : index
      %c8_78 = arith.constant 8 : index
      %106 = vector.load %arg11[%c0_76, %c15_77, %c8_78] : memref<16x16x16xbf16, #tpu.memory_space<vmem>>, vector<16x1x4xbf16>
      tpu.vector_store %arg11[%c0_76, %c15_77, %c8_78], %104 {strides = array<i32>} : memref<16x16x16xbf16, #tpu.memory_space<vmem>>, vector<16x1x4xbf16>,
      %c15_79 = arith.constant 15 : index
      %c0_80 = arith.constant 0 : index
      %c12_81 = arith.constant 12 : index
      %107 = vector.load %arg11[%c15_79, %c0_80, %c12_81] : memref<16x16x16xbf16, #tpu.memory_space<vmem>>, vector<1x16x4xbf16>
      tpu.vector_store %arg11[%c15_79, %c0_80, %c12_81], %103 {strides = array<i32>} : memref<16x16x16xbf16, #tpu.memory_space<vmem>>, vector<1x16x4xbf16>,
      %c0_82 = arith.constant 0 : index
      %c15_83 = arith.constant 15 : index
      %c12_84 = arith.constant 12 : index
      %108 = vector.load %arg11[%c0_82, %c15_83, %c12_84] : memref<16x16x16xbf16, #tpu.memory_space<vmem>>, vector<16x1x4xbf16>
      tpu.vector_store %arg11[%c0_82, %c15_83, %c12_84], %104 {strides = array<i32>} : memref<16x16x16xbf16, #tpu.memory_space<vmem>>, vector<16x1x4xbf16>,
    } else {
    }
    %c0 = arith.constant 0 : index
    %c0_1 = arith.constant 0 : index
    %c0_2 = arith.constant 0 : index
    %c0_3 = arith.constant 0 : index
    %3 = vector.load %arg2[%c0, %c0_1, %c0_2, %c0_3] : memref<1x16x16x4xbf16, #tpu.memory_space<vmem>>, vector<1x16x16x4xbf16>
    %4 = vector.shape_cast %3 : vector<1x16x16x4xbf16> to vector<16x16x4xbf16>
    %5 = vector.shape_cast %4 : vector<16x16x4xbf16> to vector<256x4xbf16>
    %c0_4 = arith.constant 0 : index
    %c0_5 = arith.constant 0 : index
    %6 = vector.load %arg3[%c0_4, %c0_5] : memref<4x8xbf16, #tpu.memory_space<vmem>>, vector<4x8xbf16>
    %cst = arith.constant dense<0.000000e+00> : vector<256x8xf32>
    %7 = tpu.matmul %5, %6, %cst {dimension_numbers = #tpu.dot_dimension_numbers<[1], [0], [0], [1], [0, 0, 1, 1], [], []>} : vector<256x4xbf16>, vector<4x8xbf16>, vector<256x8xf32> -> vector<256x8xf32>
    %c0_6 = arith.constant 0 : index
    %c0_7 = arith.constant 0 : index
    %c4 = arith.constant 4 : index
    %8 = vector.load %arg11[%c0_6, %c0_7, %c4] : memref<16x16x16xbf16, #tpu.memory_space<vmem>>, vector<16x16x8xbf16>
    %9 = vector.shape_cast %8 : vector<16x16x8xbf16> to vector<256x8xbf16>
    %c0_8 = arith.constant 0 : index
    %c0_9 = arith.constant 0 : index
    %10 = vector.load %arg4[%c0_8, %c0_9] : memref<8x8xbf16, #tpu.memory_space<vmem>>, vector<8x8xbf16>
    %cst_10 = arith.constant dense<0.000000e+00> : vector<256x8xf32>
    %11 = tpu.matmul %9, %10, %cst_10 {dimension_numbers = #tpu.dot_dimension_numbers<[1], [0], [0], [1], [0, 0, 1, 1], [], []>} : vector<256x8xbf16>, vector<8x8xbf16>, vector<256x8xf32> -> vector<256x8xf32>
    %c0_11 = arith.constant 0 : index
    %c0_12 = arith.constant 0 : index
    %c0_13 = arith.constant 0 : index
    %12 = vector.load %arg11[%c0_11, %c0_12, %c0_13] : memref<16x16x16xbf16, #tpu.memory_space<vmem>>, vector<16x16x8xbf16>
    %13 = vector.shape_cast %12 : vector<16x16x8xbf16> to vector<256x8xbf16>
    %c0_14 = arith.constant 0 : index
    %c0_15 = arith.constant 0 : index
    %14 = vector.load %arg5[%c0_14, %c0_15] : memref<8x8xbf16, #tpu.memory_space<vmem>>, vector<8x8xbf16>
    %cst_16 = arith.constant dense<0.000000e+00> : vector<256x8xf32>
    %15 = tpu.matmul %13, %14, %cst_16 {dimension_numbers = #tpu.dot_dimension_numbers<[1], [0], [0], [1], [0, 0, 1, 1], [], []>} : vector<256x8xbf16>, vector<8x8xbf16>, vector<256x8xf32> -> vector<256x8xf32>
    %c0_17 = arith.constant 0 : index
    %c0_18 = arith.constant 0 : index
    %c0_19 = arith.constant 0 : index
    %16 = vector.load %arg11[%c0_17, %c0_18, %c0_19] : memref<16x16x16xbf16, #tpu.memory_space<vmem>>, vector<16x16x16xbf16>
    %17 = vector.shape_cast %16 : vector<16x16x16xbf16> to vector<256x16xbf16>
    %c0_20 = arith.constant 0 : index
    %c0_21 = arith.constant 0 : index
    %18 = vector.load %arg6[%c0_20, %c0_21] : memref<16x8xbf16, #tpu.memory_space<vmem>>, vector<16x8xbf16>
    %cst_22 = arith.constant dense<0.000000e+00> : vector<256x8xf32>
    %19 = tpu.matmul %17, %18, %cst_22 {dimension_numbers = #tpu.dot_dimension_numbers<[1], [0], [0], [1], [0, 0, 1, 1], [], []>} : vector<256x16xbf16>, vector<16x8xbf16>, vector<256x8xf32> -> vector<256x8xf32>
    %cst_23 = arith.constant dense<0.000000e+00> : vector<8xf32>
    %20 = vector.multi_reduction <add>, %7, %cst_23 [0] : vector<256x8xf32> to vector<8xf32>
    %21 = vector.shape_cast %20 : vector<8xf32> to vector<1x8xf32>
    %cst_24 = arith.constant dense<0.000000e+00> : vector<8xf32>
    %22 = vector.multi_reduction <add>, %11, %cst_24 [0] : vector<256x8xf32> to vector<8xf32>
    %23 = vector.shape_cast %22 : vector<8xf32> to vector<1x8xf32>
    %24 = arith.addf %21, %23 : vector<1x8xf32>
    %cst_25 = arith.constant dense<0.000000e+00> : vector<8xf32>
    %25 = vector.multi_reduction <add>, %15, %cst_25 [0] : vector<256x8xf32> to vector<8xf32>
    %26 = vector.shape_cast %25 : vector<8xf32> to vector<1x8xf32>
    %27 = arith.addf %24, %26 : vector<1x8xf32>
    %cst_26 = arith.constant dense<0.000000e+00> : vector<8xf32>
    %28 = vector.multi_reduction <add>, %19, %cst_26 [0] : vector<256x8xf32> to vector<8xf32>
    %29 = vector.shape_cast %28 : vector<8xf32> to vector<1x8xf32>
    %30 = arith.addf %27, %29 : vector<1x8xf32>
    %31 = arith.mulf %7, %7 : vector<256x8xf32>
    %cst_27 = arith.constant dense<0.000000e+00> : vector<8xf32>
    %32 = vector.multi_reduction <add>, %31, %cst_27 [0] : vector<256x8xf32> to vector<8xf32>
    %33 = vector.shape_cast %32 : vector<8xf32> to vector<1x8xf32>
    %34 = arith.mulf %11, %11 : vector<256x8xf32>
    %cst_28 = arith.constant dense<0.000000e+00> : vector<8xf32>
    %35 = vector.multi_reduction <add>, %34, %cst_28 [0] : vector<256x8xf32> to vector<8xf32>
    %36 = vector.shape_cast %35 : vector<8xf32> to vector<1x8xf32>
    %37 = arith.addf %33, %36 : vector<1x8xf32>
    %38 = arith.mulf %15, %15 : vector<256x8xf32>
    %cst_29 = arith.constant dense<0.000000e+00> : vector<8xf32>
    %39 = vector.multi_reduction <add>, %38, %cst_29 [0] : vector<256x8xf32> to vector<8xf32>
    %40 = vector.shape_cast %39 : vector<8xf32> to vector<1x8xf32>
    %41 = arith.addf %37, %40 : vector<1x8xf32>
    %42 = arith.mulf %19, %19 : vector<256x8xf32>
    %cst_30 = arith.constant dense<0.000000e+00> : vector<8xf32>
    %43 = vector.multi_reduction <add>, %42, %cst_30 [0] : vector<256x8xf32> to vector<8xf32>
    %44 = vector.shape_cast %43 : vector<8xf32> to vector<1x8xf32>
    %45 = arith.addf %41, %44 : vector<1x8xf32>
    %cst_31 = arith.constant 9.765625E-4 : f32
    %46 = vector.broadcast %cst_31 : f32 to vector<1x8xf32>
    %47 = arith.mulf %30, %46 : vector<1x8xf32>
    %cst_32 = arith.constant 9.765625E-4 : f32
    %48 = vector.broadcast %cst_32 : f32 to vector<1x8xf32>
    %49 = arith.mulf %45, %48 : vector<1x8xf32>
    %50 = arith.mulf %47, %47 : vector<1x8xf32>
    %51 = arith.subf %49, %50 : vector<1x8xf32>
    %cst_33 = arith.constant 0.000000e+00 : f32
    %52 = vector.broadcast %cst_33 : f32 to vector<1x8xf32>
    %53 = arith.maximumf %51, %52 : vector<1x8xf32>
    %c0_34 = arith.constant 0 : index
    %c0_35 = arith.constant 0 : index
    %54 = vector.load %arg8[%c0_34, %c0_35] : memref<1x8xf32, #tpu.memory_space<vmem>>, vector<1x8xf32>
    %cst_36 = arith.constant 9.99999974E-6 : f32
    %55 = vector.broadcast %cst_36 : f32 to vector<1x8xf32>
    %56 = arith.addf %53, %55 : vector<1x8xf32>
    %57 = math.rsqrt %56 : vector<1x8xf32>
    %58 = arith.mulf %54, %57 : vector<1x8xf32>
    %c0_37 = arith.constant 0 : index
    %c0_38 = arith.constant 0 : index
    %59 = vector.load %arg9[%c0_37, %c0_38] : memref<1x8xf32, #tpu.memory_space<vmem>>, vector<1x8xf32>
    %60 = arith.mulf %47, %58 : vector<1x8xf32>
    %61 = arith.subf %59, %60 : vector<1x8xf32>
    %62 = vector.broadcast %58 : vector<1x8xf32> to vector<256x8xf32>
    %63 = arith.mulf %7, %62 : vector<256x8xf32>
    %64 = vector.broadcast %61 : vector<1x8xf32> to vector<256x8xf32>
    %65 = arith.addf %63, %64 : vector<256x8xf32>
    %66 = arith.truncf %65 : vector<256x8xf32> to vector<256x8xbf16>
    %c0_39 = arith.constant 0 : index
    %c0_40 = arith.constant 0 : index
    %c0_41 = arith.constant 0 : index
    %c0_42 = arith.constant 0 : index
    %c0_43 = arith.constant 0 : index
    %67 = vector.load %arg10[%c0_39, %c0_40, %c0_41, %c0_42, %c0_43] : memref<1x2x2x256x8xbf16, #tpu.memory_space<vmem>>, vector<1x1x1x256x8xbf16>
    %68 = vector.shape_cast %67 : vector<1x1x1x256x8xbf16> to vector<256x8xbf16>
    %69 = vector.shape_cast %66 : vector<256x8xbf16> to vector<1x1x1x256x8xbf16>
    tpu.vector_store %arg10[%c0_39, %c0_40, %c0_41, %c0_42, %c0_43], %69 {strides = array<i32>} : memref<1x2x2x256x8xbf16, #tpu.memory_space<vmem>>, vector<1x1x1x256x8xbf16>,
    %70 = vector.broadcast %58 : vector<1x8xf32> to vector<256x8xf32>
    %71 = arith.mulf %11, %70 : vector<256x8xf32>
    %72 = vector.broadcast %61 : vector<1x8xf32> to vector<256x8xf32>
    %73 = arith.addf %71, %72 : vector<256x8xf32>
    %74 = arith.truncf %73 : vector<256x8xf32> to vector<256x8xbf16>
    %c0_44 = arith.constant 0 : index
    %c0_45 = arith.constant 0 : index
    %c1 = arith.constant 1 : index
    %c0_46 = arith.constant 0 : index
    %c0_47 = arith.constant 0 : index
    %75 = vector.load %arg10[%c0_44, %c0_45, %c1, %c0_46, %c0_47] : memref<1x2x2x256x8xbf16, #tpu.memory_space<vmem>>, vector<1x1x1x256x8xbf16>
    %76 = vector.shape_cast %75 : vector<1x1x1x256x8xbf16> to vector<256x8xbf16>
    %77 = vector.shape_cast %74 : vector<256x8xbf16> to vector<1x1x1x256x8xbf16>
    tpu.vector_store %arg10[%c0_44, %c0_45, %c1, %c0_46, %c0_47], %77 {strides = array<i32>} : memref<1x2x2x256x8xbf16, #tpu.memory_space<vmem>>, vector<1x1x1x256x8xbf16>,
    %78 = vector.broadcast %58 : vector<1x8xf32> to vector<256x8xf32>
    %79 = arith.mulf %15, %78 : vector<256x8xf32>
    %80 = vector.broadcast %61 : vector<1x8xf32> to vector<256x8xf32>
    %81 = arith.addf %79, %80 : vector<256x8xf32>
    %82 = arith.truncf %81 : vector<256x8xf32> to vector<256x8xbf16>
    %c0_48 = arith.constant 0 : index
    %c1_49 = arith.constant 1 : index
    %c0_50 = arith.constant 0 : index
    %c0_51 = arith.constant 0 : index
    %c0_52 = arith.constant 0 : index
    %83 = vector.load %arg10[%c0_48, %c1_49, %c0_50, %c0_51, %c0_52] : memref<1x2x2x256x8xbf16, #tpu.memory_space<vmem>>, vector<1x1x1x256x8xbf16>
    %84 = vector.shape_cast %83 : vector<1x1x1x256x8xbf16> to vector<256x8xbf16>
    %85 = vector.shape_cast %82 : vector<256x8xbf16> to vector<1x1x1x256x8xbf16>
    tpu.vector_store %arg10[%c0_48, %c1_49, %c0_50, %c0_51, %c0_52], %85 {strides = array<i32>} : memref<1x2x2x256x8xbf16, #tpu.memory_space<vmem>>, vector<1x1x1x256x8xbf16>,
    %86 = vector.broadcast %58 : vector<1x8xf32> to vector<256x8xf32>
    %87 = arith.mulf %19, %86 : vector<256x8xf32>
    %88 = vector.broadcast %61 : vector<1x8xf32> to vector<256x8xf32>
    %89 = arith.addf %87, %88 : vector<256x8xf32>
    %90 = arith.truncf %89 : vector<256x8xf32> to vector<256x8xbf16>
    %c0_53 = arith.constant 0 : index
    %c1_54 = arith.constant 1 : index
    %c1_55 = arith.constant 1 : index
    %c0_56 = arith.constant 0 : index
    %c0_57 = arith.constant 0 : index
    %91 = vector.load %arg10[%c0_53, %c1_54, %c1_55, %c0_56, %c0_57] : memref<1x2x2x256x8xbf16, #tpu.memory_space<vmem>>, vector<1x1x1x256x8xbf16>
    %92 = vector.shape_cast %91 : vector<1x1x1x256x8xbf16> to vector<256x8xbf16>
    %93 = vector.shape_cast %90 : vector<256x8xbf16> to vector<1x1x1x256x8xbf16>
    tpu.vector_store %arg10[%c0_53, %c1_54, %c1_55, %c0_56, %c0_57], %93 {strides = array<i32>} : memref<1x2x2x256x8xbf16, #tpu.memory_space<vmem>>, vector<1x1x1x256x8xbf16>,
    return
  }
  func.func @transform_0(%arg0: i32, %arg1: i32) -> (i32, i32, i32, i32) {
    %c0_i32 = arith.constant 0 : i32
    %c0_i32_0 = arith.constant 0 : i32
    %c0_i32_1 = arith.constant 0 : i32
    %c0_i32_2 = arith.constant 0 : i32
    return %arg0, %c0_i32, %c0_i32_0, %c0_i32_1 : i32, i32, i32, i32
  }
  func.func @transform_1(%arg0: i32, %arg1: i32) -> (i32, i32) {
    %c0_i32 = arith.constant 0 : i32
    %c0_i32_0 = arith.constant 0 : i32
    return %c0_i32, %arg1 : i32, i32
  }
  func.func @transform_2(%arg0: i32, %arg1: i32) -> (i32, i32) {
    %c0_i32 = arith.constant 0 : i32
    %c0_i32_0 = arith.constant 0 : i32
    return %c0_i32, %arg1 : i32, i32
  }
  func.func @transform_3(%arg0: i32, %arg1: i32) -> (i32, i32) {
    %c0_i32 = arith.constant 0 : i32
    %c0_i32_0 = arith.constant 0 : i32
    return %c0_i32, %arg1 : i32, i32
  }
  func.func @transform_4(%arg0: i32, %arg1: i32) -> (i32, i32) {
    %c0_i32 = arith.constant 0 : i32
    %c0_i32_0 = arith.constant 0 : i32
    return %c0_i32, %arg1 : i32, i32
  }
  func.func @transform_5(%arg0: i32, %arg1: i32) -> (i32, i32) {
    %c0_i32 = arith.constant 0 : i32
    %c0_i32_0 = arith.constant 0 : i32
    return %c0_i32, %arg1 : i32, i32
  }
  func.func @transform_6(%arg0: i32, %arg1: i32) -> (i32, i32) {
    %c0_i32 = arith.constant 0 : i32
    %c0_i32_0 = arith.constant 0 : i32
    return %c0_i32, %arg1 : i32, i32
  }
  func.func @transform_7(%arg0: i32, %arg1: i32) -> (i32, i32) {
    %c0_i32 = arith.constant 0 : i32
    %c0_i32_0 = arith.constant 0 : i32
    return %c0_i32, %arg1 : i32, i32
  }
  func.func @transform_8(%arg0: i32, %arg1: i32) -> (i32, i32, i32, i32, i32) {
    %c0_i32 = arith.constant 0 : i32
    %c0_i32_0 = arith.constant 0 : i32
    %c0_i32_1 = arith.constant 0 : i32
    %c0_i32_2 = arith.constant 0 : i32
    return %arg0, %c0_i32, %c0_i32_0, %c0_i32_1, %arg1 : i32, i32, i32, i32, i32
  }
}

</mosaic_0001>

<llo_original>
// kernel: upsample_conv_forward.1
$region0: #{upsample_conv_forward.1}
  #allocation0 [shape = 'u32[]', space=smem, size = 0x4, offset = 0x4, fixed_abs, tag = 'smem constant byte address 0x4 - core index']
  #allocation1 [shape = 'u32[144,128]{1,0:T(1,128)}', space=vmem, size = 0x12000, scoped, tag = 'internal scratch']
  #allocation2 [shape = 'bf16[16,16,16]{2,1,0:T(16,128)(2,1)}', space=vmem, size = 0x10000, scoped, tag = 'scratch operand']
  %s0 = inlined_call_operand.vmem [shape: bf16[2,16,16,4], index: 0, kind: input, shape index: {}]
  %s1 = inlined_call_operand.vmem [shape: bf16[4,8], index: 1, kind: input, shape index: {}]
  %s2 = inlined_call_operand.vmem [shape: bf16[8,8], index: 2, kind: input, shape index: {}]
  %s3 = inlined_call_operand.vmem [shape: bf16[8,8], index: 3, kind: input, shape index: {}]
  %s4 = inlined_call_operand.vmem [shape: bf16[16,8], index: 4, kind: input, shape index: {}]
  %s5 = inlined_call_operand.vmem [shape: f32[1,8], index: 5, kind: input, shape index: {}]
  %s6 = inlined_call_operand.vmem [shape: f32[1,8], index: 6, kind: input, shape index: {}]
  %s7 = inlined_call_operand.vmem [shape: f32[1,8], index: 7, kind: input, shape index: {}]
  %s8 = inlined_call_operand.vmem [shape: bf16[2,2,2,256,8], index: 8, kind: output, shape index: {}]
  %s9 = sld [smem:[#allocation0]]
  $region69: #{upsample_conv_forward.1} parent=0
    _
  %s11 = ssub.s32 1, %s9
  %s12 = scalar_select 0, %s11, %s9
  loop: start=0, step=1, limit=4
  $region2: #{upsample_conv_forward.1} parent=0 // loop_pre_header
    _
  $region3: #{upsample_conv_forward.1} parent=0 // loop_header
    %s14 = sphi 0, %s18
    %p15 = scmp.ge.s32.totalorder %s14, 4
    %s21 = sphi 0, %s33
    %s22 = sphi 0, %s29
    %s23 = sphi 0, %s21
    %s24 = sphi 0, %s22
    %s25 = sphi 0, %s23
    %s26 = sphi 0, %s24
    %s36 = sphi 0, %s38
    %s39 = sphi 0, %s36
    %s40 = sphi 0, %s39
    %s56 = sphi 0, %s40
    %s62 = sphi 0, %s64
    %s65 = sphi 0, %s62
    %s66 = sphi 0, %s65
    %s82 = sphi 0, %s66
    %s88 = sphi 0, %s90
    %s91 = sphi 0, %s88
    %s92 = sphi 0, %s91
    %s108 = sphi 0, %s92
    %s114 = sphi 0, %s116
    %s117 = sphi 0, %s114
    %s118 = sphi 0, %s117
    %s134 = sphi 0, %s118
    %s140 = sphi 0, %s142
    %s143 = sphi 0, %s140
    %s144 = sphi 0, %s143
    %s160 = sphi 0, %s144
    %s166 = sphi 0, %s168
    %s169 = sphi 0, %s166
    %s170 = sphi 0, %s169
    %s186 = sphi 0, %s170
    %s192 = sphi 0, %s194
    %s195 = sphi 0, %s192
    %s196 = sphi 0, %s195
    %s212 = sphi 0, %s196
    %s218 = sphi 0, %s220
    %s221 = sphi 0, %s218
    %s222 = sphi 0, %s221
    %s238 = sphi 0, %s222
    %s246 = sphi 0, %s248
    %s249 = sphi 0, %s246
    %s250 = sphi 0, %s249
    %s266 = sphi 0, %s250
  $region4: #{upsample_conv_forward.1} parent=0 // loop_header_branch
    %17 = sbr.rel (%p15) target = $region8
  $region5: #{upsample_conv_forward.1} parent=0 // loop_body
    %s19 = ssub.s32 %s14, 1
    %s20 = ssub.s32 %s14, 2
    %s27 = sadd.s32 1, %s22
    %p28 = scmp.ge.s32.totalorder %s27, 1
    %s29 = scalar_select %p28, 0, %s27
    %s30 = sadd.s32 1, %s21
    %s31 = scalar_select %p28, %s30, %s21
    %p32 = scmp.ge.s32.totalorder %s31, 2
    %s33 = scalar_select %p32, 0, %s31
    %s34 = ssub.s32 %s21, %s33
    %p35 = scmp.eq.s32.totalorder %s34, 0
    %s37 = sadd.s32 %s36, 1
    %s38 = scalar_select %p35, %s36, %s37
    %p41 = pneg %p35
    %p42 = scmp.eq.s32.totalorder %s14, 1
    %p43 = por %p41, %p42
    %p44 = scmp.ne.s32.totalorder %s36, %s39
    %p45 = scmp.eq.s32.totalorder %s14, 0
    %p46 = por %p44, %p45
    %p47 = scmp.ne.s32.totalorder %s36, %s39
    %p48 = scmp.eq.s32.totalorder %s19, 1
    %p49 = por %p47, %p48
    %p50 = scmp.ne.s32.totalorder %s39, %s40
    %p51 = scmp.eq.s32.totalorder %s19, 0
    %p52 = por %p50, %p51
    %p53 = scmp.ne.s32.totalorder %s39, %s40
    %p54 = scmp.eq.s32.totalorder %s20, 1
    %p55 = por %p53, %p54
    %p57 = scmp.ne.s32.totalorder %s40, %s56
    %p58 = scmp.eq.s32.totalorder %s20, 0
    %p59 = por %p57, %p58
    %s60 = ssub.s32 %s22, %s29
    %p61 = scmp.eq.s32.totalorder %s60, 0
    %s63 = sadd.s32 %s62, 1
    %s64 = scalar_select %p61, %s62, %s63
    %p67 = pneg %p61
    %p68 = scmp.eq.s32.totalorder %s14, 1
    %p69 = por %p67, %p68
    %p70 = scmp.ne.s32.totalorder %s62, %s65
    %p71 = scmp.eq.s32.totalorder %s14, 0
    %p72 = por %p70, %p71
    %p73 = scmp.ne.s32.totalorder %s62, %s65
    %p74 = scmp.eq.s32.totalorder %s19, 1
    %p75 = por %p73, %p74
    %p76 = scmp.ne.s32.totalorder %s65, %s66
    %p77 = scmp.eq.s32.totalorder %s19, 0
    %p78 = por %p76, %p77
    %p79 = scmp.ne.s32.totalorder %s65, %s66
    %p80 = scmp.eq.s32.totalorder %s20, 1
    %p81 = por %p79, %p80
    %p83 = scmp.ne.s32.totalorder %s66, %s82
    %p84 = scmp.eq.s32.totalorder %s20, 0
    %p85 = por %p83, %p84
    %s86 = ssub.s32 %s22, %s29
    %p87 = scmp.eq.s32.totalorder %s86, 0
    %s89 = sadd.s32 %s88, 1
    %s90 = scalar_select %p87, %s88, %s89
    %p93 = pneg %p87
    %p94 = scmp.eq.s32.totalorder %s14, 1
    %p95 = por %p93, %p94
    %p96 = scmp.ne.s32.totalorder %s88, %s91
    %p97 = scmp.eq.s32.totalorder %s14, 0
    %p98 = por %p96, %p97
    %p99 = scmp.ne.s32.totalorder %s88, %s91
    %p100 = scmp.eq.s32.totalorder %s19, 1
    %p101 = por %p99, %p100
    %p102 = scmp.ne.s32.totalorder %s91, %s92
    %p103 = scmp.eq.s32.totalorder %s19, 0
    %p104 = por %p102, %p103
    %p105 = scmp.ne.s32.totalorder %s91, %s92
    %p106 = scmp.eq.s32.totalorder %s20, 1
    %p107 = por %p105, %p106
    %p109 = scmp.ne.s32.totalorder %s92, %s108
    %p110 = scmp.eq.s32.totalorder %s20, 0
    %p111 = por %p109, %p110
    %s112 = ssub.s32 %s22, %s29
    %p113 = scmp.eq.s32.totalorder %s112, 0
    %s115 = sadd.s32 %s114, 1
    %s116 = scalar_select %p113, %s114, %s115
    %p119 = pneg %p113
    %p120 = scmp.eq.s32.totalorder %s14, 1
    %p121 = por %p119, %p120
    %p122 = scmp.ne.s32.totalorder %s114, %s117
    %p123 = scmp.eq.s32.totalorder %s14, 0
    %p124 = por %p122, %p123
    %p125 = scmp.ne.s32.totalorder %s114, %s117
    %p126 = scmp.eq.s32.totalorder %s19, 1
    %p127 = por %p125, %p126
    %p128 = scmp.ne.s32.totalorder %s117, %s118
    %p129 = scmp.eq.s32.totalorder %s19, 0
    %p130 = por %p128, %p129
    %p131 = scmp.ne.s32.totalorder %s117, %s118
    %p132 = scmp.eq.s32.totalorder %s20, 1
    %p133 = por %p131, %p132
    %p135 = scmp.ne.s32.totalorder %s118, %s134
    %p136 = scmp.eq.s32.totalorder %s20, 0
    %p137 = por %p135, %p136
    %s138 = ssub.s32 %s22, %s29
    %p139 = scmp.eq.s32.totalorder %s138, 0
    %s141 = sadd.s32 %s140, 1
    %s142 = scalar_select %p139, %s140, %s141
    %p145 = pneg %p139
    %p146 = scmp.eq.s32.totalorder %s14, 1
    %p147 = por %p145, %p146
    %p148 = scmp.ne.s32.totalorder %s140, %s143
    %p149 = scmp.eq.s32.totalorder %s14, 0
    %p150 = por %p148, %p149
    %p151 = scmp.ne.s32.totalorder %s140, %s143
    %p152 = scmp.eq.s32.totalorder %s19, 1
    %p153 = por %p151, %p152
    %p154 = scmp.ne.s32.totalorder %s143, %s144
    %p155 = scmp.eq.s32.totalorder %s19, 0
    %p156 = por %p154, %p155
    %p157 = scmp.ne.s32.totalorder %s143, %s144
    %p158 = scmp.eq.s32.totalorder %s20, 1
    %p159 = por %p157, %p158
    %p161 = scmp.ne.s32.totalorder %s144, %s160
    %p162 = scmp.eq.s32.totalorder %s20, 0
    %p163 = por %p161, %p162
    %s164 = ssub.s32 %s22, %s29
    %p165 = scmp.eq.s32.totalorder %s164, 0
    %s167 = sadd.s32 %s166, 1
    %s168 = scalar_select %p165, %s166, %s167
    %p171 = pneg %p165
    %p172 = scmp.eq.s32.totalorder %s14, 1
    %p173 = por %p171, %p172
    %p174 = scmp.ne.s32.totalorder %s166, %s169
    %p175 = scmp.eq.s32.totalorder %s14, 0
    %p176 = por %p174, %p175
    %p177 = scmp.ne.s32.totalorder %s166, %s169
    %p178 = scmp.eq.s32.totalorder %s19, 1
    %p179 = por %p177, %p178
    %p180 = scmp.ne.s32.totalorder %s169, %s170
    %p181 = scmp.eq.s32.totalorder %s19, 0
    %p182 = por %p180, %p181
    %p183 = scmp.ne.s32.totalorder %s169, %s170
    %p184 = scmp.eq.s32.totalorder %s20, 1
    %p185 = por %p183, %p184
    %p187 = scmp.ne.s32.totalorder %s170, %s186
    %p188 = scmp.eq.s32.totalorder %s20, 0
    %p189 = por %p187, %p188
    %s190 = ssub.s32 %s22, %s29
    %p191 = scmp.eq.s32.totalorder %s190, 0
    %s193 = sadd.s32 %s192, 1
    %s194 = scalar_select %p191, %s192, %s193
    %p197 = pneg %p191
    %p198 = scmp.eq.s32.totalorder %s14, 1
    %p199 = por %p197, %p198
    %p200 = scmp.ne.s32.totalorder %s192, %s195
    %p201 = scmp.eq.s32.totalorder %s14, 0
    %p202 = por %p200, %p201
    %p203 = scmp.ne.s32.totalorder %s192, %s195
    %p204 = scmp.eq.s32.totalorder %s19, 1
    %p205 = por %p203, %p204
    %p206 = scmp.ne.s32.totalorder %s195, %s196
    %p207 = scmp.eq.s32.totalorder %s19, 0
    %p208 = por %p206, %p207
    %p209 = scmp.ne.s32.totalorder %s195, %s196
    %p210 = scmp.eq.s32.totalorder %s20, 1
    %p211 = por %p209, %p210
    %p213 = scmp.ne.s32.totalorder %s196, %s212
    %p214 = scmp.eq.s32.totalorder %s20, 0
    %p215 = por %p213, %p214
    %s216 = ssub.s32 %s22, %s29
    %p217 = scmp.eq.s32.totalorder %s216, 0
    %s219 = sadd.s32 %s218, 1
    %s220 = scalar_select %p217, %s218, %s219
    %p223 = pneg %p217
    %p224 = scmp.eq.s32.totalorder %s14, 1
    %p225 = por %p223, %p224
    %p226 = scmp.ne.s32.totalorder %s218, %s221
    %p227 = scmp.eq.s32.totalorder %s14, 0
    %p228 = por %p226, %p227
    %p229 = scmp.ne.s32.totalorder %s218, %s221
    %p230 = scmp.eq.s32.totalorder %s19, 1
    %p231 = por %p229, %p230
    %p232 = scmp.ne.s32.totalorder %s221, %s222
    %p233 = scmp.eq.s32.totalorder %s19, 0
    %p234 = por %p232, %p233
    %p235 = scmp.ne.s32.totalorder %s221, %s222
    %p236 = scmp.eq.s32.totalorder %s20, 1
    %p237 = por %p235, %p236
    %p239 = scmp.ne.s32.totalorder %s222, %s238
    %p240 = scmp.eq.s32.totalorder %s20, 0
    %p241 = por %p239, %p240
    %s242 = ssub.s32 %s21, %s33
    %s243 = ssub.s32 %s22, %s29
    %s244 = sor.u32 %s242, %s243
    %p245 = scmp.eq.s32.totalorder %s244, 0
    %s247 = sadd.s32 %s246, 1
    %s248 = scalar_select %p245, %s246, %s247
    %p251 = pneg %p245
    %p252 = scmp.eq.s32.totalorder %s14, 1
    %p253 = por %p251, %p252
    %p254 = scmp.ne.s32.totalorder %s246, %s249
    %p255 = scmp.eq.s32.totalorder %s14, 0
    %p256 = por %p254, %p255
    %p257 = scmp.ne.s32.totalorder %s246, %s249
    %p258 = scmp.eq.s32.totalorder %s19, 1
    %p259 = por %p257, %p258
    %p260 = scmp.ne.s32.totalorder %s249, %s250
    %p261 = scmp.eq.s32.totalorder %s19, 0
    %p262 = por %p260, %p261
    %p263 = scmp.ne.s32.totalorder %s249, %s250
    %p264 = scmp.eq.s32.totalorder %s20, 1
    %p265 = por %p263, %p264
    %p267 = scmp.ne.s32.totalorder %s250, %s266
    %p268 = scmp.eq.s32.totalorder %s20, 0
    %p269 = por %p267, %p268
    %p270 = scmp.le.s32.totalorder 1, %s14
    %p271 = scmp.lt.s32.totalorder %s14, 3
    %p272 = pnand %p270, %p271
    %p273 = pneg %p272
    // Predicated region
    $region9: #{upsample_conv_forward.1} parent=5 // pred_check
      _
    $region10: #{upsample_conv_forward.1} parent=5 // pred_check_branch
      %275 = sbr.rel (%p272) target = $region12
    $region11: #{upsample_conv_forward.1} parent=5 // pred_region
      %s276 = ssub.s32 %s14, 1
      // Predicated region
      $region13: #{upsample_conv_forward.1} parent=11 // pred_check
        %p277 = pneg %p78
      $region14: #{upsample_conv_forward.1} parent=11 // pred_check_branch
        %279 = sbr.rel (%p277) target = $region16
      $region15: #{upsample_conv_forward.1} parent=11 // pred_region
        %p280 = scmp.lt.s32.totalorder %s24, 0
        %s281 = scalar_select %p280, %s24, 0
        %s282 = smul.addr %s281, 2
        %s283 = scalar_lea.vmem %s1, %s282
      $region16: #{upsample_conv_forward.1} parent=11 // pred_fallthru
        _
      // Predicated region
      $region17: #{upsample_conv_forward.1} parent=11 // pred_check
        %p284 = pneg %p104
      $region18: #{upsample_conv_forward.1} parent=11 // pred_check_branch
        %286 = sbr.rel (%p284) target = $region20
      $region19: #{upsample_conv_forward.1} parent=11 // pred_region
        %p287 = scmp.lt.s32.totalorder %s24, 0
        %s288 = scalar_select %p287, %s24, 0
        %s289 = smul.addr %s288, 4
        %s290 = scalar_lea.vmem %s2, %s289
      $region20: #{upsample_conv_forward.1} parent=11 // pred_fallthru
        _
      // Predicated region
      $region21: #{upsample_conv_forward.1} parent=11 // pred_check
        %p291 = pneg %p130
      $region22: #{upsample_conv_forward.1} parent=11 // pred_check_branch
        %293 = sbr.rel (%p291) target = $region24
      $region23: #{upsample_conv_forward.1} parent=11 // pred_region
        %p294 = scmp.lt.s32.totalorder %s24, 0
        %s295 = scalar_select %p294, %s24, 0
        %s296 = smul.addr %s295, 4
        %s297 = scalar_lea.vmem %s3, %s296
      $region24: #{upsample_conv_forward.1} parent=11 // pred_fallthru
        _
      // Predicated region
      $region25: #{upsample_conv_forward.1} parent=11 // pred_check
        %p298 = pneg %p156
      $region26: #{upsample_conv_forward.1} parent=11 // pred_check_branch
        %300 = sbr.rel (%p298) target = $region28
      $region27: #{upsample_conv_forward.1} parent=11 // pred_region
        %p301 = scmp.lt.s32.totalorder %s24, 0
        %s302 = scalar_select %p301, %s24, 0
        %s303 = smul.addr %s302, 4
        %s304 = scalar_lea.vmem %s4, %s303
      $region28: #{upsample_conv_forward.1} parent=11 // pred_fallthru
        _
      // Predicated region
      $region29: #{upsample_conv_forward.1} parent=11 // pred_check
        %p305 = pneg %p182
      $region30: #{upsample_conv_forward.1} parent=11 // pred_check_branch
        %307 = sbr.rel (%p305) target = $region32
      $region31: #{upsample_conv_forward.1} parent=11 // pred_region
        %p308 = scmp.lt.s32.totalorder %s24, 0
        %s309 = scalar_select %p308, %s24, 0
        %s310 = scalar_lea.vmem %s5, %s309
      $region32: #{upsample_conv_forward.1} parent=11 // pred_fallthru
        _
      // Predicated region
      $region33: #{upsample_conv_forward.1} parent=11 // pred_check
        %p311 = pneg %p208
      $region34: #{upsample_conv_forward.1} parent=11 // pred_check_branch
        %313 = sbr.rel (%p311) target = $region36
      $region35: #{upsample_conv_forward.1} parent=11 // pred_region
        %p314 = scmp.lt.s32.totalorder %s24, 0
        %s315 = scalar_select %p314, %s24, 0
        %s316 = scalar_lea.vmem %s6, %s315
      $region36: #{upsample_conv_forward.1} parent=11 // pred_fallthru
        _
      // Predicated region
      $region37: #{upsample_conv_forward.1} parent=11 // pred_check
        %p317 = pneg %p234
      $region38: #{upsample_conv_forward.1} parent=11 // pred_check_branch
        %319 = sbr.rel (%p317) target = $region40
      $region39: #{upsample_conv_forward.1} parent=11 // pred_region
        %p320 = scmp.lt.s32.totalorder %s24, 0
        %s321 = scalar_select %p320, %s24, 0
        %s322 = scalar_lea.vmem %s7, %s321
      $region40: #{upsample_conv_forward.1} parent=11 // pred_fallthru
        _
    $region12: #{upsample_conv_forward.1} parent=5 // pred_fallthru
      _
    %p323 = scmp.lt.s32.totalorder %s14, 2
    // Predicated region
    $region41: #{upsample_conv_forward.1} parent=5 // pred_check
      %p324 = pneg %p323
    $region42: #{upsample_conv_forward.1} parent=5 // pred_check_branch
      %326 = sbr.rel (%p324) target = $region44
    $region43: #{upsample_conv_forward.1} parent=5 // pred_region
      // Predicated region
      $region45: #{upsample_conv_forward.1} parent=43 // pred_check
        %p327 = pneg %p46
      $region46: #{upsample_conv_forward.1} parent=43 // pred_check_branch
        %329 = sbr.rel (%p327) target = $region48
      $region47: #{upsample_conv_forward.1} parent=43 // pred_region
        %p330 = scmp.lt.s32.totalorder %s21, 1
        %s331 = scalar_select %p330, %s21, 1
        %s332 = smul.addr %s331, 32
        %s333 = smul.addr %s332, 4
        %s334 = scalar_lea.vmem %s0, %s333
      $region48: #{upsample_conv_forward.1} parent=43 // pred_fallthru
        _
    $region44: #{upsample_conv_forward.1} parent=5 // pred_fallthru
      _
    %p335 = scmp.le.s32.totalorder 1, %s14
    %p336 = scmp.lt.s32.totalorder %s14, 3
    %p337 = pnand %p335, %p336
    %p338 = pneg %p337
    // Predicated region
    $region49: #{upsample_conv_forward.1} parent=5 // pred_check
      _
    $region50: #{upsample_conv_forward.1} parent=5 // pred_check_branch
      %340 = sbr.rel (%p337) target = $region52
    $region51: #{upsample_conv_forward.1} parent=5 // pred_region
      %s341 = ssub.s32 %s14, 1
      %p342 = scmp.lt.s32.totalorder %s23, 1
      %s343 = scalar_select %p342, %s23, 1
      %s344 = smul.addr %s343, 32
      %s345 = smul.addr %s344, 4
      %s346 = scalar_lea.vmem %s0, %s345
      %p347 = pneg %p52
      %p348 = pneg %p49
      %p349 = scmp.lt.s32.totalorder %s24, 0
      %s350 = scalar_select %p349, %s24, 0
      %s351 = smul.addr %s350, 2
      %s352 = scalar_lea.vmem %s1, %s351
      %p353 = pneg %p78
      %p354 = pneg %p75
      %p355 = scmp.lt.s32.totalorder %s24, 0
      %s356 = scalar_select %p355, %s24, 0
      %s357 = smul.addr %s356, 4
      %s358 = scalar_lea.vmem %s2, %s357
      %p359 = pneg %p104
      %p360 = pneg %p101
      %p361 = scmp.lt.s32.totalorder %s24, 0
      %s362 = scalar_select %p361, %s24, 0
      %s363 = smul.addr %s362, 4
      %s364 = scalar_lea.vmem %s3, %s363
      %p365 = pneg %p130
      %p366 = pneg %p127
      %p367 = scmp.lt.s32.totalorder %s24, 0
      %s368 = scalar_select %p367, %s24, 0
      %s369 = smul.addr %s368, 4
      %s370 = scalar_lea.vmem %s4, %s369
      %p371 = pneg %p156
      %p372 = pneg %p153
      %p373 = scmp.lt.s32.totalorder %s24, 0
      %s374 = scalar_select %p373, %s24, 0
      %s375 = scalar_lea.vmem %s5, %s374
      %p376 = pneg %p182
      %p377 = pneg %p179
      %p378 = scmp.lt.s32.totalorder %s24, 0
      %s379 = scalar_select %p378, %s24, 0
      %s380 = scalar_lea.vmem %s6, %s379
      %p381 = pneg %p208
      %p382 = pneg %p205
      %p383 = scmp.lt.s32.totalorder %s24, 0
      %s384 = scalar_select %p383, %s24, 0
      %s385 = scalar_lea.vmem %s7, %s384
      %p386 = pneg %p234
      %p387 = pneg %p231
      %p388 = pneg %p262
      %p389 = pneg %p259
      %p390 = scmp.lt.s32.totalorder %s23, 1
      %s391 = scalar_select %p390, %s23, 1
      %p392 = scmp.lt.s32.totalorder %s24, 0
      %s393 = scalar_select %p392, %s24, 0
      %s394 = smul.addr %s391, 128
      %s395 = sadd.s32 %s393, %s394
      %s396 = smul.addr %s395, 4
      %s397 = scalar_lea.vmem %s8, %s396
      %p398 = scmp.lt.s32.totalorder %s23, 1
      %s399 = scalar_select %p398, %s23, 1
      %s400 = smul.addr %s399, 32
      %s401 = smul.addr %s400, 4
      %s402 = scalar_lea.vmem %s0, %s401
      %p403 = scmp.lt.s32.totalorder %s24, 0
      %s404 = scalar_select %p403, %s24, 0
      %s405 = smul.addr %s404, 2
      %s406 = scalar_lea.vmem %s1, %s405
      %p407 = scmp.lt.s32.totalorder %s24, 0
      %s408 = scalar_select %p407, %s24, 0
      %s409 = smul.addr %s408, 4
      %s410 = scalar_lea.vmem %s2, %s409
      %p411 = scmp.lt.s32.totalorder %s24, 0
      %s412 = scalar_select %p411, %s24, 0
      %s413 = smul.addr %s412, 4
      %s414 = scalar_lea.vmem %s3, %s413
      %p415 = scmp.lt.s32.totalorder %s24, 0
      %s416 = scalar_select %p415, %s24, 0
      %s417 = smul.addr %s416, 4
      %s418 = scalar_lea.vmem %s4, %s417
      %p419 = scmp.lt.s32.totalorder %s24, 0
      %s420 = scalar_select %p419, %s24, 0
      %s421 = scalar_lea.vmem %s5, %s420
      %p422 = scmp.lt.s32.totalorder %s24, 0
      %s423 = scalar_select %p422, %s24, 0
      %s424 = scalar_lea.vmem %s6, %s423
      %p425 = scmp.lt.s32.totalorder %s24, 0
      %s426 = scalar_select %p425, %s24, 0
      %s427 = scalar_lea.vmem %s7, %s426
      %p428 = scmp.lt.s32.totalorder %s23, 1
      %s429 = scalar_select %p428, %s23, 1
      %p430 = scmp.lt.s32.totalorder %s24, 0
      %s431 = scalar_select %p430, %s24, 0
      %s432 = smul.addr %s429, 128
      %s433 = sadd.s32 %s431, %s432
      %s434 = smul.addr %s433, 4
      %s435 = scalar_lea.vmem %s8, %s434
      %p437 = scmp.eq.s32.totalorder %s24, 0
      // Predicated region
      $region53: #{upsample_conv_forward.1} parent=51 // pred_check
        %p438 = pneg %p437
      $region54: #{upsample_conv_forward.1} parent=51 // pred_check_branch
        %440 = sbr.rel (%p438) target = $region56
      $region55: #{upsample_conv_forward.1} parent=51 // pred_region
        %v441 = vld [vmem:[%s402] sm:$0xf]
        %v442 = vld [vmem:[%s402 + $0x4] sm:$0xf]
        %v443 = vld [vmem:[%s402 + $0x8] sm:$0xf]
        %v444 = vld [vmem:[%s402 + $0xc] sm:$0xf]
        %v445 = vld [vmem:[%s402 + $0x10] sm:$0xf]
        %v446 = vld [vmem:[%s402 + $0x14] sm:$0xf]
        %v447 = vld [vmem:[%s402 + $0x18] sm:$0xf]
        %v448 = vld [vmem:[%s402 + $0x1c] sm:$0xf]
        %v449 = vld [vmem:[%s402 + $0x20] sm:$0xf]
        %v450 = vld [vmem:[%s402 + $0x24] sm:$0xf]
        %v451 = vld [vmem:[%s402 + $0x28] sm:$0xf]
        %v452 = vld [vmem:[%s402 + $0x2c] sm:$0xf]
        %v453 = vld [vmem:[%s402 + $0x30] sm:$0xf]
        %v454 = vld [vmem:[%s402 + $0x34] sm:$0xf]
        %v455 = vld [vmem:[%s402 + $0x38] sm:$0xf]
        %v456 = vld [vmem:[%s402 + $0x3c] sm:$0xf]
        %v457 = vld [vmem:[%s402 + $0x40] sm:$0xf]
        %v458 = vld [vmem:[%s402 + $0x44] sm:$0xf]
        %v459 = vld [vmem:[%s402 + $0x48] sm:$0xf]
        %v460 = vld [vmem:[%s402 + $0x4c] sm:$0xf]
        %v461 = vld [vmem:[%s402 + $0x50] sm:$0xf]
        %v462 = vld [vmem:[%s402 + $0x54] sm:$0xf]
        %v463 = vld [vmem:[%s402 + $0x58] sm:$0xf]
        %v464 = vld [vmem:[%s402 + $0x5c] sm:$0xf]
        %v465 = vld [vmem:[%s402 + $0x60] sm:$0xf]
        %v466 = vld [vmem:[%s402 + $0x64] sm:$0xf]
        %v467 = vld [vmem:[%s402 + $0x68] sm:$0xf]
        %v468 = vld [vmem:[%s402 + $0x6c] sm:$0xf]
        %v469 = vld [vmem:[%s402 + $0x70] sm:$0xf]
        %v470 = vld [vmem:[%s402 + $0x74] sm:$0xf]
        %v471 = vld [vmem:[%s402 + $0x78] sm:$0xf]
        %v472 = vld [vmem:[%s402 + $0x7c] sm:$0xf]
        %v505 = vunpack.c.l.b16 %v441
        %v506 = vunpack.c.l.b16 %v442
        %v507 = vunpack.c.l.b16 %v443
        %v508 = vunpack.c.l.b16 %v444
        %v509 = vunpack.c.l.b16 %v445
        %v510 = vunpack.c.l.b16 %v446
        %v511 = vunpack.c.l.b16 %v447
        %v512 = vunpack.c.l.b16 %v448
        %v513 = vunpack.c.l.b16 %v449
        %v514 = vunpack.c.l.b16 %v450
        %v515 = vunpack.c.l.b16 %v451
        %v516 = vunpack.c.l.b16 %v452
        %v517 = vunpack.c.l.b16 %v453
        %v518 = vunpack.c.l.b16 %v454
        %v519 = vunpack.c.l.b16 %v455
        %v520 = vunpack.c.l.b16 %v456
        %v521 = vunpack.c.l.b16 %v457
        %v522 = vunpack.c.l.b16 %v458
        %v523 = vunpack.c.l.b16 %v459
        %v524 = vunpack.c.l.b16 %v460
        %v525 = vunpack.c.l.b16 %v461
        %v526 = vunpack.c.l.b16 %v462
        %v527 = vunpack.c.l.b16 %v463
        %v528 = vunpack.c.l.b16 %v464
        %v529 = vunpack.c.l.b16 %v465
        %v530 = vunpack.c.l.b16 %v466
        %v531 = vunpack.c.l.b16 %v467
        %v532 = vunpack.c.l.b16 %v468
        %v533 = vunpack.c.l.b16 %v469
        %v534 = vunpack.c.l.b16 %v470
        %v535 = vunpack.c.l.b16 %v471
        %v536 = vunpack.c.l.b16 %v472
        %v537 = vpack.c.b16 %v506, %v505
        %v538 = vpack.c.b16 %v508, %v507
        %v539 = vpack.c.b16 %v510, %v509
        %v540 = vpack.c.b16 %v512, %v511
        %v541 = vpack.c.b16 %v514, %v513
        %v542 = vpack.c.b16 %v516, %v515
        %v543 = vpack.c.b16 %v518, %v517
        %v544 = vpack.c.b16 %v520, %v519
        %v545 = vpack.c.b16 %v522, %v521
        %v546 = vpack.c.b16 %v524, %v523
        %v547 = vpack.c.b16 %v526, %v525
        %v548 = vpack.c.b16 %v528, %v527
        %v549 = vpack.c.b16 %v530, %v529
        %v550 = vpack.c.b16 %v532, %v531
        %v551 = vpack.c.b16 %v534, %v533
        %v552 = vpack.c.b16 %v536, %v535
        %553 = vrot.lane.b32.xlu0 %v537, 4
        %v554 = vpop.permute.xlu0 %553
        %555 = vrot.lane.b32.xlu0 %v538, 4
        %v556 = vpop.permute.xlu0 %555
        %557 = vrot.lane.b32.xlu0 %v539, 4
        %v558 = vpop.permute.xlu0 %557
        %559 = vrot.lane.b32.xlu0 %v540, 4
        %v560 = vpop.permute.xlu0 %559
        %561 = vrot.lane.b32.xlu0 %v541, 4
        %v562 = vpop.permute.xlu0 %561
        %563 = vrot.lane.b32.xlu0 %v542, 4
        %v564 = vpop.permute.xlu0 %563
        %565 = vrot.lane.b32.xlu0 %v543, 4
        %v566 = vpop.permute.xlu0 %565
        %567 = vrot.lane.b32.xlu0 %v544, 4
        %v568 = vpop.permute.xlu0 %567
        %569 = vrot.lane.b32.xlu0 %v545, 4
        %v570 = vpop.permute.xlu0 %569
        %571 = vrot.lane.b32.xlu0 %v546, 4
        %v572 = vpop.permute.xlu0 %571
        %573 = vrot.lane.b32.xlu0 %v547, 4
        %v574 = vpop.permute.xlu0 %573
        %575 = vrot.lane.b32.xlu0 %v548, 4
        %v576 = vpop.permute.xlu0 %575
        %577 = vrot.lane.b32.xlu0 %v549, 4
        %v578 = vpop.permute.xlu0 %577
        %579 = vrot.lane.b32.xlu0 %v550, 4
        %v580 = vpop.permute.xlu0 %579
        %581 = vrot.lane.b32.xlu0 %v551, 4
        %v582 = vpop.permute.xlu0 %581
        %583 = vrot.lane.b32.xlu0 %v552, 4
        %v584 = vpop.permute.xlu0 %583
        %vm601 = vcmask 64544
        %602 = vst.msk [vmem:[#allocation2] sm:$0xff] %vm601, %v554
        %603 = vst.msk [vmem:[#allocation2 + $0x8] sm:$0xff] %vm601, %v556
        %604 = vst.msk [vmem:[#allocation2 + $0x10] sm:$0xff] %vm601, %v558
        %605 = vst.msk [vmem:[#allocation2 + $0x18] sm:$0xff] %vm601, %v560
        %606 = vst.msk [vmem:[#allocation2 + $0x20] sm:$0xff] %vm601, %v562
        %607 = vst.msk [vmem:[#allocation2 + $0x28] sm:$0xff] %vm601, %v564
        %608 = vst.msk [vmem:[#allocation2 + $0x30] sm:$0xff] %vm601, %v566
        %609 = vst.msk [vmem:[#allocation2 + $0x38] sm:$0xff] %vm601, %v568
        %610 = vst.msk [vmem:[#allocation2 + $0x40] sm:$0xff] %vm601, %v570
        %611 = vst.msk [vmem:[#allocation2 + $0x48] sm:$0xff] %vm601, %v572
        %612 = vst.msk [vmem:[#allocation2 + $0x50] sm:$0xff] %vm601, %v574
        %613 = vst.msk [vmem:[#allocation2 + $0x58] sm:$0xff] %vm601, %v576
        %614 = vst.msk [vmem:[#allocation2 + $0x60] sm:$0xff] %vm601, %v578
        %615 = vst.msk [vmem:[#allocation2 + $0x68] sm:$0xff] %vm601, %v580
        %616 = vst.msk [vmem:[#allocation2 + $0x70] sm:$0xff] %vm601, %v582
        %617 = vst.msk [vmem:[#allocation2 + $0x78] sm:$0xff] %vm601, %v584
        %vm633 = vcmask 31744
        %634 = vst.msk [vmem:[#allocation2] sm:$0xff] %vm633, %v538
        %635 = vst.msk [vmem:[#allocation2 + $0x8] sm:$0xff] %vm633, %v539
        %636 = vst.msk [vmem:[#allocation2 + $0x10] sm:$0xff] %vm633, %v540
        %637 = vst.msk [vmem:[#allocation2 + $0x18] sm:$0xff] %vm633, %v541
        %638 = vst.msk [vmem:[#allocation2 + $0x20] sm:$0xff] %vm633, %v542
        %639 = vst.msk [vmem:[#allocation2 + $0x28] sm:$0xff] %vm633, %v543
        %640 = vst.msk [vmem:[#allocation2 + $0x30] sm:$0xff] %vm633, %v544
        %641 = vst.msk [vmem:[#allocation2 + $0x38] sm:$0xff] %vm633, %v545
        %642 = vst.msk [vmem:[#allocation2 + $0x40] sm:$0xff] %vm633, %v546
        %643 = vst.msk [vmem:[#allocation2 + $0x48] sm:$0xff] %vm633, %v547
        %644 = vst.msk [vmem:[#allocation2 + $0x50] sm:$0xff] %vm633, %v548
        %645 = vst.msk [vmem:[#allocation2 + $0x58] sm:$0xff] %vm633, %v549
        %646 = vst.msk [vmem:[#allocation2 + $0x60] sm:$0xff] %vm633, %v550
        %647 = vst.msk [vmem:[#allocation2 + $0x68] sm:$0xff] %vm633, %v551
        %648 = vst.msk [vmem:[#allocation2 + $0x70] sm:$0xff] %vm633, %v552
        %v650 = vshrl.u32 %v537, 16
        %v652 = vshll.u32 %v537, 16
        %v654 = vrot.slane %v652, 1
        %v655 = vor.u32 %v650, %v654
        %v657 = vshrl.u32 %v538, 16
        %v659 = vshll.u32 %v538, 16
        %v661 = vrot.slane %v659, 1
        %v662 = vor.u32 %v657, %v661
        %v664 = vshrl.u32 %v539, 16
        %v666 = vshll.u32 %v539, 16
        %v668 = vrot.slane %v666, 1
        %v669 = vor.u32 %v664, %v668
        %v671 = vshrl.u32 %v540, 16
        %v673 = vshll.u32 %v540, 16
        %v675 = vrot.slane %v673, 1
        %v676 = vor.u32 %v671, %v675
        %v678 = vshrl.u32 %v541, 16
        %v680 = vshll.u32 %v541, 16
        %v682 = vrot.slane %v680, 1
        %v683 = vor.u32 %v678, %v682
        %v685 = vshrl.u32 %v542, 16
        %v687 = vshll.u32 %v542, 16
        %v689 = vrot.slane %v687, 1
        %v690 = vor.u32 %v685, %v689
        %v692 = vshrl.u32 %v543, 16
        %v694 = vshll.u32 %v543, 16
        %v696 = vrot.slane %v694, 1
        %v697 = vor.u32 %v692, %v696
        %v699 = vshrl.u32 %v544, 16
        %v701 = vshll.u32 %v544, 16
        %v703 = vrot.slane %v701, 1
        %v704 = vor.u32 %v699, %v703
        %v706 = vshrl.u32 %v545, 16
        %v708 = vshll.u32 %v545, 16
        %v710 = vrot.slane %v708, 1
        %v711 = vor.u32 %v706, %v710
        %v713 = vshrl.u32 %v546, 16
        %v715 = vshll.u32 %v546, 16
        %v717 = vrot.slane %v715, 1
        %v718 = vor.u32 %v713, %v717
        %v720 = vshrl.u32 %v547, 16
        %v722 = vshll.u32 %v547, 16
        %v724 = vrot.slane %v722, 1
        %v725 = vor.u32 %v720, %v724
        %v727 = vshrl.u32 %v548, 16
        %v729 = vshll.u32 %v548, 16
        %v731 = vrot.slane %v729, 1
        %v732 = vor.u32 %v727, %v731
        %v734 = vshrl.u32 %v549, 16
        %v736 = vshll.u32 %v549, 16
        %v738 = vrot.slane %v736, 1
        %v739 = vor.u32 %v734, %v738
        %v741 = vshrl.u32 %v550, 16
        %v743 = vshll.u32 %v550, 16
        %v745 = vrot.slane %v743, 1
        %v746 = vor.u32 %v741, %v745
        %v748 = vshrl.u32 %v551, 16
        %v750 = vshll.u32 %v551, 16
        %v752 = vrot.slane %v750, 1
        %v753 = vor.u32 %v748, %v752
        %v755 = vshrl.u32 %v552, 16
        %v757 = vshll.u32 %v552, 16
        %v759 = vrot.slane %v757, 1
        %v760 = vor.u32 %v755, %v759
        %761 = vrot.lane.b32.xlu0 %v655, 8
        %v762 = vpop.permute.xlu0 %761
        %763 = vrot.lane.b32.xlu0 %v662, 8
        %v764 = vpop.permute.xlu0 %763
        %765 = vrot.lane.b32.xlu0 %v669, 8
        %v766 = vpop.permute.xlu0 %765
        %767 = vrot.lane.b32.xlu0 %v676, 8
        %v768 = vpop.permute.xlu0 %767
        %769 = vrot.lane.b32.xlu0 %v683, 8
        %v770 = vpop.permute.xlu0 %769
        %771 = vrot.lane.b32.xlu0 %v690, 8
        %v772 = vpop.permute.xlu0 %771
        %773 = vrot.lane.b32.xlu0 %v697, 8
        %v774 = vpop.permute.xlu0 %773
        %775 = vrot.lane.b32.xlu0 %v704, 8
        %v776 = vpop.permute.xlu0 %775
        %777 = vrot.lane.b32.xlu0 %v711, 8
        %v778 = vpop.permute.xlu0 %777
        %779 = vrot.lane.b32.xlu0 %v718, 8
        %v780 = vpop.permute.xlu0 %779
        %781 = vrot.lane.b32.xlu0 %v725, 8
        %v782 = vpop.permute.xlu0 %781
        %783 = vrot.lane.b32.xlu0 %v732, 8
        %v784 = vpop.permute.xlu0 %783
        %785 = vrot.lane.b32.xlu0 %v739, 8
        %v786 = vpop.permute.xlu0 %785
        %787 = vrot.lane.b32.xlu0 %v746, 8
        %v788 = vpop.permute.xlu0 %787
        %789 = vrot.lane.b32.xlu0 %v753, 8
        %v790 = vpop.permute.xlu0 %789
        %791 = vrot.lane.b32.xlu0 %v760, 8
        %v792 = vpop.permute.xlu0 %791
        %vm809 = vcmask 97344
        %vm810 = vsmask.f32 7424
        %vm811 = vmand %vm809, %vm810
        %v812 = vld [vmem:[#allocation2] sm:$0xff]
        %v813 = vsel %vm811, %v762, %v812
        %814 = vst [vmem:[#allocation2] sm:$0xff] %v813
        %v815 = vld [vmem:[#allocation2 + $0x8] sm:$0xff]
        %v816 = vsel %vm811, %v764, %v815
        %817 = vst [vmem:[#allocation2 + $0x8] sm:$0xff] %v816
        %v818 = vld [vmem:[#allocation2 + $0x10] sm:$0xff]
        %v819 = vsel %vm811, %v766, %v818
        %820 = vst [vmem:[#allocation2 + $0x10] sm:$0xff] %v819
        %v821 = vld [vmem:[#allocation2 + $0x18] sm:$0xff]
        %v822 = vsel %vm811, %v768, %v821
        %823 = vst [vmem:[#allocation2 + $0x18] sm:$0xff] %v822
        %v824 = vld [vmem:[#allocation2 + $0x20] sm:$0xff]
        %v825 = vsel %vm811, %v770, %v824
        %826 = vst [vmem:[#allocation2 + $0x20] sm:$0xff] %v825
        %v827 = vld [vmem:[#allocation2 + $0x28] sm:$0xff]
        %v828 = vsel %vm811, %v772, %v827
        %829 = vst [vmem:[#allocation2 + $0x28] sm:$0xff] %v828
        %v830 = vld [vmem:[#allocation2 + $0x30] sm:$0xff]
        %v831 = vsel %vm811, %v774, %v830
        %832 = vst [vmem:[#allocation2 + $0x30] sm:$0xff] %v831
        %v833 = vld [vmem:[#allocation2 + $0x38] sm:$0xff]
        %v834 = vsel %vm811, %v776, %v833
        %835 = vst [vmem:[#allocation2 + $0x38] sm:$0xff] %v834
        %v836 = vld [vmem:[#allocation2 + $0x40] sm:$0xff]
        %v837 = vsel %vm811, %v778, %v836
        %838 = vst [vmem:[#allocation2 + $0x40] sm:$0xff] %v837
        %v839 = vld [vmem:[#allocation2 + $0x48] sm:$0xff]
        %v840 = vsel %vm811, %v780, %v839
        %841 = vst [vmem:[#allocation2 + $0x48] sm:$0xff] %v840
        %v842 = vld [vmem:[#allocation2 + $0x50] sm:$0xff]
        %v843 = vsel %vm811, %v782, %v842
        %844 = vst [vmem:[#allocation2 + $0x50] sm:$0xff] %v843
        %v845 = vld [vmem:[#allocation2 + $0x58] sm:$0xff]
        %v846 = vsel %vm811, %v784, %v845
        %847 = vst [vmem:[#allocation2 + $0x58] sm:$0xff] %v846
        %v848 = vld [vmem:[#allocation2 + $0x60] sm:$0xff]
        %v849 = vsel %vm811, %v786, %v848
        %850 = vst [vmem:[#allocation2 + $0x60] sm:$0xff] %v849
        %v851 = vld [vmem:[#allocation2 + $0x68] sm:$0xff]
        %v852 = vsel %vm811, %v788, %v851
        %853 = vst [vmem:[#allocation2 + $0x68] sm:$0xff] %v852
        %v854 = vld [vmem:[#allocation2 + $0x70] sm:$0xff]
        %v855 = vsel %vm811, %v790, %v854
        %856 = vst [vmem:[#allocation2 + $0x70] sm:$0xff] %v855
        %v857 = vld [vmem:[#allocation2 + $0x78] sm:$0xff]
        %v858 = vsel %vm811, %v792, %v857
        %859 = vst [vmem:[#allocation2 + $0x78] sm:$0xff] %v858
        %860 = vrot.lane.b32.xlu0 %v662, 12
        %v861 = vpop.permute.xlu0 %860
        %862 = vrot.lane.b32.xlu0 %v669, 12
        %v863 = vpop.permute.xlu0 %862
        %864 = vrot.lane.b32.xlu0 %v676, 12
        %v865 = vpop.permute.xlu0 %864
        %866 = vrot.lane.b32.xlu0 %v683, 12
        %v867 = vpop.permute.xlu0 %866
        %868 = vrot.lane.b32.xlu0 %v690, 12
        %v869 = vpop.permute.xlu0 %868
        %870 = vrot.lane.b32.xlu0 %v697, 12
        %v871 = vpop.permute.xlu0 %870
        %872 = vrot.lane.b32.xlu0 %v704, 12
        %v873 = vpop.permute.xlu0 %872
        %874 = vrot.lane.b32.xlu0 %v711, 12
        %v875 = vpop.permute.xlu0 %874
        %876 = vrot.lane.b32.xlu0 %v718, 12
        %v877 = vpop.permute.xlu0 %876
        %878 = vrot.lane.b32.xlu0 %v725, 12
        %v879 = vpop.permute.xlu0 %878
        %880 = vrot.lane.b32.xlu0 %v732, 12
        %v881 = vpop.permute.xlu0 %880
        %882 = vrot.lane.b32.xlu0 %v739, 12
        %v883 = vpop.permute.xlu0 %882
        %884 = vrot.lane.b32.xlu0 %v746, 12
        %v885 = vpop.permute.xlu0 %884
        %886 = vrot.lane.b32.xlu0 %v753, 12
        %v887 = vpop.permute.xlu0 %886
        %888 = vrot.lane.b32.xlu0 %v760, 12
        %v889 = vpop.permute.xlu0 %888
        %vm905 = vcmask 130144
        %vm906 = vmand %vm905, %vm810
        %v907 = vld [vmem:[#allocation2] sm:$0xff]
        %v908 = vsel %vm906, %v861, %v907
        %909 = vst [vmem:[#allocation2] sm:$0xff] %v908
        %v910 = vld [vmem:[#allocation2 + $0x8] sm:$0xff]
        %v911 = vsel %vm906, %v863, %v910
        %912 = vst [vmem:[#allocation2 + $0x8] sm:$0xff] %v911
        %v913 = vld [vmem:[#allocation2 + $0x10] sm:$0xff]
        %v914 = vsel %vm906, %v865, %v913
        %915 = vst [vmem:[#allocation2 + $0x10] sm:$0xff] %v914
        %v916 = vld [vmem:[#allocation2 + $0x18] sm:$0xff]
        %v917 = vsel %vm906, %v867, %v916
        %918 = vst [vmem:[#allocation2 + $0x18] sm:$0xff] %v917
        %v919 = vld [vmem:[#allocation2 + $0x20] sm:$0xff]
        %v920 = vsel %vm906, %v869, %v919
        %921 = vst [vmem:[#allocation2 + $0x20] sm:$0xff] %v920
        %v922 = vld [vmem:[#allocation2 + $0x28] sm:$0xff]
        %v923 = vsel %vm906, %v871, %v922
        %924 = vst [vmem:[#allocation2 + $0x28] sm:$0xff] %v923
        %v925 = vld [vmem:[#allocation2 + $0x30] sm:$0xff]
        %v926 = vsel %vm906, %v873, %v925
        %927 = vst [vmem:[#allocation2 + $0x30] sm:$0xff] %v926
        %v928 = vld [vmem:[#allocation2 + $0x38] sm:$0xff]
        %v929 = vsel %vm906, %v875, %v928
        %930 = vst [vmem:[#allocation2 + $0x38] sm:$0xff] %v929
        %v931 = vld [vmem:[#allocation2 + $0x40] sm:$0xff]
        %v932 = vsel %vm906, %v877, %v931
        %933 = vst [vmem:[#allocation2 + $0x40] sm:$0xff] %v932
        %v934 = vld [vmem:[#allocation2 + $0x48] sm:$0xff]
        %v935 = vsel %vm906, %v879, %v934
        %936 = vst [vmem:[#allocation2 + $0x48] sm:$0xff] %v935
        %v937 = vld [vmem:[#allocation2 + $0x50] sm:$0xff]
        %v938 = vsel %vm906, %v881, %v937
        %939 = vst [vmem:[#allocation2 + $0x50] sm:$0xff] %v938
        %v940 = vld [vmem:[#allocation2 + $0x58] sm:$0xff]
        %v941 = vsel %vm906, %v883, %v940
        %942 = vst [vmem:[#allocation2 + $0x58] sm:$0xff] %v941
        %v943 = vld [vmem:[#allocation2 + $0x60] sm:$0xff]
        %v944 = vsel %vm906, %v885, %v943
        %945 = vst [vmem:[#allocation2 + $0x60] sm:$0xff] %v944
        %v946 = vld [vmem:[#allocation2 + $0x68] sm:$0xff]
        %v947 = vsel %vm906, %v887, %v946
        %948 = vst [vmem:[#allocation2 + $0x68] sm:$0xff] %v947
        %v949 = vld [vmem:[#allocation2 + $0x70] sm:$0xff]
        %v950 = vsel %vm906, %v889, %v949
        %951 = vst [vmem:[#allocation2 + $0x70] sm:$0xff] %v950
        %s952 = scalar_lea.vmem [#allocation2], 120
        %953 = vst.msk [vmem:[%s952] sm:$0xff] %vm633, 0
        %vm954 = vcmask 97351
        %vm955 = vsmask.f32 7966
        %vm956 = vmand %vm954, %vm955
        %v957 = vld [vmem:[#allocation2] sm:$0x80]
        %v958 = vsel %vm956, 0, %v957
        %959 = vst [vmem:[#allocation2] sm:$0x80] %v958
        %v960 = vld [vmem:[#allocation2 + $0x8] sm:$0x80]
        %v961 = vsel %vm956, 0, %v960
        %962 = vst [vmem:[#allocation2 + $0x8] sm:$0x80] %v961
        %v963 = vld [vmem:[#allocation2 + $0x10] sm:$0x80]
        %v964 = vsel %vm956, 0, %v963
        %965 = vst [vmem:[#allocation2 + $0x10] sm:$0x80] %v964
        %v966 = vld [vmem:[#allocation2 + $0x18] sm:$0x80]
        %v967 = vsel %vm956, 0, %v966
        %968 = vst [vmem:[#allocation2 + $0x18] sm:$0x80] %v967
        %v969 = vld [vmem:[#allocation2 + $0x20] sm:$0x80]
        %v970 = vsel %vm956, 0, %v969
        %971 = vst [vmem:[#allocation2 + $0x20] sm:$0x80] %v970
        %v972 = vld [vmem:[#allocation2 + $0x28] sm:$0x80]
        %v973 = vsel %vm956, 0, %v972
        %974 = vst [vmem:[#allocation2 + $0x28] sm:$0x80] %v973
        %v975 = vld [vmem:[#allocation2 + $0x30] sm:$0x80]
        %v976 = vsel %vm956, 0, %v975
        %977 = vst [vmem:[#allocation2 + $0x30] sm:$0x80] %v976
        %v978 = vld [vmem:[#allocation2 + $0x38] sm:$0x80]
        %v979 = vsel %vm956, 0, %v978
        %980 = vst [vmem:[#allocation2 + $0x38] sm:$0x80] %v979
        %v981 = vld [vmem:[#allocation2 + $0x40] sm:$0x80]
        %v982 = vsel %vm956, 0, %v981
        %983 = vst [vmem:[#allocation2 + $0x40] sm:$0x80] %v982
        %v984 = vld [vmem:[#allocation2 + $0x48] sm:$0x80]
        %v985 = vsel %vm956, 0, %v984
        %986 = vst [vmem:[#allocation2 + $0x48] sm:$0x80] %v985
        %v987 = vld [vmem:[#allocation2 + $0x50] sm:$0x80]
        %v988 = vsel %vm956, 0, %v987
        %989 = vst [vmem:[#allocation2 + $0x50] sm:$0x80] %v988
        %v990 = vld [vmem:[#allocation2 + $0x58] sm:$0x80]
        %v991 = vsel %vm956, 0, %v990
        %992 = vst [vmem:[#allocation2 + $0x58] sm:$0x80] %v991
        %v993 = vld [vmem:[#allocation2 + $0x60] sm:$0x80]
        %v994 = vsel %vm956, 0, %v993
        %995 = vst [vmem:[#allocation2 + $0x60] sm:$0x80] %v994
        %v996 = vld [vmem:[#allocation2 + $0x68] sm:$0x80]
        %v997 = vsel %vm956, 0, %v996
        %998 = vst [vmem:[#allocation2 + $0x68] sm:$0x80] %v997
        %v999 = vld [vmem:[#allocation2 + $0x70] sm:$0x80]
        %v1000 = vsel %vm956, 0, %v999
        %1001 = vst [vmem:[#allocation2 + $0x70] sm:$0x80] %v1000
        %v1002 = vld [vmem:[#allocation2 + $0x78] sm:$0x80]
        %v1003 = vsel %vm956, 0, %v1002
        %1004 = vst [vmem:[#allocation2 + $0x78] sm:$0x80] %v1003
        %vm1005 = vcmask 130144
        %1006 = vst.msk [vmem:[%s952] sm:$0xff] %vm1005, 0
        %vm1007 = vcmask 130151
        %vm1008 = vmand %vm1007, %vm955
        %v1009 = vld [vmem:[#allocation2] sm:$0x80]
        %v1010 = vsel %vm1008, 0, %v1009
        %1011 = vst [vmem:[#allocation2] sm:$0x80] %v1010
        %v1012 = vld [vmem:[#allocation2 + $0x8] sm:$0x80]
        %v1013 = vsel %vm1008, 0, %v1012
        %1014 = vst [vmem:[#allocation2 + $0x8] sm:$0x80] %v1013
        %v1015 = vld [vmem:[#allocation2 + $0x10] sm:$0x80]
        %v1016 = vsel %vm1008, 0, %v1015
        %1017 = vst [vmem:[#allocation2 + $0x10] sm:$0x80] %v1016
        %v1018 = vld [vmem:[#allocation2 + $0x18] sm:$0x80]
        %v1019 = vsel %vm1008, 0, %v1018
        %1020 = vst [vmem:[#allocation2 + $0x18] sm:$0x80] %v1019
        %v1021 = vld [vmem:[#allocation2 + $0x20] sm:$0x80]
        %v1022 = vsel %vm1008, 0, %v1021
        %1023 = vst [vmem:[#allocation2 + $0x20] sm:$0x80] %v1022
        %v1024 = vld [vmem:[#allocation2 + $0x28] sm:$0x80]
        %v1025 = vsel %vm1008, 0, %v1024
        %1026 = vst [vmem:[#allocation2 + $0x28] sm:$0x80] %v1025
        %v1027 = vld [vmem:[#allocation2 + $0x30] sm:$0x80]
        %v1028 = vsel %vm1008, 0, %v1027
        %1029 = vst [vmem:[#allocation2 + $0x30] sm:$0x80] %v1028
        %v1030 = vld [vmem:[#allocation2 + $0x38] sm:$0x80]
        %v1031 = vsel %vm1008, 0, %v1030
        %1032 = vst [vmem:[#allocation2 + $0x38] sm:$0x80] %v1031
        %v1033 = vld [vmem:[#allocation2 + $0x40] sm:$0x80]
        %v1034 = vsel %vm1008, 0, %v1033
        %1035 = vst [vmem:[#allocation2 + $0x40] sm:$0x80] %v1034
        %v1036 = vld [vmem:[#allocation2 + $0x48] sm:$0x80]
        %v1037 = vsel %vm1008, 0, %v1036
        %1038 = vst [vmem:[#allocation2 + $0x48] sm:$0x80] %v1037
        %v1039 = vld [vmem:[#allocation2 + $0x50] sm:$0x80]
        %v1040 = vsel %vm1008, 0, %v1039
        %1041 = vst [vmem:[#allocation2 + $0x50] sm:$0x80] %v1040
        %v1042 = vld [vmem:[#allocation2 + $0x58] sm:$0x80]
        %v1043 = vsel %vm1008, 0, %v1042
        %1044 = vst [vmem:[#allocation2 + $0x58] sm:$0x80] %v1043
        %v1045 = vld [vmem:[#allocation2 + $0x60] sm:$0x80]
        %v1046 = vsel %vm1008, 0, %v1045
        %1047 = vst [vmem:[#allocation2 + $0x60] sm:$0x80] %v1046
        %v1048 = vld [vmem:[#allocation2 + $0x68] sm:$0x80]
        %v1049 = vsel %vm1008, 0, %v1048
        %1050 = vst [vmem:[#allocation2 + $0x68] sm:$0x80] %v1049
        %v1051 = vld [vmem:[#allocation2 + $0x70] sm:$0x80]
        %v1052 = vsel %vm1008, 0, %v1051
        %1053 = vst [vmem:[#allocation2 + $0x70] sm:$0x80] %v1052
        %v1054 = vld [vmem:[#allocation2 + $0x78] sm:$0x80]
        %v1055 = vsel %vm1008, 0, %v1054
        %1056 = vst [vmem:[#allocation2 + $0x78] sm:$0x80] %v1055
      $region56: #{upsample_conv_forward.1} parent=51 // pred_fallthru
        _
      %v1057 = vld [vmem:[%s402] sm:$0xf]
      %v1058 = vld [vmem:[%s402 + $0x4] sm:$0xf]
      %v1059 = vld [vmem:[%s402 + $0x8] sm:$0xf]
      %v1060 = vld [vmem:[%s402 + $0xc] sm:$0xf]
      %v1061 = vld [vmem:[%s402 + $0x10] sm:$0xf]
      %v1062 = vld [vmem:[%s402 + $0x14] sm:$0xf]
      %v1063 = vld [vmem:[%s402 + $0x18] sm:$0xf]
      %v1064 = vld [vmem:[%s402 + $0x1c] sm:$0xf]
      %v1065 = vld [vmem:[%s402 + $0x20] sm:$0xf]
      %v1066 = vld [vmem:[%s402 + $0x24] sm:$0xf]
      %v1067 = vld [vmem:[%s402 + $0x28] sm:$0xf]
      %v1068 = vld [vmem:[%s402 + $0x2c] sm:$0xf]
      %v1069 = vld [vmem:[%s402 + $0x30] sm:$0xf]
      %v1070 = vld [vmem:[%s402 + $0x34] sm:$0xf]
      %v1071 = vld [vmem:[%s402 + $0x38] sm:$0xf]
      %v1072 = vld [vmem:[%s402 + $0x3c] sm:$0xf]
      %v1073 = vld [vmem:[%s402 + $0x40] sm:$0xf]
      %v1074 = vld [vmem:[%s402 + $0x44] sm:$0xf]
      %v1075 = vld [vmem:[%s402 + $0x48] sm:$0xf]
      %v1076 = vld [vmem:[%s402 + $0x4c] sm:$0xf]
      %v1077 = vld [vmem:[%s402 + $0x50] sm:$0xf]
      %v1078 = vld [vmem:[%s402 + $0x54] sm:$0xf]
      %v1079 = vld [vmem:[%s402 + $0x58] sm:$0xf]
      %v1080 = vld [vmem:[%s402 + $0x5c] sm:$0xf]
      %v1081 = vld [vmem:[%s402 + $0x60] sm:$0xf]
      %v1082 = vld [vmem:[%s402 + $0x64] sm:$0xf]
      %v1083 = vld [vmem:[%s402 + $0x68] sm:$0xf]
      %v1084 = vld [vmem:[%s402 + $0x6c] sm:$0xf]
      %v1085 = vld [vmem:[%s402 + $0x70] sm:$0xf]
      %v1086 = vld [vmem:[%s402 + $0x74] sm:$0xf]
      %v1087 = vld [vmem:[%s402 + $0x78] sm:$0xf]
      %v1088 = vld [vmem:[%s402 + $0x7c] sm:$0xf]
      %v1089 = vld [vmem:[%s406] sm:$0x3]
      %v1122 = vunpack.c.l.b16 %v1057
      %v1123 = vunpack.c.l.b16 %v1058
      %v1124 = vunpack.c.l.b16 %v1059
      %v1125 = vunpack.c.l.b16 %v1060
      %v1126 = vunpack.c.l.b16 %v1061
      %v1127 = vunpack.c.l.b16 %v1062
      %v1128 = vunpack.c.l.b16 %v1063
      %v1129 = vunpack.c.l.b16 %v1064
      %v1130 = vunpack.c.l.b16 %v1065
      %v1131 = vunpack.c.l.b16 %v1066
      %v1132 = vunpack.c.l.b16 %v1067
      %v1133 = vunpack.c.l.b16 %v1068
      %v1134 = vunpack.c.l.b16 %v1069
      %v1135 = vunpack.c.l.b16 %v1070
      %v1136 = vunpack.c.l.b16 %v1071
      %v1137 = vunpack.c.l.b16 %v1072
      %v1138 = vunpack.c.l.b16 %v1073
      %v1139 = vunpack.c.l.b16 %v1074
      %v1140 = vunpack.c.l.b16 %v1075
      %v1141 = vunpack.c.l.b16 %v1076
      %v1142 = vunpack.c.l.b16 %v1077
      %v1143 = vunpack.c.l.b16 %v1078
      %v1144 = vunpack.c.l.b16 %v1079
      %v1145 = vunpack.c.l.b16 %v1080
      %v1146 = vunpack.c.l.b16 %v1081
      %v1147 = vunpack.c.l.b16 %v1082
      %v1148 = vunpack.c.l.b16 %v1083
      %v1149 = vunpack.c.l.b16 %v1084
      %v1150 = vunpack.c.l.b16 %v1085
      %v1151 = vunpack.c.l.b16 %v1086
      %v1152 = vunpack.c.l.b16 %v1087
      %v1153 = vunpack.c.l.b16 %v1088
      %v1154 = vpack.c.b16 %v1123, %v1122
      %v1155 = vpack.c.b16 %v1125, %v1124
      %v1156 = vpack.c.b16 %v1127, %v1126
      %v1157 = vpack.c.b16 %v1129, %v1128
      %v1158 = vpack.c.b16 %v1131, %v1130
      %v1159 = vpack.c.b16 %v1133, %v1132
      %v1160 = vpack.c.b16 %v1135, %v1134
      %v1161 = vpack.c.b16 %v1137, %v1136
      %v1162 = vpack.c.b16 %v1139, %v1138
      %v1163 = vpack.c.b16 %v1141, %v1140
      %v1164 = vpack.c.b16 %v1143, %v1142
      %v1165 = vpack.c.b16 %v1145, %v1144
      %v1166 = vpack.c.b16 %v1147, %v1146
      %v1167 = vpack.c.b16 %v1149, %v1148
      %v1168 = vpack.c.b16 %v1151, %v1150
      %v1169 = vpack.c.b16 %v1153, %v1152
      %vm1170 = vcmask 31744
      %v1172 = vsel %vm1170, %v1154, 0
      %v1175 = vsel %vm1170, %v1155, 0
      %v1178 = vsel %vm1170, %v1156, 0
      %v1181 = vsel %vm1170, %v1157, 0
      %v1184 = vsel %vm1170, %v1158, 0
      %v1187 = vsel %vm1170, %v1159, 0
      %v1190 = vsel %vm1170, %v1160, 0
      %v1193 = vsel %vm1170, %v1161, 0
      %v1196 = vsel %vm1170, %v1162, 0
      %v1199 = vsel %vm1170, %v1163, 0
      %v1202 = vsel %vm1170, %v1164, 0
      %v1205 = vsel %vm1170, %v1165, 0
      %v1208 = vsel %vm1170, %v1166, 0
      %v1211 = vsel %vm1170, %v1167, 0
      %v1214 = vsel %vm1170, %v1168, 0
      %v1217 = vsel %vm1170, %v1169, 0
      %vm1219 = vcmask 1041408
      %v1221 = vsel %vm1219, %v1089, 0
      %1223 = vmatprep.subr.bf16.mxu0 0
      %1224 = vmatpush1.bf16.msra.mxu0 %v1221
      %1225 = vmatprep.subr.bf16.mxu0 0
      %1226 = vmatpush1.bf16.msra.mxu0 0
      %1227 = vmatprep.subr.bf16.mxu0 0
      %1228 = vmatpush1.bf16.msra.mxu0 0
      %1229 = vmatprep.subr.bf16.mxu0 0
      %1230 = vmatpush1.bf16.msra.mxu0 0
      %1231 = vmatprep.subr.bf16.mxu0 0
      %1232 = vmatpush1.bf16.msra.mxu0 0
      %1233 = vmatprep.subr.bf16.mxu0 0
      %1234 = vmatpush1.bf16.msra.mxu0 0
      %1235 = vmatprep.subr.bf16.mxu0 0
      %1236 = vmatpush1.bf16.msra.mxu0 0
      %1237 = vmatprep.subr.bf16.mxu0 0
      %1238 = vmatpush1.bf16.msra.mxu0 0
      %1239 = vmatprep.subr.bf16.mxu0 0
      %1240 = vmatpush1.bf16.msra.mxu0 0
      %1241 = vmatprep.subr.bf16.mxu0 0
      %1242 = vmatpush1.bf16.msra.mxu0 0
      %1243 = vmatprep.subr.bf16.mxu0 0
      %1244 = vmatpush1.bf16.msra.mxu0 0
      %1245 = vmatprep.subr.bf16.mxu0 0
      %1246 = vmatpush1.bf16.msra.mxu0 0
      %1247 = vmatprep.subr.bf16.mxu0 0
      %1248 = vmatpush1.bf16.msra.mxu0 0
      %1249 = vmatprep.subr.bf16.mxu0 0
      %1250 = vmatpush1.bf16.msra.mxu0 0
      %1251 = vmatprep.subr.bf16.mxu0 0
      %1252 = vmatpush1.bf16.msra.mxu0 0
      %1253 = vmatprep.subr.bf16.mxu0 0
      %1254 = vmatpush1.bf16.msra.mxu0 0
      %1255 = vmatprep.mubr.bf16.mxu0 0
      %1256 = vmatmul.mubr.bf16.gmra.mrb[0].mxu0 %v1172
      %v1257 = vpop.f32.mrb[0].mxu0
      %v1258 = vadd.f32 0.0, %v1257
      %v1259 = vpop.f32.mrb[0].mxu0
      %v1260 = vpop.f32.mrb[0].mxu0
      %v1261 = vadd.f32 0.0, %v1260
      %v1262 = vpop.f32.mrb[0].mxu0
      %1263 = vmatprep.mubr.bf16.mxu0 0
      %1264 = vmatmul.mubr.bf16.gmra.mrb[0].mxu0 %v1175
      %v1265 = vpop.f32.mrb[0].mxu0
      %v1266 = vadd.f32 0.0, %v1265
      %v1267 = vpop.f32.mrb[0].mxu0
      %v1268 = vpop.f32.mrb[0].mxu0
      %v1269 = vadd.f32 0.0, %v1268
      %v1270 = vpop.f32.mrb[0].mxu0
      %1271 = vmatprep.mubr.bf16.mxu0 0
      %1272 = vmatmul.mubr.bf16.gmra.mrb[0].mxu0 %v1178
      %v1273 = vpop.f32.mrb[0].mxu0
      %v1274 = vadd.f32 0.0, %v1273
      %v1275 = vpop.f32.mrb[0].mxu0
      %v1276 = vpop.f32.mrb[0].mxu0
      %v1277 = vadd.f32 0.0, %v1276
      %v1278 = vpop.f32.mrb[0].mxu0
      %1279 = vmatprep.mubr.bf16.mxu0 0
      %1280 = vmatmul.mubr.bf16.gmra.mrb[0].mxu0 %v1181
      %v1281 = vpop.f32.mrb[0].mxu0
      %v1282 = vadd.f32 0.0, %v1281
      %v1283 = vpop.f32.mrb[0].mxu0
      %v1284 = vpop.f32.mrb[0].mxu0
      %v1285 = vadd.f32 0.0, %v1284
      %v1286 = vpop.f32.mrb[0].mxu0
      %1287 = vmatprep.mubr.bf16.mxu0 0
      %1288 = vmatmul.mubr.bf16.gmra.mrb[0].mxu0 %v1184
      %v1289 = vpop.f32.mrb[0].mxu0
      %v1290 = vadd.f32 0.0, %v1289
      %v1291 = vpop.f32.mrb[0].mxu0
      %v1292 = vpop.f32.mrb[0].mxu0
      %v1293 = vadd.f32 0.0, %v1292
      %v1294 = vpop.f32.mrb[0].mxu0
      %1295 = vmatprep.mubr.bf16.mxu0 0
      %1296 = vmatmul.mubr.bf16.gmra.mrb[0].mxu0 %v1187
      %v1297 = vpop.f32.mrb[0].mxu0
      %v1298 = vadd.f32 0.0, %v1297
      %v1299 = vpop.f32.mrb[0].mxu0
      %v1300 = vpop.f32.mrb[0].mxu0
      %v1301 = vadd.f32 0.0, %v1300
      %v1302 = vpop.f32.mrb[0].mxu0
      %1303 = vmatprep.mubr.bf16.mxu0 0
      %1304 = vmatmul.mubr.bf16.gmra.mrb[0].mxu0 %v1190
      %v1305 = vpop.f32.mrb[0].mxu0
      %v1306 = vadd.f32 0.0, %v1305
      %v1307 = vpop.f32.mrb[0].mxu0
      %v1308 = vpop.f32.mrb[0].mxu0
      %v1309 = vadd.f32 0.0, %v1308
      %v1310 = vpop.f32.mrb[0].mxu0
      %1311 = vmatprep.mubr.bf16.mxu0 0
      %1312 = vmatmul.mubr.bf16.gmra.mrb[0].mxu0 %v1193
      %v1313 = vpop.f32.mrb[0].mxu0
      %v1314 = vadd.f32 0.0, %v1313
      %v1315 = vpop.f32.mrb[0].mxu0
      %v1316 = vpop.f32.mrb[0].mxu0
      %v1317 = vadd.f32 0.0, %v1316
      %v1318 = vpop.f32.mrb[0].mxu0
      %1319 = vmatprep.mubr.bf16.mxu0 0
      %1320 = vmatmul.mubr.bf16.gmra.mrb[0].mxu0 %v1196
      %v1321 = vpop.f32.mrb[0].mxu0
      %v1322 = vadd.f32 0.0, %v1321
      %v1323 = vpop.f32.mrb[0].mxu0
      %v1324 = vpop.f32.mrb[0].mxu0
      %v1325 = vadd.f32 0.0, %v1324
      %v1326 = vpop.f32.mrb[0].mxu0
      %1327 = vmatprep.mubr.bf16.mxu0 0
      %1328 = vmatmul.mubr.bf16.gmra.mrb[0].mxu0 %v1199
      %v1329 = vpop.f32.mrb[0].mxu0
      %v1330 = vadd.f32 0.0, %v1329
      %v1331 = vpop.f32.mrb[0].mxu0
      %v1332 = vpop.f32.mrb[0].mxu0
      %v1333 = vadd.f32 0.0, %v1332
      %v1334 = vpop.f32.mrb[0].mxu0
      %1335 = vmatprep.mubr.bf16.mxu0 0
      %1336 = vmatmul.mubr.bf16.gmra.mrb[0].mxu0 %v1202
      %v1337 = vpop.f32.mrb[0].mxu0
      %v1338 = vadd.f32 0.0, %v1337
      %v1339 = vpop.f32.mrb[0].mxu0
      %v1340 = vpop.f32.mrb[0].mxu0
      %v1341 = vadd.f32 0.0, %v1340
      %v1342 = vpop.f32.mrb[0].mxu0
      %1343 = vmatprep.mubr.bf16.mxu0 0
      %1344 = vmatmul.mubr.bf16.gmra.mrb[0].mxu0 %v1205
      %v1345 = vpop.f32.mrb[0].mxu0
      %v1346 = vadd.f32 0.0, %v1345
      %v1347 = vpop.f32.mrb[0].mxu0
      %v1348 = vpop.f32.mrb[0].mxu0
      %v1349 = vadd.f32 0.0, %v1348
      %v1350 = vpop.f32.mrb[0].mxu0
      %1351 = vmatprep.mubr.bf16.mxu0 0
      %1352 = vmatmul.mubr.bf16.gmra.mrb[0].mxu0 %v1208
      %v1353 = vpop.f32.mrb[0].mxu0
      %v1354 = vadd.f32 0.0, %v1353
      %v1355 = vpop.f32.mrb[0].mxu0
      %v1356 = vpop.f32.mrb[0].mxu0
      %v1357 = vadd.f32 0.0, %v1356
      %v1358 = vpop.f32.mrb[0].mxu0
      %1359 = vmatprep.mubr.bf16.mxu0 0
      %1360 = vmatmul.mubr.bf16.gmra.mrb[0].mxu0 %v1211
      %v1361 = vpop.f32.mrb[0].mxu0
      %v1362 = vadd.f32 0.0, %v1361
      %v1363 = vpop.f32.mrb[0].mxu0
      %v1364 = vpop.f32.mrb[0].mxu0
      %v1365 = vadd.f32 0.0, %v1364
      %v1366 = vpop.f32.mrb[0].mxu0
      %1367 = vmatprep.mubr.bf16.mxu0 0
      %1368 = vmatmul.mubr.bf16.gmra.mrb[0].mxu0 %v1214
      %v1369 = vpop.f32.mrb[0].mxu0
      %v1370 = vadd.f32 0.0, %v1369
      %v1371 = vpop.f32.mrb[0].mxu0
      %v1372 = vpop.f32.mrb[0].mxu0
      %v1373 = vadd.f32 0.0, %v1372
      %v1374 = vpop.f32.mrb[0].mxu0
      %1375 = vmatprep.mubr.bf16.mxu0 0
      %1376 = vmatmul.mubr.bf16.gmra.mrb[0].mxu0 %v1217
      %v1377 = vpop.f32.mrb[0].mxu0
      %v1378 = vadd.f32 0.0, %v1377
      %v1379 = vpop.f32.mrb[0].mxu0
      %v1380 = vpop.f32.mrb[0].mxu0
      %v1381 = vadd.f32 0.0, %v1380
      %v1382 = vpop.f32.mrb[0].mxu0
      %1383 = vdwg.mxu0
      %v1384 = vld [vmem:[#allocation2] sm:$0xff]
      %v1385 = vld [vmem:[#allocation2 + $0x8] sm:$0xff]
      %v1386 = vld [vmem:[#allocation2 + $0x10] sm:$0xff]
      %v1387 = vld [vmem:[#allocation2 + $0x18] sm:$0xff]
      %v1388 = vld [vmem:[#allocation2 + $0x20] sm:$0xff]
      %v1389 = vld [vmem:[#allocation2 + $0x28] sm:$0xff]
      %v1390 = vld [vmem:[#allocation2 + $0x30] sm:$0xff]
      %v1391 = vld [vmem:[#allocation2 + $0x38] sm:$0xff]
      %v1392 = vld [vmem:[#allocation2 + $0x40] sm:$0xff]
      %v1393 = vld [vmem:[#allocation2 + $0x48] sm:$0xff]
      %v1394 = vld [vmem:[#allocation2 + $0x50] sm:$0xff]
      %v1395 = vld [vmem:[#allocation2 + $0x58] sm:$0xff]
      %v1396 = vld [vmem:[#allocation2 + $0x60] sm:$0xff]
      %v1397 = vld [vmem:[#allocation2 + $0x68] sm:$0xff]
      %v1398 = vld [vmem:[#allocation2 + $0x70] sm:$0xff]
      %v1399 = vld [vmem:[#allocation2 + $0x78] sm:$0xff]
      %v1400 = vld [vmem:[%s410] sm:$0xf]
      %1417 = vrot.lane.b32.xlu0 %v1384, 124
      %v1418 = vpop.permute.xlu0 %1417
      %1419 = vrot.lane.b32.xlu0 %v1385, 124
      %v1420 = vpop.permute.xlu0 %1419
      %1421 = vrot.lane.b32.xlu0 %v1386, 124
      %v1422 = vpop.permute.xlu0 %1421
      %1423 = vrot.lane.b32.xlu0 %v1387, 124
      %v1424 = vpop.permute.xlu0 %1423
      %1425 = vrot.lane.b32.xlu0 %v1388, 124
      %v1426 = vpop.permute.xlu0 %1425
      %1427 = vrot.lane.b32.xlu0 %v1389, 124
      %v1428 = vpop.permute.xlu0 %1427
      %1429 = vrot.lane.b32.xlu0 %v1390, 124
      %v1430 = vpop.permute.xlu0 %1429
      %1431 = vrot.lane.b32.xlu0 %v1391, 124
      %v1432 = vpop.permute.xlu0 %1431
      %1433 = vrot.lane.b32.xlu0 %v1392, 124
      %v1434 = vpop.permute.xlu0 %1433
      %1435 = vrot.lane.b32.xlu0 %v1393, 124
      %v1436 = vpop.permute.xlu0 %1435
      %1437 = vrot.lane.b32.xlu0 %v1394, 124
      %v1438 = vpop.permute.xlu0 %1437
      %1439 = vrot.lane.b32.xlu0 %v1395, 124
      %v1440 = vpop.permute.xlu0 %1439
      %1441 = vrot.lane.b32.xlu0 %v1396, 124
      %v1442 = vpop.permute.xlu0 %1441
      %1443 = vrot.lane.b32.xlu0 %v1397, 124
      %v1444 = vpop.permute.xlu0 %1443
      %1445 = vrot.lane.b32.xlu0 %v1398, 124
      %v1446 = vpop.permute.xlu0 %1445
      %1447 = vrot.lane.b32.xlu0 %v1399, 124
      %v1448 = vpop.permute.xlu0 %1447
      %vm1449 = vcmask 64512
      %v1451 = vsel %vm1449, %v1418, 0
      %v1454 = vsel %vm1449, %v1420, 0
      %v1457 = vsel %vm1449, %v1422, 0
      %v1460 = vsel %vm1449, %v1424, 0
      %v1463 = vsel %vm1449, %v1426, 0
      %v1466 = vsel %vm1449, %v1428, 0
      %v1469 = vsel %vm1449, %v1430, 0
      %v1472 = vsel %vm1449, %v1432, 0
      %v1475 = vsel %vm1449, %v1434, 0
      %v1478 = vsel %vm1449, %v1436, 0
      %v1481 = vsel %vm1449, %v1438, 0
      %v1484 = vsel %vm1449, %v1440, 0
      %v1487 = vsel %vm1449, %v1442, 0
      %v1490 = vsel %vm1449, %v1444, 0
      %v1493 = vsel %vm1449, %v1446, 0
      %v1496 = vsel %vm1449, %v1448, 0
      %vm1498 = vcmask 1043456
      %v1500 = vsel %vm1498, %v1400, 0
      %1502 = vmatprep.subr.bf16.mxu0 0
      %1503 = vmatpush1.bf16.msra.mxu0 %v1500
      %1504 = vmatprep.subr.bf16.mxu0 0
      %1505 = vmatpush1.bf16.msra.mxu0 0
      %1506 = vmatprep.subr.bf16.mxu0 0
      %1507 = vmatpush1.bf16.msra.mxu0 0
      %1508 = vmatprep.subr.bf16.mxu0 0
      %1509 = vmatpush1.bf16.msra.mxu0 0
      %1510 = vmatprep.subr.bf16.mxu0 0
      %1511 = vmatpush1.bf16.msra.mxu0 0
      %1512 = vmatprep.subr.bf16.mxu0 0
      %1513 = vmatpush1.bf16.msra.mxu0 0
      %1514 = vmatprep.subr.bf16.mxu0 0
      %1515 = vmatpush1.bf16.msra.mxu0 0
      %1516 = vmatprep.subr.bf16.mxu0 0
      %1517 = vmatpush1.bf16.msra.mxu0 0
      %1518 = vmatprep.subr.bf16.mxu0 0
      %1519 = vmatpush1.bf16.msra.mxu0 0
      %1520 = vmatprep.subr.bf16.mxu0 0
      %1521 = vmatpush1.bf16.msra.mxu0 0
      %1522 = vmatprep.subr.bf16.mxu0 0
      %1523 = vmatpush1.bf16.msra.mxu0 0
      %1524 = vmatprep.subr.bf16.mxu0 0
      %1525 = vmatpush1.bf16.msra.mxu0 0
      %1526 = vmatprep.subr.bf16.mxu0 0
      %1527 = vmatpush1.bf16.msra.mxu0 0
      %1528 = vmatprep.subr.bf16.mxu0 0
      %1529 = vmatpush1.bf16.msra.mxu0 0
      %1530 = vmatprep.subr.bf16.mxu0 0
      %1531 = vmatpush1.bf16.msra.mxu0 0
      %1532 = vmatprep.subr.bf16.mxu0 0
      %1533 = vmatpush1.bf16.msra.mxu0 0
      %1534 = vmatprep.mubr.bf16.mxu0 0
      %1535 = vmatmul.mubr.bf16.gmra.mrb[0].mxu0 %v1451
      %v1536 = vpop.f32.mrb[0].mxu0
      %v1537 = vadd.f32 0.0, %v1536
      %v1538 = vpop.f32.mrb[0].mxu0
      %v1539 = vpop.f32.mrb[0].mxu0
      %v1540 = vadd.f32 0.0, %v1539
      %v1541 = vpop.f32.mrb[0].mxu0
      %1542 = vmatprep.mubr.bf16.mxu0 0
      %1543 = vmatmul.mubr.bf16.gmra.mrb[0].mxu0 %v1454
      %v1544 = vpop.f32.mrb[0].mxu0
      %v1545 = vadd.f32 0.0, %v1544
      %v1546 = vpop.f32.mrb[0].mxu0
      %v1547 = vpop.f32.mrb[0].mxu0
      %v1548 = vadd.f32 0.0, %v1547
      %v1549 = vpop.f32.mrb[0].mxu0
      %1550 = vmatprep.mubr.bf16.mxu0 0
      %1551 = vmatmul.mubr.bf16.gmra.mrb[0].mxu0 %v1457
      %v1552 = vpop.f32.mrb[0].mxu0
      %v1553 = vadd.f32 0.0, %v1552
      %v1554 = vpop.f32.mrb[0].mxu0
      %v1555 = vpop.f32.mrb[0].mxu0
      %v1556 = vadd.f32 0.0, %v1555
      %v1557 = vpop.f32.mrb[0].mxu0
      %1558 = vmatprep.mubr.bf16.mxu0 0
      %1559 = vmatmul.mubr.bf16.gmra.mrb[0].mxu0 %v1460
      %v1560 = vpop.f32.mrb[0].mxu0
      %v1561 = vadd.f32 0.0, %v1560
      %v1562 = vpop.f32.mrb[0].mxu0
      %v1563 = vpop.f32.mrb[0].mxu0
      %v1564 = vadd.f32 0.0, %v1563
      %v1565 = vpop.f32.mrb[0].mxu0
      %1566 = vmatprep.mubr.bf16.mxu0 0
      %1567 = vmatmul.mubr.bf16.gmra.mrb[0].mxu0 %v1463
      %v1568 = vpop.f32.mrb[0].mxu0
      %v1569 = vadd.f32 0.0, %v1568
      %v1570 = vpop.f32.mrb[0].mxu0
      %v1571 = vpop.f32.mrb[0].mxu0
      %v1572 = vadd.f32 0.0, %v1571
      %v1573 = vpop.f32.mrb[0].mxu0
      %1574 = vmatprep.mubr.bf16.mxu0 0
      %1575 = vmatmul.mubr.bf16.gmra.mrb[0].mxu0 %v1466
      %v1576 = vpop.f32.mrb[0].mxu0
      %v1577 = vadd.f32 0.0, %v1576
      %v1578 = vpop.f32.mrb[0].mxu0
      %v1579 = vpop.f32.mrb[0].mxu0
      %v1580 = vadd.f32 0.0, %v1579
      %v1581 = vpop.f32.mrb[0].mxu0
      %1582 = vmatprep.mubr.bf16.mxu0 0
      %1583 = vmatmul.mubr.bf16.gmra.mrb[0].mxu0 %v1469
      %v1584 = vpop.f32.mrb[0].mxu0
      %v1585 = vadd.f32 0.0, %v1584
      %v1586 = vpop.f32.mrb[0].mxu0
      %v1587 = vpop.f32.mrb[0].mxu0
      %v1588 = vadd.f32 0.0, %v1587
      %v1589 = vpop.f32.mrb[0].mxu0
      %1590 = vmatprep.mubr.bf16.mxu0 0
      %1591 = vmatmul.mubr.bf16.gmra.mrb[0].mxu0 %v1472
      %v1592 = vpop.f32.mrb[0].mxu0
      %v1593 = vadd.f32 0.0, %v1592
      %v1594 = vpop.f32.mrb[0].mxu0
      %v1595 = vpop.f32.mrb[0].mxu0
      %v1596 = vadd.f32 0.0, %v1595
      %v1597 = vpop.f32.mrb[0].mxu0
      %1598 = vmatprep.mubr.bf16.mxu0 0
      %1599 = vmatmul.mubr.bf16.gmra.mrb[0].mxu0 %v1475
      %v1600 = vpop.f32.mrb[0].mxu0
      %v1601 = vadd.f32 0.0, %v1600
      %v1602 = vpop.f32.mrb[0].mxu0
      %v1603 = vpop.f32.mrb[0].mxu0
      %v1604 = vadd.f32 0.0, %v1603
      %v1605 = vpop.f32.mrb[0].mxu0
      %1606 = vmatprep.mubr.bf16.mxu0 0
      %1607 = vmatmul.mubr.bf16.gmra.mrb[0].mxu0 %v1478
      %v1608 = vpop.f32.mrb[0].mxu0
      %v1609 = vadd.f32 0.0, %v1608
      %v1610 = vpop.f32.mrb[0].mxu0
      %v1611 = vpop.f32.mrb[0].mxu0
      %v1612 = vadd.f32 0.0, %v1611
      %v1613 = vpop.f32.mrb[0].mxu0
      %1614 = vmatprep.mubr.bf16.mxu0 0
      %1615 = vmatmul.mubr.bf16.gmra.mrb[0].mxu0 %v1481
      %v1616 = vpop.f32.mrb[0].mxu0
      %v1617 = vadd.f32 0.0, %v1616
      %v1618 = vpop.f32.mrb[0].mxu0
      %v1619 = vpop.f32.mrb[0].mxu0
      %v1620 = vadd.f32 0.0, %v1619
      %v1621 = vpop.f32.mrb[0].mxu0
      %1622 = vmatprep.mubr.bf16.mxu0 0
      %1623 = vmatmul.mubr.bf16.gmra.mrb[0].mxu0 %v1484
      %v1624 = vpop.f32.mrb[0].mxu0
      %v1625 = vadd.f32 0.0, %v1624
      %v1626 = vpop.f32.mrb[0].mxu0
      %v1627 = vpop.f32.mrb[0].mxu0
      %v1628 = vadd.f32 0.0, %v1627
      %v1629 = vpop.f32.mrb[0].mxu0
      %1630 = vmatprep.mubr.bf16.mxu0 0
      %1631 = vmatmul.mubr.bf16.gmra.mrb[0].mxu0 %v1487
      %v1632 = vpop.f32.mrb[0].mxu0
      %v1633 = vadd.f32 0.0, %v1632
      %v1634 = vpop.f32.mrb[0].mxu0
      %v1635 = vpop.f32.mrb[0].mxu0
      %v1636 = vadd.f32 0.0, %v1635
      %v1637 = vpop.f32.mrb[0].mxu0
      %1638 = vmatprep.mubr.bf16.mxu0 0
      %1639 = vmatmul.mubr.bf16.gmra.mrb[0].mxu0 %v1490
      %v1640 = vpop.f32.mrb[0].mxu0
      %v1641 = vadd.f32 0.0, %v1640
      %v1642 = vpop.f32.mrb[0].mxu0
      %v1643 = vpop.f32.mrb[0].mxu0
      %v1644 = vadd.f32 0.0, %v1643
      %v1645 = vpop.f32.mrb[0].mxu0
      %1646 = vmatprep.mubr.bf16.mxu0 0
      %1647 = vmatmul.mubr.bf16.gmra.mrb[0].mxu0 %v1493
      %v1648 = vpop.f32.mrb[0].mxu0
      %v1649 = vadd.f32 0.0, %v1648
      %v1650 = vpop.f32.mrb[0].mxu0
      %v1651 = vpop.f32.mrb[0].mxu0
      %v1652 = vadd.f32 0.0, %v1651
      %v1653 = vpop.f32.mrb[0].mxu0
      %1654 = vmatprep.mubr.bf16.mxu0 0
      %1655 = vmatmul.mubr.bf16.gmra.mrb[0].mxu0 %v1496
      %v1656 = vpop.f32.mrb[0].mxu0
      %v1657 = vadd.f32 0.0, %v1656
      %v1658 = vpop.f32.mrb[0].mxu0
      %v1659 = vpop.f32.mrb[0].mxu0
      %v1660 = vadd.f32 0.0, %v1659
      %v1661 = vpop.f32.mrb[0].mxu0
      %1662 = vdwg.mxu0
      %v1663 = vld [vmem:[%s414] sm:$0xf]
      %v1665 = vsel %vm1449, %v1384, 0
      %v1668 = vsel %vm1449, %v1385, 0
      %v1671 = vsel %vm1449, %v1386, 0
      %v1674 = vsel %vm1449, %v1387, 0
      %v1677 = vsel %vm1449, %v1388, 0
      %v1680 = vsel %vm1449, %v1389, 0
      %v1683 = vsel %vm1449, %v1390, 0
      %v1686 = vsel %vm1449, %v1391, 0
      %v1689 = vsel %vm1449, %v1392, 0
      %v1692 = vsel %vm1449, %v1393, 0
      %v1695 = vsel %vm1449, %v1394, 0
      %v1698 = vsel %vm1449, %v1395, 0
      %v1701 = vsel %vm1449, %v1396, 0
      %v1704 = vsel %vm1449, %v1397, 0
      %v1707 = vsel %vm1449, %v1398, 0
      %v1710 = vsel %vm1449, %v1399, 0
      %v1713 = vsel %vm1498, %v1663, 0
      %1715 = vmatprep.subr.bf16.mxu0 0
      %1716 = vmatpush1.bf16.msra.mxu0 %v1713
      %1717 = vmatprep.subr.bf16.mxu0 0
      %1718 = vmatpush1.bf16.msra.mxu0 0
      %1719 = vmatprep.subr.bf16.mxu0 0
      %1720 = vmatpush1.bf16.msra.mxu0 0
      %1721 = vmatprep.subr.bf16.mxu0 0
      %1722 = vmatpush1.bf16.msra.mxu0 0
      %1723 = vmatprep.subr.bf16.mxu0 0
      %1724 = vmatpush1.bf16.msra.mxu0 0
      %1725 = vmatprep.subr.bf16.mxu0 0
      %1726 = vmatpush1.bf16.msra.mxu0 0
      %1727 = vmatprep.subr.bf16.mxu0 0
      %1728 = vmatpush1.bf16.msra.mxu0 0
      %1729 = vmatprep.subr.bf16.mxu0 0
      %1730 = vmatpush1.bf16.msra.mxu0 0
      %1731 = vmatprep.subr.bf16.mxu0 0
      %1732 = vmatpush1.bf16.msra.mxu0 0
      %1733 = vmatprep.subr.bf16.mxu0 0
      %1734 = vmatpush1.bf16.msra.mxu0 0
      %1735 = vmatprep.subr.bf16.mxu0 0
      %1736 = vmatpush1.bf16.msra.mxu0 0
      %1737 = vmatprep.subr.bf16.mxu0 0
      %1738 = vmatpush1.bf16.msra.mxu0 0
      %1739 = vmatprep.subr.bf16.mxu0 0
      %1740 = vmatpush1.bf16.msra.mxu0 0
      %1741 = vmatprep.subr.bf16.mxu0 0
      %1742 = vmatpush1.bf16.msra.mxu0 0
      %1743 = vmatprep.subr.bf16.mxu0 0
      %1744 = vmatpush1.bf16.msra.mxu0 0
      %1745 = vmatprep.subr.bf16.mxu0 0
      %1746 = vmatpush1.bf16.msra.mxu0 0
      %1747 = vmatprep.mubr.bf16.mxu0 0
      %1748 = vmatmul.mubr.bf16.gmra.mrb[0].mxu0 %v1665
      %v1749 = vpop.f32.mrb[0].mxu0
      %v1750 = vadd.f32 0.0, %v1749
      %v1751 = vpop.f32.mrb[0].mxu0
      %v1752 = vpop.f32.mrb[0].mxu0
      %v1753 = vadd.f32 0.0, %v1752
      %v1754 = vpop.f32.mrb[0].mxu0
      %1755 = vmatprep.mubr.bf16.mxu0 0
      %1756 = vmatmul.mubr.bf16.gmra.mrb[0].mxu0 %v1668
      %v1757 = vpop.f32.mrb[0].mxu0
      %v1758 = vadd.f32 0.0, %v1757
      %v1759 = vpop.f32.mrb[0].mxu0
      %v1760 = vpop.f32.mrb[0].mxu0
      %v1761 = vadd.f32 0.0, %v1760
      %v1762 = vpop.f32.mrb[0].mxu0
      %1763 = vmatprep.mubr.bf16.mxu0 0
      %1764 = vmatmul.mubr.bf16.gmra.mrb[0].mxu0 %v1671
      %v1765 = vpop.f32.mrb[0].mxu0
      %v1766 = vadd.f32 0.0, %v1765
      %v1767 = vpop.f32.mrb[0].mxu0
      %v1768 = vpop.f32.mrb[0].mxu0
      %v1769 = vadd.f32 0.0, %v1768
      %v1770 = vpop.f32.mrb[0].mxu0
      %1771 = vmatprep.mubr.bf16.mxu0 0
      %1772 = vmatmul.mubr.bf16.gmra.mrb[0].mxu0 %v1674
      %v1773 = vpop.f32.mrb[0].mxu0
      %v1774 = vadd.f32 0.0, %v1773
      %v1775 = vpop.f32.mrb[0].mxu0
      %v1776 = vpop.f32.mrb[0].mxu0
      %v1777 = vadd.f32 0.0, %v1776
      %v1778 = vpop.f32.mrb[0].mxu0
      %1779 = vmatprep.mubr.bf16.mxu0 0
      %1780 = vmatmul.mubr.bf16.gmra.mrb[0].mxu0 %v1677
      %v1781 = vpop.f32.mrb[0].mxu0
      %v1782 = vadd.f32 0.0, %v1781
      %v1783 = vpop.f32.mrb[0].mxu0
      %v1784 = vpop.f32.mrb[0].mxu0
      %v1785 = vadd.f32 0.0, %v1784
      %v1786 = vpop.f32.mrb[0].mxu0
      %1787 = vmatprep.mubr.bf16.mxu0 0
      %1788 = vmatmul.mubr.bf16.gmra.mrb[0].mxu0 %v1680
      %v1789 = vpop.f32.mrb[0].mxu0
      %v1790 = vadd.f32 0.0, %v1789
      %v1791 = vpop.f32.mrb[0].mxu0
      %v1792 = vpop.f32.mrb[0].mxu0
      %v1793 = vadd.f32 0.0, %v1792
      %v1794 = vpop.f32.mrb[0].mxu0
      %1795 = vmatprep.mubr.bf16.mxu0 0
      %1796 = vmatmul.mubr.bf16.gmra.mrb[0].mxu0 %v1683
      %v1797 = vpop.f32.mrb[0].mxu0
      %v1798 = vadd.f32 0.0, %v1797
      %v1799 = vpop.f32.mrb[0].mxu0
      %v1800 = vpop.f32.mrb[0].mxu0
      %v1801 = vadd.f32 0.0, %v1800
      %v1802 = vpop.f32.mrb[0].mxu0
      %1803 = vmatprep.mubr.bf16.mxu0 0
      %1804 = vmatmul.mubr.bf16.gmra.mrb[0].mxu0 %v1686
      %v1805 = vpop.f32.mrb[0].mxu0
      %v1806 = vadd.f32 0.0, %v1805
      %v1807 = vpop.f32.mrb[0].mxu0
      %v1808 = vpop.f32.mrb[0].mxu0
      %v1809 = vadd.f32 0.0, %v1808
      %v1810 = vpop.f32.mrb[0].mxu0
      %1811 = vmatprep.mubr.bf16.mxu0 0
      %1812 = vmatmul.mubr.bf16.gmra.mrb[0].mxu0 %v1689
      %v1813 = vpop.f32.mrb[0].mxu0
      %v1814 = vadd.f32 0.0, %v1813
      %v1815 = vpop.f32.mrb[0].mxu0
      %v1816 = vpop.f32.mrb[0].mxu0
      %v1817 = vadd.f32 0.0, %v1816
      %v1818 = vpop.f32.mrb[0].mxu0
      %1819 = vmatprep.mubr.bf16.mxu0 0
      %1820 = vmatmul.mubr.bf16.gmra.mrb[0].mxu0 %v1692
      %v1821 = vpop.f32.mrb[0].mxu0
      %v1822 = vadd.f32 0.0, %v1821
      %v1823 = vpop.f32.mrb[0].mxu0
      %v1824 = vpop.f32.mrb[0].mxu0
      %v1825 = vadd.f32 0.0, %v1824
      %v1826 = vpop.f32.mrb[0].mxu0
      %1827 = vmatprep.mubr.bf16.mxu0 0
      %1828 = vmatmul.mubr.bf16.gmra.mrb[0].mxu0 %v1695
      %v1829 = vpop.f32.mrb[0].mxu0
      %v1830 = vadd.f32 0.0, %v1829
      %v1831 = vpop.f32.mrb[0].mxu0
      %v1832 = vpop.f32.mrb[0].mxu0
      %v1833 = vadd.f32 0.0, %v1832
      %v1834 = vpop.f32.mrb[0].mxu0
      %1835 = vmatprep.mubr.bf16.mxu0 0
      %1836 = vmatmul.mubr.bf16.gmra.mrb[0].mxu0 %v1698
      %v1837 = vpop.f32.mrb[0].mxu0
      %v1838 = vadd.f32 0.0, %v1837
      %v1839 = vpop.f32.mrb[0].mxu0
      %v1840 = vpop.f32.mrb[0].mxu0
      %v1841 = vadd.f32 0.0, %v1840
      %v1842 = vpop.f32.mrb[0].mxu0
      %1843 = vmatprep.mubr.bf16.mxu0 0
      %1844 = vmatmul.mubr.bf16.gmra.mrb[0].mxu0 %v1701
      %v1845 = vpop.f32.mrb[0].mxu0
      %v1846 = vadd.f32 0.0, %v1845
      %v1847 = vpop.f32.mrb[0].mxu0
      %v1848 = vpop.f32.mrb[0].mxu0
      %v1849 = vadd.f32 0.0, %v1848
      %v1850 = vpop.f32.mrb[0].mxu0
      %1851 = vmatprep.mubr.bf16.mxu0 0
      %1852 = vmatmul.mubr.bf16.gmra.mrb[0].mxu0 %v1704
      %v1853 = vpop.f32.mrb[0].mxu0
      %v1854 = vadd.f32 0.0, %v1853
      %v1855 = vpop.f32.mrb[0].mxu0
      %v1856 = vpop.f32.mrb[0].mxu0
      %v1857 = vadd.f32 0.0, %v1856
      %v1858 = vpop.f32.mrb[0].mxu0
      %1859 = vmatprep.mubr.bf16.mxu0 0
      %1860 = vmatmul.mubr.bf16.gmra.mrb[0].mxu0 %v1707
      %v1861 = vpop.f32.mrb[0].mxu0
      %v1862 = vadd.f32 0.0, %v1861
      %v1863 = vpop.f32.mrb[0].mxu0
      %v1864 = vpop.f32.mrb[0].mxu0
      %v1865 = vadd.f32 0.0, %v1864
      %v1866 = vpop.f32.mrb[0].mxu0
      %1867 = vmatprep.mubr.bf16.mxu0 0
      %1868 = vmatmul.mubr.bf16.gmra.mrb[0].mxu0 %v1710
      %v1869 = vpop.f32.mrb[0].mxu0
      %v1870 = vadd.f32 0.0, %v1869
      %v1871 = vpop.f32.mrb[0].mxu0
      %v1872 = vpop.f32.mrb[0].mxu0
      %v1873 = vadd.f32 0.0, %v1872
      %v1874 = vpop.f32.mrb[0].mxu0
      %1875 = vdwg.mxu0
      %v1876 = vld [vmem:[%s418] sm:$0xf]
      %v1877 = vld [vmem:[%s418 + $0x4] sm:$0xf]
      %v1880 = vunpack.c.l.b16 %v1876
      %v1881 = vunpack.c.l.b16 %v1877
      %v1882 = vpack.c.b16 %v1881, %v1880
      %vm1884 = vcmask 130048
      %v1885 = vsel %vm1884, %v1384, 0
      %v1887 = vsel %vm1884, %v1385, 0
      %v1889 = vsel %vm1884, %v1386, 0
      %v1891 = vsel %vm1884, %v1387, 0
      %v1893 = vsel %vm1884, %v1388, 0
      %v1895 = vsel %vm1884, %v1389, 0
      %v1897 = vsel %vm1884, %v1390, 0
      %v1899 = vsel %vm1884, %v1391, 0
      %v1901 = vsel %vm1884, %v1392, 0
      %v1903 = vsel %vm1884, %v1393, 0
      %v1905 = vsel %vm1884, %v1394, 0
      %v1907 = vsel %vm1884, %v1395, 0
      %v1909 = vsel %vm1884, %v1396, 0
      %v1911 = vsel %vm1884, %v1397, 0
      %v1913 = vsel %vm1884, %v1398, 0
      %v1915 = vsel %vm1884, %v1399, 0
      %1917 = vmatprep.subr.bf16.mxu0 0
      %1918 = vmatpush1.bf16.msra.mxu0 %v1882
      %1919 = vmatprep.subr.bf16.mxu0 0
      %1920 = vmatpush1.bf16.msra.mxu0 0
      %1921 = vmatprep.subr.bf16.mxu0 0
      %1922 = vmatpush1.bf16.msra.mxu0 0
      %1923 = vmatprep.subr.bf16.mxu0 0
      %1924 = vmatpush1.bf16.msra.mxu0 0
      %1925 = vmatprep.subr.bf16.mxu0 0
      %1926 = vmatpush1.bf16.msra.mxu0 0
      %1927 = vmatprep.subr.bf16.mxu0 0
      %1928 = vmatpush1.bf16.msra.mxu0 0
      %1929 = vmatprep.subr.bf16.mxu0 0
      %1930 = vmatpush1.bf16.msra.mxu0 0
      %1931 = vmatprep.subr.bf16.mxu0 0
      %1932 = vmatpush1.bf16.msra.mxu0 0
      %1933 = vmatprep.subr.bf16.mxu0 0
      %1934 = vmatpush1.bf16.msra.mxu0 0
      %1935 = vmatprep.subr.bf16.mxu0 0
      %1936 = vmatpush1.bf16.msra.mxu0 0
      %1937 = vmatprep.subr.bf16.mxu0 0
      %1938 = vmatpush1.bf16.msra.mxu0 0
      %1939 = vmatprep.subr.bf16.mxu0 0
      %1940 = vmatpush1.bf16.msra.mxu0 0
      %1941 = vmatprep.subr.bf16.mxu0 0
      %1942 = vmatpush1.bf16.msra.mxu0 0
      %1943 = vmatprep.subr.bf16.mxu0 0
      %1944 = vmatpush1.bf16.msra.mxu0 0
      %1945 = vmatprep.subr.bf16.mxu0 0
      %1946 = vmatpush1.bf16.msra.mxu0 0
      %1947 = vmatprep.subr.bf16.mxu0 0
      %1948 = vmatpush1.bf16.msra.mxu0 0
      %1949 = vmatprep.mubr.bf16.mxu0 0
      %1950 = vmatmul.mubr.bf16.gmra.mrb[0].mxu0 %v1885
      %v1951 = vpop.f32.mrb[0].mxu0
      %v1952 = vadd.f32 0.0, %v1951
      %v1953 = vpop.f32.mrb[0].mxu0
      %v1954 = vpop.f32.mrb[0].mxu0
      %v1955 = vadd.f32 0.0, %v1954
      %v1956 = vpop.f32.mrb[0].mxu0
      %1957 = vmatprep.mubr.bf16.mxu0 0
      %1958 = vmatmul.mubr.bf16.gmra.mrb[0].mxu0 %v1887
      %v1959 = vpop.f32.mrb[0].mxu0
      %v1960 = vadd.f32 0.0, %v1959
      %v1961 = vpop.f32.mrb[0].mxu0
      %v1962 = vpop.f32.mrb[0].mxu0
      %v1963 = vadd.f32 0.0, %v1962
      %v1964 = vpop.f32.mrb[0].mxu0
      %1965 = vmatprep.mubr.bf16.mxu0 0
      %1966 = vmatmul.mubr.bf16.gmra.mrb[0].mxu0 %v1889
      %v1967 = vpop.f32.mrb[0].mxu0
      %v1968 = vadd.f32 0.0, %v1967
      %v1969 = vpop.f32.mrb[0].mxu0
      %v1970 = vpop.f32.mrb[0].mxu0
      %v1971 = vadd.f32 0.0, %v1970
      %v1972 = vpop.f32.mrb[0].mxu0
      %1973 = vmatprep.mubr.bf16.mxu0 0
      %1974 = vmatmul.mubr.bf16.gmra.mrb[0].mxu0 %v1891
      %v1975 = vpop.f32.mrb[0].mxu0
      %v1976 = vadd.f32 0.0, %v1975
      %v1977 = vpop.f32.mrb[0].mxu0
      %v1978 = vpop.f32.mrb[0].mxu0
      %v1979 = vadd.f32 0.0, %v1978
      %v1980 = vpop.f32.mrb[0].mxu0
      %1981 = vmatprep.mubr.bf16.mxu0 0
      %1982 = vmatmul.mubr.bf16.gmra.mrb[0].mxu0 %v1893
      %v1983 = vpop.f32.mrb[0].mxu0
      %v1984 = vadd.f32 0.0, %v1983
      %v1985 = vpop.f32.mrb[0].mxu0
      %v1986 = vpop.f32.mrb[0].mxu0
      %v1987 = vadd.f32 0.0, %v1986
      %v1988 = vpop.f32.mrb[0].mxu0
      %1989 = vmatprep.mubr.bf16.mxu0 0
      %1990 = vmatmul.mubr.bf16.gmra.mrb[0].mxu0 %v1895
      %v1991 = vpop.f32.mrb[0].mxu0
      %v1992 = vadd.f32 0.0, %v1991
      %v1993 = vpop.f32.mrb[0].mxu0
      %v1994 = vpop.f32.mrb[0].mxu0
      %v1995 = vadd.f32 0.0, %v1994
      %v1996 = vpop.f32.mrb[0].mxu0
      %1997 = vmatprep.mubr.bf16.mxu0 0
      %1998 = vmatmul.mubr.bf16.gmra.mrb[0].mxu0 %v1897
      %v1999 = vpop.f32.mrb[0].mxu0
      %v2000 = vadd.f32 0.0, %v1999
      %v2001 = vpop.f32.mrb[0].mxu0
      %v2002 = vpop.f32.mrb[0].mxu0
      %v2003 = vadd.f32 0.0, %v2002
      %v2004 = vpop.f32.mrb[0].mxu0
      %2005 = vmatprep.mubr.bf16.mxu0 0
      %2006 = vmatmul.mubr.bf16.gmra.mrb[0].mxu0 %v1899
      %v2007 = vpop.f32.mrb[0].mxu0
      %v2008 = vadd.f32 0.0, %v2007
      %v2009 = vpop.f32.mrb[0].mxu0
      %v2010 = vpop.f32.mrb[0].mxu0
      %v2011 = vadd.f32 0.0, %v2010
      %v2012 = vpop.f32.mrb[0].mxu0
      %2013 = vmatprep.mubr.bf16.mxu0 0
      %2014 = vmatmul.mubr.bf16.gmra.mrb[0].mxu0 %v1901
      %v2015 = vpop.f32.mrb[0].mxu0
      %v2016 = vadd.f32 0.0, %v2015
      %v2017 = vpop.f32.mrb[0].mxu0
      %v2018 = vpop.f32.mrb[0].mxu0
      %v2019 = vadd.f32 0.0, %v2018
      %v2020 = vpop.f32.mrb[0].mxu0
      %2021 = vmatprep.mubr.bf16.mxu0 0
      %2022 = vmatmul.mubr.bf16.gmra.mrb[0].mxu0 %v1903
      %v2023 = vpop.f32.mrb[0].mxu0
      %v2024 = vadd.f32 0.0, %v2023
      %v2025 = vpop.f32.mrb[0].mxu0
      %v2026 = vpop.f32.mrb[0].mxu0
      %v2027 = vadd.f32 0.0, %v2026
      %v2028 = vpop.f32.mrb[0].mxu0
      %2029 = vmatprep.mubr.bf16.mxu0 0
      %2030 = vmatmul.mubr.bf16.gmra.mrb[0].mxu0 %v1905
      %v2031 = vpop.f32.mrb[0].mxu0
      %v2032 = vadd.f32 0.0, %v2031
      %v2033 = vpop.f32.mrb[0].mxu0
      %v2034 = vpop.f32.mrb[0].mxu0
      %v2035 = vadd.f32 0.0, %v2034
      %v2036 = vpop.f32.mrb[0].mxu0
      %2037 = vmatprep.mubr.bf16.mxu0 0
      %2038 = vmatmul.mubr.bf16.gmra.mrb[0].mxu0 %v1907
      %v2039 = vpop.f32.mrb[0].mxu0
      %v2040 = vadd.f32 0.0, %v2039
      %v2041 = vpop.f32.mrb[0].mxu0
      %v2042 = vpop.f32.mrb[0].mxu0
      %v2043 = vadd.f32 0.0, %v2042
      %v2044 = vpop.f32.mrb[0].mxu0
      %2045 = vmatprep.mubr.bf16.mxu0 0
      %2046 = vmatmul.mubr.bf16.gmra.mrb[0].mxu0 %v1909
      %v2047 = vpop.f32.mrb[0].mxu0
      %v2048 = vadd.f32 0.0, %v2047
      %v2049 = vpop.f32.mrb[0].mxu0
      %v2050 = vpop.f32.mrb[0].mxu0
      %v2051 = vadd.f32 0.0, %v2050
      %v2052 = vpop.f32.mrb[0].mxu0
      %2053 = vmatprep.mubr.bf16.mxu0 0
      %2054 = vmatmul.mubr.bf16.gmra.mrb[0].mxu0 %v1911
      %v2055 = vpop.f32.mrb[0].mxu0
      %v2056 = vadd.f32 0.0, %v2055
      %v2057 = vpop.f32.mrb[0].mxu0
      %v2058 = vpop.f32.mrb[0].mxu0
      %v2059 = vadd.f32 0.0, %v2058
      %v2060 = vpop.f32.mrb[0].mxu0
      %2061 = vmatprep.mubr.bf16.mxu0 0
      %2062 = vmatmul.mubr.bf16.gmra.mrb[0].mxu0 %v1913
      %v2063 = vpop.f32.mrb[0].mxu0
      %v2064 = vadd.f32 0.0, %v2063
      %v2065 = vpop.f32.mrb[0].mxu0
      %v2066 = vpop.f32.mrb[0].mxu0
      %v2067 = vadd.f32 0.0, %v2066
      %v2068 = vpop.f32.mrb[0].mxu0
      %2069 = vmatprep.mubr.bf16.mxu0 0
      %2070 = vmatmul.mubr.bf16.gmra.mrb[0].mxu0 %v1915
      %v2071 = vpop.f32.mrb[0].mxu0
      %v2072 = vadd.f32 0.0, %v2071
      %v2073 = vpop.f32.mrb[0].mxu0
      %v2074 = vpop.f32.mrb[0].mxu0
      %v2075 = vadd.f32 0.0, %v2074
      %v2076 = vpop.f32.mrb[0].mxu0
      %2077 = vdwg.mxu0
      %v2078 = vsel %vm1449, %v1258, 0.0
      %v2079 = vsel %vm1449, %v1261, 0.0
      %v2080 = vadd.f32 %v2078, %v2079
      %v2081 = vsel %vm1449, %v1266, 0.0
      %v2082 = vadd.f32 %v2080, %v2081
      %v2083 = vsel %vm1449, %v1269, 0.0
      %v2084 = vadd.f32 %v2082, %v2083
      %v2085 = vsel %vm1449, %v1274, 0.0
      %v2086 = vadd.f32 %v2084, %v2085
      %v2087 = vsel %vm1449, %v1277, 0.0
      %v2088 = vadd.f32 %v2086, %v2087
      %v2089 = vsel %vm1449, %v1282, 0.0
      %v2090 = vadd.f32 %v2088, %v2089
      %v2091 = vsel %vm1449, %v1285, 0.0
      %v2092 = vadd.f32 %v2090, %v2091
      %v2093 = vsel %vm1449, %v1290, 0.0
      %v2094 = vadd.f32 %v2092, %v2093
      %v2095 = vsel %vm1449, %v1293, 0.0
      %v2096 = vadd.f32 %v2094, %v2095
      %v2097 = vsel %vm1449, %v1298, 0.0
      %v2098 = vadd.f32 %v2096, %v2097
      %v2099 = vsel %vm1449, %v1301, 0.0
      %v2100 = vadd.f32 %v2098, %v2099
      %v2101 = vsel %vm1449, %v1306, 0.0
      %v2102 = vadd.f32 %v2100, %v2101
      %v2103 = vsel %vm1449, %v1309, 0.0
      %v2104 = vadd.f32 %v2102, %v2103
      %v2105 = vsel %vm1449, %v1314, 0.0
      %v2106 = vadd.f32 %v2104, %v2105
      %v2107 = vsel %vm1449, %v1317, 0.0
      %v2108 = vadd.f32 %v2106, %v2107
      %v2109 = vsel %vm1449, %v1322, 0.0
      %v2110 = vadd.f32 %v2108, %v2109
      %v2111 = vsel %vm1449, %v1325, 0.0
      %v2112 = vadd.f32 %v2110, %v2111
      %v2113 = vsel %vm1449, %v1330, 0.0
      %v2114 = vadd.f32 %v2112, %v2113
      %v2115 = vsel %vm1449, %v1333, 0.0
      %v2116 = vadd.f32 %v2114, %v2115
      %v2117 = vsel %vm1449, %v1338, 0.0
      %v2118 = vadd.f32 %v2116, %v2117
      %v2119 = vsel %vm1449, %v1341, 0.0
      %v2120 = vadd.f32 %v2118, %v2119
      %v2121 = vsel %vm1449, %v1346, 0.0
      %v2122 = vadd.f32 %v2120, %v2121
      %v2123 = vsel %vm1449, %v1349, 0.0
      %v2124 = vadd.f32 %v2122, %v2123
      %v2125 = vsel %vm1449, %v1354, 0.0
      %v2126 = vadd.f32 %v2124, %v2125
      %v2127 = vsel %vm1449, %v1357, 0.0
      %v2128 = vadd.f32 %v2126, %v2127
      %v2129 = vsel %vm1449, %v1362, 0.0
      %v2130 = vadd.f32 %v2128, %v2129
      %v2131 = vsel %vm1449, %v1365, 0.0
      %v2132 = vadd.f32 %v2130, %v2131
      %v2133 = vsel %vm1449, %v1370, 0.0
      %v2134 = vadd.f32 %v2132, %v2133
      %v2135 = vsel %vm1449, %v1373, 0.0
      %v2136 = vadd.f32 %v2134, %v2135
      %v2137 = vsel %vm1449, %v1378, 0.0
      %v2138 = vadd.f32 %v2136, %v2137
      %v2139 = vsel %vm1449, %v1381, 0.0
      %v2140 = vadd.f32 %v2138, %v2139
      %v2141 = vrot.slane %v2140, 4
      %v2142 = vadd.f32 %v2140, %v2141
      %v2143 = vrot.slane %v2142, 2
      %v2144 = vadd.f32 %v2142, %v2143
      %v2145 = vrot.slane %v2144, 1
      %v2146 = vadd.f32 %v2144, %v2145
      %v2147 = vsel %vm1449, %v1537, 0.0
      %v2148 = vsel %vm1449, %v1540, 0.0
      %v2149 = vadd.f32 %v2147, %v2148
      %v2150 = vsel %vm1449, %v1545, 0.0
      %v2151 = vadd.f32 %v2149, %v2150
      %v2152 = vsel %vm1449, %v1548, 0.0
      %v2153 = vadd.f32 %v2151, %v2152
      %v2154 = vsel %vm1449, %v1553, 0.0
      %v2155 = vadd.f32 %v2153, %v2154
      %v2156 = vsel %vm1449, %v1556, 0.0
      %v2157 = vadd.f32 %v2155, %v2156
      %v2158 = vsel %vm1449, %v1561, 0.0
      %v2159 = vadd.f32 %v2157, %v2158
      %v2160 = vsel %vm1449, %v1564, 0.0
      %v2161 = vadd.f32 %v2159, %v2160
      %v2162 = vsel %vm1449, %v1569, 0.0
      %v2163 = vadd.f32 %v2161, %v2162
      %v2164 = vsel %vm1449, %v1572, 0.0
      %v2165 = vadd.f32 %v2163, %v2164
      %v2166 = vsel %vm1449, %v1577, 0.0
      %v2167 = vadd.f32 %v2165, %v2166
      %v2168 = vsel %vm1449, %v1580, 0.0
      %v2169 = vadd.f32 %v2167, %v2168
      %v2170 = vsel %vm1449, %v1585, 0.0
      %v2171 = vadd.f32 %v2169, %v2170
      %v2172 = vsel %vm1449, %v1588, 0.0
      %v2173 = vadd.f32 %v2171, %v2172
      %v2174 = vsel %vm1449, %v1593, 0.0
      %v2175 = vadd.f32 %v2173, %v2174
      %v2176 = vsel %vm1449, %v1596, 0.0
      %v2177 = vadd.f32 %v2175, %v2176
      %v2178 = vsel %vm1449, %v1601, 0.0
      %v2179 = vadd.f32 %v2177, %v2178
      %v2180 = vsel %vm1449, %v1604, 0.0
      %v2181 = vadd.f32 %v2179, %v2180
      %v2182 = vsel %vm1449, %v1609, 0.0
      %v2183 = vadd.f32 %v2181, %v2182
      %v2184 = vsel %vm1449, %v1612, 0.0
      %v2185 = vadd.f32 %v2183, %v2184
      %v2186 = vsel %vm1449, %v1617, 0.0
      %v2187 = vadd.f32 %v2185, %v2186
      %v2188 = vsel %vm1449, %v1620, 0.0
      %v2189 = vadd.f32 %v2187, %v2188
      %v2190 = vsel %vm1449, %v1625, 0.0
      %v2191 = vadd.f32 %v2189, %v2190
      %v2192 = vsel %vm1449, %v1628, 0.0
      %v2193 = vadd.f32 %v2191, %v2192
      %v2194 = vsel %vm1449, %v1633, 0.0
      %v2195 = vadd.f32 %v2193, %v2194
      %v2196 = vsel %vm1449, %v1636, 0.0
      %v2197 = vadd.f32 %v2195, %v2196
      %v2198 = vsel %vm1449, %v1641, 0.0
      %v2199 = vadd.f32 %v2197, %v2198
      %v2200 = vsel %vm1449, %v1644, 0.0
      %v2201 = vadd.f32 %v2199, %v2200
      %v2202 = vsel %vm1449, %v1649, 0.0
      %v2203 = vadd.f32 %v2201, %v2202
      %v2204 = vsel %vm1449, %v1652, 0.0
      %v2205 = vadd.f32 %v2203, %v2204
      %v2206 = vsel %vm1449, %v1657, 0.0
      %v2207 = vadd.f32 %v2205, %v2206
      %v2208 = vsel %vm1449, %v1660, 0.0
      %v2209 = vadd.f32 %v2207, %v2208
      %v2210 = vrot.slane %v2209, 4
      %v2211 = vadd.f32 %v2209, %v2210
      %v2212 = vrot.slane %v2211, 2
      %v2213 = vadd.f32 %v2211, %v2212
      %v2214 = vrot.slane %v2213, 1
      %v2215 = vadd.f32 %v2213, %v2214
      %v2216 = vadd.f32 %v2146, %v2215
      %v2217 = vsel %vm1449, %v1750, 0.0
      %v2218 = vsel %vm1449, %v1753, 0.0
      %v2219 = vadd.f32 %v2217, %v2218
      %v2220 = vsel %vm1449, %v1758, 0.0
      %v2221 = vadd.f32 %v2219, %v2220
      %v2222 = vsel %vm1449, %v1761, 0.0
      %v2223 = vadd.f32 %v2221, %v2222
      %v2224 = vsel %vm1449, %v1766, 0.0
      %v2225 = vadd.f32 %v2223, %v2224
      %v2226 = vsel %vm1449, %v1769, 0.0
      %v2227 = vadd.f32 %v2225, %v2226
      %v2228 = vsel %vm1449, %v1774, 0.0
      %v2229 = vadd.f32 %v2227, %v2228
      %v2230 = vsel %vm1449, %v1777, 0.0
      %v2231 = vadd.f32 %v2229, %v2230
      %v2232 = vsel %vm1449, %v1782, 0.0
      %v2233 = vadd.f32 %v2231, %v2232
      %v2234 = vsel %vm1449, %v1785, 0.0
      %v2235 = vadd.f32 %v2233, %v2234
      %v2236 = vsel %vm1449, %v1790, 0.0
      %v2237 = vadd.f32 %v2235, %v2236
      %v2238 = vsel %vm1449, %v1793, 0.0
      %v2239 = vadd.f32 %v2237, %v2238
      %v2240 = vsel %vm1449, %v1798, 0.0
      %v2241 = vadd.f32 %v2239, %v2240
      %v2242 = vsel %vm1449, %v1801, 0.0
      %v2243 = vadd.f32 %v2241, %v2242
      %v2244 = vsel %vm1449, %v1806, 0.0
      %v2245 = vadd.f32 %v2243, %v2244
      %v2246 = vsel %vm1449, %v1809, 0.0
      %v2247 = vadd.f32 %v2245, %v2246
      %v2248 = vsel %vm1449, %v1814, 0.0
      %v2249 = vadd.f32 %v2247, %v2248
      %v2250 = vsel %vm1449, %v1817, 0.0
      %v2251 = vadd.f32 %v2249, %v2250
      %v2252 = vsel %vm1449, %v1822, 0.0
      %v2253 = vadd.f32 %v2251, %v2252
      %v2254 = vsel %vm1449, %v1825, 0.0
      %v2255 = vadd.f32 %v2253, %v2254
      %v2256 = vsel %vm1449, %v1830, 0.0
      %v2257 = vadd.f32 %v2255, %v2256
      %v2258 = vsel %vm1449, %v1833, 0.0
      %v2259 = vadd.f32 %v2257, %v2258
      %v2260 = vsel %vm1449, %v1838, 0.0
      %v2261 = vadd.f32 %v2259, %v2260
      %v2262 = vsel %vm1449, %v1841, 0.0
      %v2263 = vadd.f32 %v2261, %v2262
      %v2264 = vsel %vm1449, %v1846, 0.0
      %v2265 = vadd.f32 %v2263, %v2264
      %v2266 = vsel %vm1449, %v1849, 0.0
      %v2267 = vadd.f32 %v2265, %v2266
      %v2268 = vsel %vm1449, %v1854, 0.0
      %v2269 = vadd.f32 %v2267, %v2268
      %v2270 = vsel %vm1449, %v1857, 0.0
      %v2271 = vadd.f32 %v2269, %v2270
      %v2272 = vsel %vm1449, %v1862, 0.0
      %v2273 = vadd.f32 %v2271, %v2272
      %v2274 = vsel %vm1449, %v1865, 0.0
      %v2275 = vadd.f32 %v2273, %v2274
      %v2276 = vsel %vm1449, %v1870, 0.0
      %v2277 = vadd.f32 %v2275, %v2276
      %v2278 = vsel %vm1449, %v1873, 0.0
      %v2279 = vadd.f32 %v2277, %v2278
      %v2280 = vrot.slane %v2279, 4
      %v2281 = vadd.f32 %v2279, %v2280
      %v2282 = vrot.slane %v2281, 2
      %v2283 = vadd.f32 %v2281, %v2282
      %v2284 = vrot.slane %v2283, 1
      %v2285 = vadd.f32 %v2283, %v2284
      %v2286 = vadd.f32 %v2216, %v2285
      %v2287 = vsel %vm1449, %v1952, 0.0
      %v2288 = vsel %vm1449, %v1955, 0.0
      %v2289 = vadd.f32 %v2287, %v2288
      %v2290 = vsel %vm1449, %v1960, 0.0
      %v2291 = vadd.f32 %v2289, %v2290
      %v2292 = vsel %vm1449, %v1963, 0.0
      %v2293 = vadd.f32 %v2291, %v2292
      %v2294 = vsel %vm1449, %v1968, 0.0
      %v2295 = vadd.f32 %v2293, %v2294
      %v2296 = vsel %vm1449, %v1971, 0.0
      %v2297 = vadd.f32 %v2295, %v2296
      %v2298 = vsel %vm1449, %v1976, 0.0
      %v2299 = vadd.f32 %v2297, %v2298
      %v2300 = vsel %vm1449, %v1979, 0.0
      %v2301 = vadd.f32 %v2299, %v2300
      %v2302 = vsel %vm1449, %v1984, 0.0
      %v2303 = vadd.f32 %v2301, %v2302
      %v2304 = vsel %vm1449, %v1987, 0.0
      %v2305 = vadd.f32 %v2303, %v2304
      %v2306 = vsel %vm1449, %v1992, 0.0
      %v2307 = vadd.f32 %v2305, %v2306
      %v2308 = vsel %vm1449, %v1995, 0.0
      %v2309 = vadd.f32 %v2307, %v2308
      %v2310 = vsel %vm1449, %v2000, 0.0
      %v2311 = vadd.f32 %v2309, %v2310
      %v2312 = vsel %vm1449, %v2003, 0.0
      %v2313 = vadd.f32 %v2311, %v2312
      %v2314 = vsel %vm1449, %v2008, 0.0
      %v2315 = vadd.f32 %v2313, %v2314
      %v2316 = vsel %vm1449, %v2011, 0.0
      %v2317 = vadd.f32 %v2315, %v2316
      %v2318 = vsel %vm1449, %v2016, 0.0
      %v2319 = vadd.f32 %v2317, %v2318
      %v2320 = vsel %vm1449, %v2019, 0.0
      %v2321 = vadd.f32 %v2319, %v2320
      %v2322 = vsel %vm1449, %v2024, 0.0
      %v2323 = vadd.f32 %v2321, %v2322
      %v2324 = vsel %vm1449, %v2027, 0.0
      %v2325 = vadd.f32 %v2323, %v2324
      %v2326 = vsel %vm1449, %v2032, 0.0
      %v2327 = vadd.f32 %v2325, %v2326
      %v2328 = vsel %vm1449, %v2035, 0.0
      %v2329 = vadd.f32 %v2327, %v2328
      %v2330 = vsel %vm1449, %v2040, 0.0
      %v2331 = vadd.f32 %v2329, %v2330
      %v2332 = vsel %vm1449, %v2043, 0.0
      %v2333 = vadd.f32 %v2331, %v2332
      %v2334 = vsel %vm1449, %v2048, 0.0
      %v2335 = vadd.f32 %v2333, %v2334
      %v2336 = vsel %vm1449, %v2051, 0.0
      %v2337 = vadd.f32 %v2335, %v2336
      %v2338 = vsel %vm1449, %v2056, 0.0
      %v2339 = vadd.f32 %v2337, %v2338
      %v2340 = vsel %vm1449, %v2059, 0.0
      %v2341 = vadd.f32 %v2339, %v2340
      %v2342 = vsel %vm1449, %v2064, 0.0
      %v2343 = vadd.f32 %v2341, %v2342
      %v2344 = vsel %vm1449, %v2067, 0.0
      %v2345 = vadd.f32 %v2343, %v2344
      %v2346 = vsel %vm1449, %v2072, 0.0
      %v2347 = vadd.f32 %v2345, %v2346
      %v2348 = vsel %vm1449, %v2075, 0.0
      %v2349 = vadd.f32 %v2347, %v2348
      %v2350 = vrot.slane %v2349, 4
      %v2351 = vadd.f32 %v2349, %v2350
      %v2352 = vrot.slane %v2351, 2
      %v2353 = vadd.f32 %v2351, %v2352
      %v2354 = vrot.slane %v2353, 1
      %v2355 = vadd.f32 %v2353, %v2354
      %v2356 = vadd.f32 %v2286, %v2355
      %v2357 = vmul.f32 %v1258, %v1258
      %v2358 = vmul.f32 %v1261, %v1261
      %v2359 = vmul.f32 %v1266, %v1266
      %v2360 = vmul.f32 %v1269, %v1269
      %v2361 = vmul.f32 %v1274, %v1274
      %v2362 = vmul.f32 %v1277, %v1277
      %v2363 = vmul.f32 %v1282, %v1282
      %v2364 = vmul.f32 %v1285, %v1285
      %v2365 = vmul.f32 %v1290, %v1290
      %v2366 = vmul.f32 %v1293, %v1293
      %v2367 = vmul.f32 %v1298, %v1298
      %v2368 = vmul.f32 %v1301, %v1301
      %v2369 = vmul.f32 %v1306, %v1306
      %v2370 = vmul.f32 %v1309, %v1309
      %v2371 = vmul.f32 %v1314, %v1314
      %v2372 = vmul.f32 %v1317, %v1317
      %v2373 = vmul.f32 %v1322, %v1322
      %v2374 = vmul.f32 %v1325, %v1325
      %v2375 = vmul.f32 %v1330, %v1330
      %v2376 = vmul.f32 %v1333, %v1333
      %v2377 = vmul.f32 %v1338, %v1338
      %v2378 = vmul.f32 %v1341, %v1341
      %v2379 = vmul.f32 %v1346, %v1346
      %v2380 = vmul.f32 %v1349, %v1349
      %v2381 = vmul.f32 %v1354, %v1354
      %v2382 = vmul.f32 %v1357, %v1357
      %v2383 = vmul.f32 %v1362, %v1362
      %v2384 = vmul.f32 %v1365, %v1365
      %v2385 = vmul.f32 %v1370, %v1370
      %v2386 = vmul.f32 %v1373, %v1373
      %v2387 = vmul.f32 %v1378, %v1378
      %v2388 = vmul.f32 %v1381, %v1381
      %v2389 = vsel %vm1449, %v2357, 0.0
      %v2390 = vsel %vm1449, %v2358, 0.0
      %v2391 = vadd.f32 %v2389, %v2390
      %v2392 = vsel %vm1449, %v2359, 0.0
      %v2393 = vadd.f32 %v2391, %v2392
      %v2394 = vsel %vm1449, %v2360, 0.0
      %v2395 = vadd.f32 %v2393, %v2394
      %v2396 = vsel %vm1449, %v2361, 0.0
      %v2397 = vadd.f32 %v2395, %v2396
      %v2398 = vsel %vm1449, %v2362, 0.0
      %v2399 = vadd.f32 %v2397, %v2398
      %v2400 = vsel %vm1449, %v2363, 0.0
      %v2401 = vadd.f32 %v2399, %v2400
      %v2402 = vsel %vm1449, %v2364, 0.0
      %v2403 = vadd.f32 %v2401, %v2402
      %v2404 = vsel %vm1449, %v2365, 0.0
      %v2405 = vadd.f32 %v2403, %v2404
      %v2406 = vsel %vm1449, %v2366, 0.0
      %v2407 = vadd.f32 %v2405, %v2406
      %v2408 = vsel %vm1449, %v2367, 0.0
      %v2409 = vadd.f32 %v2407, %v2408
      %v2410 = vsel %vm1449, %v2368, 0.0
      %v2411 = vadd.f32 %v2409, %v2410
      %v2412 = vsel %vm1449, %v2369, 0.0
      %v2413 = vadd.f32 %v2411, %v2412
      %v2414 = vsel %vm1449, %v2370, 0.0
      %v2415 = vadd.f32 %v2413, %v2414
      %v2416 = vsel %vm1449, %v2371, 0.0
      %v2417 = vadd.f32 %v2415, %v2416
      %v2418 = vsel %vm1449, %v2372, 0.0
      %v2419 = vadd.f32 %v2417, %v2418
      %v2420 = vsel %vm1449, %v2373, 0.0
      %v2421 = vadd.f32 %v2419, %v2420
      %v2422 = vsel %vm1449, %v2374, 0.0
      %v2423 = vadd.f32 %v2421, %v2422
      %v2424 = vsel %vm1449, %v2375, 0.0
      %v2425 = vadd.f32 %v2423, %v2424
      %v2426 = vsel %vm1449, %v2376, 0.0
      %v2427 = vadd.f32 %v2425, %v2426
      %v2428 = vsel %vm1449, %v2377, 0.0
      %v2429 = vadd.f32 %v2427, %v2428
      %v2430 = vsel %vm1449, %v2378, 0.0
      %v2431 = vadd.f32 %v2429, %v2430
      %v2432 = vsel %vm1449, %v2379, 0.0
      %v2433 = vadd.f32 %v2431, %v2432
      %v2434 = vsel %vm1449, %v2380, 0.0
      %v2435 = vadd.f32 %v2433, %v2434
      %v2436 = vsel %vm1449, %v2381, 0.0
      %v2437 = vadd.f32 %v2435, %v2436
      %v2438 = vsel %vm1449, %v2382, 0.0
      %v2439 = vadd.f32 %v2437, %v2438
      %v2440 = vsel %vm1449, %v2383, 0.0
      %v2441 = vadd.f32 %v2439, %v2440
      %v2442 = vsel %vm1449, %v2384, 0.0
      %v2443 = vadd.f32 %v2441, %v2442
      %v2444 = vsel %vm1449, %v2385, 0.0
      %v2445 = vadd.f32 %v2443, %v2444
      %v2446 = vsel %vm1449, %v2386, 0.0
      %v2447 = vadd.f32 %v2445, %v2446
      %v2448 = vsel %vm1449, %v2387, 0.0
      %v2449 = vadd.f32 %v2447, %v2448
      %v2450 = vsel %vm1449, %v2388, 0.0
      %v2451 = vadd.f32 %v2449, %v2450
      %v2452 = vrot.slane %v2451, 4
      %v2453 = vadd.f32 %v2451, %v2452
      %v2454 = vrot.slane %v2453, 2
      %v2455 = vadd.f32 %v2453, %v2454
      %v2456 = vrot.slane %v2455, 1
      %v2457 = vadd.f32 %v2455, %v2456
      %v2458 = vmul.f32 %v1537, %v1537
      %v2459 = vmul.f32 %v1540, %v1540
      %v2460 = vmul.f32 %v1545, %v1545
      %v2461 = vmul.f32 %v1548, %v1548
      %v2462 = vmul.f32 %v1553, %v1553
      %v2463 = vmul.f32 %v1556, %v1556
      %v2464 = vmul.f32 %v1561, %v1561
      %v2465 = vmul.f32 %v1564, %v1564
      %v2466 = vmul.f32 %v1569, %v1569
      %v2467 = vmul.f32 %v1572, %v1572
      %v2468 = vmul.f32 %v1577, %v1577
      %v2469 = vmul.f32 %v1580, %v1580
      %v2470 = vmul.f32 %v1585, %v1585
      %v2471 = vmul.f32 %v1588, %v1588
      %v2472 = vmul.f32 %v1593, %v1593
      %v2473 = vmul.f32 %v1596, %v1596
      %v2474 = vmul.f32 %v1601, %v1601
      %v2475 = vmul.f32 %v1604, %v1604
      %v2476 = vmul.f32 %v1609, %v1609
      %v2477 = vmul.f32 %v1612, %v1612
      %v2478 = vmul.f32 %v1617, %v1617
      %v2479 = vmul.f32 %v1620, %v1620
      %v2480 = vmul.f32 %v1625, %v1625
      %v2481 = vmul.f32 %v1628, %v1628
      %v2482 = vmul.f32 %v1633, %v1633
      %v2483 = vmul.f32 %v1636, %v1636
      %v2484 = vmul.f32 %v1641, %v1641
      %v2485 = vmul.f32 %v1644, %v1644
      %v2486 = vmul.f32 %v1649, %v1649
      %v2487 = vmul.f32 %v1652, %v1652
      %v2488 = vmul.f32 %v1657, %v1657
      %v2489 = vmul.f32 %v1660, %v1660
      %v2490 = vsel %vm1449, %v2458, 0.0
      %v2491 = vsel %vm1449, %v2459, 0.0
      %v2492 = vadd.f32 %v2490, %v2491
      %v2493 = vsel %vm1449, %v2460, 0.0
      %v2494 = vadd.f32 %v2492, %v2493
      %v2495 = vsel %vm1449, %v2461, 0.0
      %v2496 = vadd.f32 %v2494, %v2495
      %v2497 = vsel %vm1449, %v2462, 0.0
      %v2498 = vadd.f32 %v2496, %v2497
      %v2499 = vsel %vm1449, %v2463, 0.0
      %v2500 = vadd.f32 %v2498, %v2499
      %v2501 = vsel %vm1449, %v2464, 0.0
      %v2502 = vadd.f32 %v2500, %v2501
      %v2503 = vsel %vm1449, %v2465, 0.0
      %v2504 = vadd.f32 %v2502, %v2503
      %v2505 = vsel %vm1449, %v2466, 0.0
      %v2506 = vadd.f32 %v2504, %v2505
      %v2507 = vsel %vm1449, %v2467, 0.0
      %v2508 = vadd.f32 %v2506, %v2507
      %v2509 = vsel %vm1449, %v2468, 0.0
      %v2510 = vadd.f32 %v2508, %v2509
      %v2511 = vsel %vm1449, %v2469, 0.0
      %v2512 = vadd.f32 %v2510, %v2511
      %v2513 = vsel %vm1449, %v2470, 0.0
      %v2514 = vadd.f32 %v2512, %v2513
      %v2515 = vsel %vm1449, %v2471, 0.0
      %v2516 = vadd.f32 %v2514, %v2515
      %v2517 = vsel %vm1449, %v2472, 0.0
      %v2518 = vadd.f32 %v2516, %v2517
      %v2519 = vsel %vm1449, %v2473, 0.0
      %v2520 = vadd.f32 %v2518, %v2519
      %v2521 = vsel %vm1449, %v2474, 0.0
      %v2522 = vadd.f32 %v2520, %v2521
      %v2523 = vsel %vm1449, %v2475, 0.0
      %v2524 = vadd.f32 %v2522, %v2523
      %v2525 = vsel %vm1449, %v2476, 0.0
      %v2526 = vadd.f32 %v2524, %v2525
      %v2527 = vsel %vm1449, %v2477, 0.0
      %v2528 = vadd.f32 %v2526, %v2527
      %v2529 = vsel %vm1449, %v2478, 0.0
      %v2530 = vadd.f32 %v2528, %v2529
      %v2531 = vsel %vm1449, %v2479, 0.0
      %v2532 = vadd.f32 %v2530, %v2531
      %v2533 = vsel %vm1449, %v2480, 0.0
      %v2534 = vadd.f32 %v2532, %v2533
      %v2535 = vsel %vm1449, %v2481, 0.0
      %v2536 = vadd.f32 %v2534, %v2535
      %v2537 = vsel %vm1449, %v2482, 0.0
      %v2538 = vadd.f32 %v2536, %v2537
      %v2539 = vsel %vm1449, %v2483, 0.0
      %v2540 = vadd.f32 %v2538, %v2539
      %v2541 = vsel %vm1449, %v2484, 0.0
      %v2542 = vadd.f32 %v2540, %v2541
      %v2543 = vsel %vm1449, %v2485, 0.0
      %v2544 = vadd.f32 %v2542, %v2543
      %v2545 = vsel %vm1449, %v2486, 0.0
      %v2546 = vadd.f32 %v2544, %v2545
      %v2547 = vsel %vm1449, %v2487, 0.0
      %v2548 = vadd.f32 %v2546, %v2547
      %v2549 = vsel %vm1449, %v2488, 0.0
      %v2550 = vadd.f32 %v2548, %v2549
      %v2551 = vsel %vm1449, %v2489, 0.0
      %v2552 = vadd.f32 %v2550, %v2551
      %v2553 = vrot.slane %v2552, 4
      %v2554 = vadd.f32 %v2552, %v2553
      %v2555 = vrot.slane %v2554, 2
      %v2556 = vadd.f32 %v2554, %v2555
      %v2557 = vrot.slane %v2556, 1
      %v2558 = vadd.f32 %v2556, %v2557
      %v2559 = vadd.f32 %v2457, %v2558
      %v2560 = vmul.f32 %v1750, %v1750
      %v2561 = vmul.f32 %v1753, %v1753
      %v2562 = vmul.f32 %v1758, %v1758
      %v2563 = vmul.f32 %v1761, %v1761
      %v2564 = vmul.f32 %v1766, %v1766
      %v2565 = vmul.f32 %v1769, %v1769
      %v2566 = vmul.f32 %v1774, %v1774
      %v2567 = vmul.f32 %v1777, %v1777
      %v2568 = vmul.f32 %v1782, %v1782
      %v2569 = vmul.f32 %v1785, %v1785
      %v2570 = vmul.f32 %v1790, %v1790
      %v2571 = vmul.f32 %v1793, %v1793
      %v2572 = vmul.f32 %v1798, %v1798
      %v2573 = vmul.f32 %v1801, %v1801
      %v2574 = vmul.f32 %v1806, %v1806
      %v2575 = vmul.f32 %v1809, %v1809
      %v2576 = vmul.f32 %v1814, %v1814
      %v2577 = vmul.f32 %v1817, %v1817
      %v2578 = vmul.f32 %v1822, %v1822
      %v2579 = vmul.f32 %v1825, %v1825
      %v2580 = vmul.f32 %v1830, %v1830
      %v2581 = vmul.f32 %v1833, %v1833
      %v2582 = vmul.f32 %v1838, %v1838
      %v2583 = vmul.f32 %v1841, %v1841
      %v2584 = vmul.f32 %v1846, %v1846
      %v2585 = vmul.f32 %v1849, %v1849
      %v2586 = vmul.f32 %v1854, %v1854
      %v2587 = vmul.f32 %v1857, %v1857
      %v2588 = vmul.f32 %v1862, %v1862
      %v2589 = vmul.f32 %v1865, %v1865
      %v2590 = vmul.f32 %v1870, %v1870
      %v2591 = vmul.f32 %v1873, %v1873
      %v2592 = vsel %vm1449, %v2560, 0.0
      %v2593 = vsel %vm1449, %v2561, 0.0
      %v2594 = vadd.f32 %v2592, %v2593
      %v2595 = vsel %vm1449, %v2562, 0.0
      %v2596 = vadd.f32 %v2594, %v2595
      %v2597 = vsel %vm1449, %v2563, 0.0
      %v2598 = vadd.f32 %v2596, %v2597
      %v2599 = vsel %vm1449, %v2564, 0.0
      %v2600 = vadd.f32 %v2598, %v2599
      %v2601 = vsel %vm1449, %v2565, 0.0
      %v2602 = vadd.f32 %v2600, %v2601
      %v2603 = vsel %vm1449, %v2566, 0.0
      %v2604 = vadd.f32 %v2602, %v2603
      %v2605 = vsel %vm1449, %v2567, 0.0
      %v2606 = vadd.f32 %v2604, %v2605
      %v2607 = vsel %vm1449, %v2568, 0.0
      %v2608 = vadd.f32 %v2606, %v2607
      %v2609 = vsel %vm1449, %v2569, 0.0
      %v2610 = vadd.f32 %v2608, %v2609
      %v2611 = vsel %vm1449, %v2570, 0.0
      %v2612 = vadd.f32 %v2610, %v2611
      %v2613 = vsel %vm1449, %v2571, 0.0
      %v2614 = vadd.f32 %v2612, %v2613
      %v2615 = vsel %vm1449, %v2572, 0.0
      %v2616 = vadd.f32 %v2614, %v2615
      %v2617 = vsel %vm1449, %v2573, 0.0
      %v2618 = vadd.f32 %v2616, %v2617
      %v2619 = vsel %vm1449, %v2574, 0.0
      %v2620 = vadd.f32 %v2618, %v2619
      %v2621 = vsel %vm1449, %v2575, 0.0
      %v2622 = vadd.f32 %v2620, %v2621
      %v2623 = vsel %vm1449, %v2576, 0.0
      %v2624 = vadd.f32 %v2622, %v2623
      %v2625 = vsel %vm1449, %v2577, 0.0
      %v2626 = vadd.f32 %v2624, %v2625
      %v2627 = vsel %vm1449, %v2578, 0.0
      %v2628 = vadd.f32 %v2626, %v2627
      %v2629 = vsel %vm1449, %v2579, 0.0
      %v2630 = vadd.f32 %v2628, %v2629
      %v2631 = vsel %vm1449, %v2580, 0.0
      %v2632 = vadd.f32 %v2630, %v2631
      %v2633 = vsel %vm1449, %v2581, 0.0
      %v2634 = vadd.f32 %v2632, %v2633
      %v2635 = vsel %vm1449, %v2582, 0.0
      %v2636 = vadd.f32 %v2634, %v2635
      %v2637 = vsel %vm1449, %v2583, 0.0
      %v2638 = vadd.f32 %v2636, %v2637
      %v2639 = vsel %vm1449, %v2584, 0.0
      %v2640 = vadd.f32 %v2638, %v2639
      %v2641 = vsel %vm1449, %v2585, 0.0
      %v2642 = vadd.f32 %v2640, %v2641
      %v2643 = vsel %vm1449, %v2586, 0.0
      %v2644 = vadd.f32 %v2642, %v2643
      %v2645 = vsel %vm1449, %v2587, 0.0
      %v2646 = vadd.f32 %v2644, %v2645
      %v2647 = vsel %vm1449, %v2588, 0.0
      %v2648 = vadd.f32 %v2646, %v2647
      %v2649 = vsel %vm1449, %v2589, 0.0
      %v2650 = vadd.f32 %v2648, %v2649
      %v2651 = vsel %vm1449, %v2590, 0.0
      %v2652 = vadd.f32 %v2650, %v2651
      %v2653 = vsel %vm1449, %v2591, 0.0
      %v2654 = vadd.f32 %v2652, %v2653
      %v2655 = vrot.slane %v2654, 4
      %v2656 = vadd.f32 %v2654, %v2655
      %v2657 = vrot.slane %v2656, 2
      %v2658 = vadd.f32 %v2656, %v2657
      %v2659 = vrot.slane %v2658, 1
      %v2660 = vadd.f32 %v2658, %v2659
      %v2661 = vadd.f32 %v2559, %v2660
      %v2662 = vmul.f32 %v1952, %v1952
      %v2663 = vmul.f32 %v1955, %v1955
      %v2664 = vmul.f32 %v1960, %v1960
      %v2665 = vmul.f32 %v1963, %v1963
      %v2666 = vmul.f32 %v1968, %v1968
      %v2667 = vmul.f32 %v1971, %v1971
      %v2668 = vmul.f32 %v1976, %v1976
      %v2669 = vmul.f32 %v1979, %v1979
      %v2670 = vmul.f32 %v1984, %v1984
      %v2671 = vmul.f32 %v1987, %v1987
      %v2672 = vmul.f32 %v1992, %v1992
      %v2673 = vmul.f32 %v1995, %v1995
      %v2674 = vmul.f32 %v2000, %v2000
      %v2675 = vmul.f32 %v2003, %v2003
      %v2676 = vmul.f32 %v2008, %v2008
      %v2677 = vmul.f32 %v2011, %v2011
      %v2678 = vmul.f32 %v2016, %v2016
      %v2679 = vmul.f32 %v2019, %v2019
      %v2680 = vmul.f32 %v2024, %v2024
      %v2681 = vmul.f32 %v2027, %v2027
      %v2682 = vmul.f32 %v2032, %v2032
      %v2683 = vmul.f32 %v2035, %v2035
      %v2684 = vmul.f32 %v2040, %v2040
      %v2685 = vmul.f32 %v2043, %v2043
      %v2686 = vmul.f32 %v2048, %v2048
      %v2687 = vmul.f32 %v2051, %v2051
      %v2688 = vmul.f32 %v2056, %v2056
      %v2689 = vmul.f32 %v2059, %v2059
      %v2690 = vmul.f32 %v2064, %v2064
      %v2691 = vmul.f32 %v2067, %v2067
      %v2692 = vmul.f32 %v2072, %v2072
      %v2693 = vmul.f32 %v2075, %v2075
      %v2694 = vsel %vm1449, %v2662, 0.0
      %v2695 = vsel %vm1449, %v2663, 0.0
      %v2696 = vadd.f32 %v2694, %v2695
      %v2697 = vsel %vm1449, %v2664, 0.0
      %v2698 = vadd.f32 %v2696, %v2697
      %v2699 = vsel %vm1449, %v2665, 0.0
      %v2700 = vadd.f32 %v2698, %v2699
      %v2701 = vsel %vm1449, %v2666, 0.0
      %v2702 = vadd.f32 %v2700, %v2701
      %v2703 = vsel %vm1449, %v2667, 0.0
      %v2704 = vadd.f32 %v2702, %v2703
      %v2705 = vsel %vm1449, %v2668, 0.0
      %v2706 = vadd.f32 %v2704, %v2705
      %v2707 = vsel %vm1449, %v2669, 0.0
      %v2708 = vadd.f32 %v2706, %v2707
      %v2709 = vsel %vm1449, %v2670, 0.0
      %v2710 = vadd.f32 %v2708, %v2709
      %v2711 = vsel %vm1449, %v2671, 0.0
      %v2712 = vadd.f32 %v2710, %v2711
      %v2713 = vsel %vm1449, %v2672, 0.0
      %v2714 = vadd.f32 %v2712, %v2713
      %v2715 = vsel %vm1449, %v2673, 0.0
      %v2716 = vadd.f32 %v2714, %v2715
      %v2717 = vsel %vm1449, %v2674, 0.0
      %v2718 = vadd.f32 %v2716, %v2717
      %v2719 = vsel %vm1449, %v2675, 0.0
      %v2720 = vadd.f32 %v2718, %v2719
      %v2721 = vsel %vm1449, %v2676, 0.0
      %v2722 = vadd.f32 %v2720, %v2721
      %v2723 = vsel %vm1449, %v2677, 0.0
      %v2724 = vadd.f32 %v2722, %v2723
      %v2725 = vsel %vm1449, %v2678, 0.0
      %v2726 = vadd.f32 %v2724, %v2725
      %v2727 = vsel %vm1449, %v2679, 0.0
      %v2728 = vadd.f32 %v2726, %v2727
      %v2729 = vsel %vm1449, %v2680, 0.0
      %v2730 = vadd.f32 %v2728, %v2729
      %v2731 = vsel %vm1449, %v2681, 0.0
      %v2732 = vadd.f32 %v2730, %v2731
      %v2733 = vsel %vm1449, %v2682, 0.0
      %v2734 = vadd.f32 %v2732, %v2733
      %v2735 = vsel %vm1449, %v2683, 0.0
      %v2736 = vadd.f32 %v2734, %v2735
      %v2737 = vsel %vm1449, %v2684, 0.0
      %v2738 = vadd.f32 %v2736, %v2737
      %v2739 = vsel %vm1449, %v2685, 0.0
      %v2740 = vadd.f32 %v2738, %v2739
      %v2741 = vsel %vm1449, %v2686, 0.0
      %v2742 = vadd.f32 %v2740, %v2741
      %v2743 = vsel %vm1449, %v2687, 0.0
      %v2744 = vadd.f32 %v2742, %v2743
      %v2745 = vsel %vm1449, %v2688, 0.0
      %v2746 = vadd.f32 %v2744, %v2745
      %v2747 = vsel %vm1449, %v2689, 0.0
      %v2748 = vadd.f32 %v2746, %v2747
      %v2749 = vsel %vm1449, %v2690, 0.0
      %v2750 = vadd.f32 %v2748, %v2749
      %v2751 = vsel %vm1449, %v2691, 0.0
      %v2752 = vadd.f32 %v2750, %v2751
      %v2753 = vsel %vm1449, %v2692, 0.0
      %v2754 = vadd.f32 %v2752, %v2753
      %v2755 = vsel %vm1449, %v2693, 0.0
      %v2756 = vadd.f32 %v2754, %v2755
      %v2757 = vrot.slane %v2756, 4
      %v2758 = vadd.f32 %v2756, %v2757
      %v2759 = vrot.slane %v2758, 2
      %v2760 = vadd.f32 %v2758, %v2759
      %v2761 = vrot.slane %v2760, 1
      %v2762 = vadd.f32 %v2760, %v2761
      %v2763 = vadd.f32 %v2661, %v2762
      %v2764 = vmul.f32 %v2356, 0.0009765625
      %v2765 = vmul.f32 %v2763, 0.0009765625
      %v2766 = vmul.f32 %v2764, %v2764
      %v2767 = vsub.f32 %v2765, %v2766
      %v2768 = vmax.f32 %v2767, 0.0
      %v2769 = vld [vmem:[%s424] sm:$0x1]
      %v2770 = vadd.f32 %v2768, 1e-05
      %v2771 = vrsqrt.pop %v2770
      %v2772 = vmul.f32 %v2769, %v2771
      %v2773 = vld [vmem:[%s427] sm:$0x1]
      %v2774 = vmul.f32 %v2764, %v2772
      %v2775 = vsub.f32 %v2773, %v2774
      %v2777 = vlaneseq
      %v2778 = vshrl.u32 %v2777, 7
      %v2779 = vsub.s32 0, %v2778
      %v2780 = vrot.slane %v2772, %v2779
      %v2782 = vmul.f32 %v1258, %v2780
      %v2783 = vmul.f32 %v1261, %v2780
      %v2784 = vmul.f32 %v1266, %v2780
      %v2785 = vmul.f32 %v1269, %v2780
      %v2786 = vmul.f32 %v1274, %v2780
      %v2787 = vmul.f32 %v1277, %v2780
      %v2788 = vmul.f32 %v1282, %v2780
      %v2789 = vmul.f32 %v1285, %v2780
      %v2790 = vmul.f32 %v1290, %v2780
      %v2791 = vmul.f32 %v1293, %v2780
      %v2792 = vmul.f32 %v1298, %v2780
      %v2793 = vmul.f32 %v1301, %v2780
      %v2794 = vmul.f32 %v1306, %v2780
      %v2795 = vmul.f32 %v1309, %v2780
      %v2796 = vmul.f32 %v1314, %v2780
      %v2797 = vmul.f32 %v1317, %v2780
      %v2798 = vmul.f32 %v1322, %v2780
      %v2799 = vmul.f32 %v1325, %v2780
      %v2800 = vmul.f32 %v1330, %v2780
      %v2801 = vmul.f32 %v1333, %v2780
      %v2802 = vmul.f32 %v1338, %v2780
      %v2803 = vmul.f32 %v1341, %v2780
      %v2804 = vmul.f32 %v1346, %v2780
      %v2805 = vmul.f32 %v1349, %v2780
      %v2806 = vmul.f32 %v1354, %v2780
      %v2807 = vmul.f32 %v1357, %v2780
      %v2808 = vmul.f32 %v1362, %v2780
      %v2809 = vmul.f32 %v1365, %v2780
      %v2810 = vmul.f32 %v1370, %v2780
      %v2811 = vmul.f32 %v1373, %v2780
      %v2812 = vmul.f32 %v1378, %v2780
      %v2813 = vmul.f32 %v1381, %v2780
      %v2815 = vlaneseq
      %v2816 = vshrl.u32 %v2815, 7
      %v2817 = vsub.s32 0, %v2816
      %v2818 = vrot.slane %v2775, %v2817
      %v2820 = vadd.f32 %v2782, %v2818
      %v2821 = vadd.f32 %v2783, %v2818
      %v2822 = vadd.f32 %v2784, %v2818
      %v2823 = vadd.f32 %v2785, %v2818
      %v2824 = vadd.f32 %v2786, %v2818
      %v2825 = vadd.f32 %v2787, %v2818
      %v2826 = vadd.f32 %v2788, %v2818
      %v2827 = vadd.f32 %v2789, %v2818
      %v2828 = vadd.f32 %v2790, %v2818
      %v2829 = vadd.f32 %v2791, %v2818
      %v2830 = vadd.f32 %v2792, %v2818
      %v2831 = vadd.f32 %v2793, %v2818
      %v2832 = vadd.f32 %v2794, %v2818
      %v2833 = vadd.f32 %v2795, %v2818
      %v2834 = vadd.f32 %v2796, %v2818
      %v2835 = vadd.f32 %v2797, %v2818
      %v2836 = vadd.f32 %v2798, %v2818
      %v2837 = vadd.f32 %v2799, %v2818
      %v2838 = vadd.f32 %v2800, %v2818
      %v2839 = vadd.f32 %v2801, %v2818
      %v2840 = vadd.f32 %v2802, %v2818
      %v2841 = vadd.f32 %v2803, %v2818
      %v2842 = vadd.f32 %v2804, %v2818
      %v2843 = vadd.f32 %v2805, %v2818
      %v2844 = vadd.f32 %v2806, %v2818
      %v2845 = vadd.f32 %v2807, %v2818
      %v2846 = vadd.f32 %v2808, %v2818
      %v2847 = vadd.f32 %v2809, %v2818
      %v2848 = vadd.f32 %v2810, %v2818
      %v2849 = vadd.f32 %v2811, %v2818
      %v2850 = vadd.f32 %v2812, %v2818
      %v2851 = vadd.f32 %v2813, %v2818
      %v2852 = vpack.c.bf16 %v2821, %v2820
      %v2853 = vpack.c.bf16 %v2823, %v2822
      %v2854 = vpack.c.bf16 %v2825, %v2824
      %v2855 = vpack.c.bf16 %v2827, %v2826
      %v2856 = vpack.c.bf16 %v2829, %v2828
      %v2857 = vpack.c.bf16 %v2831, %v2830
      %v2858 = vpack.c.bf16 %v2833, %v2832
      %v2859 = vpack.c.bf16 %v2835, %v2834
      %v2860 = vpack.c.bf16 %v2837, %v2836
      %v2861 = vpack.c.bf16 %v2839, %v2838
      %v2862 = vpack.c.bf16 %v2841, %v2840
      %v2863 = vpack.c.bf16 %v2843, %v2842
      %v2864 = vpack.c.bf16 %v2845, %v2844
      %v2865 = vpack.c.bf16 %v2847, %v2846
      %v2866 = vpack.c.bf16 %v2849, %v2848
      %v2867 = vpack.c.bf16 %v2851, %v2850
      %v2884 = vunpack.c.l.b16 %v2852
      %v2885 = vunpack.c.h.b16 %v2852
      %v2886 = vunpack.c.l.b16 %v2853
      %v2887 = vunpack.c.h.b16 %v2853
      %v2888 = vunpack.c.l.b16 %v2854
      %v2889 = vunpack.c.h.b16 %v2854
      %v2890 = vunpack.c.l.b16 %v2855
      %v2891 = vunpack.c.h.b16 %v2855
      %v2892 = vunpack.c.l.b16 %v2856
      %v2893 = vunpack.c.h.b16 %v2856
      %v2894 = vunpack.c.l.b16 %v2857
      %v2895 = vunpack.c.h.b16 %v2857
      %v2896 = vunpack.c.l.b16 %v2858
      %v2897 = vunpack.c.h.b16 %v2858
      %v2898 = vunpack.c.l.b16 %v2859
      %v2899 = vunpack.c.h.b16 %v2859
      %v2900 = vunpack.c.l.b16 %v2860
      %v2901 = vunpack.c.h.b16 %v2860
      %v2902 = vunpack.c.l.b16 %v2861
      %v2903 = vunpack.c.h.b16 %v2861
      %v2904 = vunpack.c.l.b16 %v2862
      %v2905 = vunpack.c.h.b16 %v2862
      %v2906 = vunpack.c.l.b16 %v2863
      %v2907 = vunpack.c.h.b16 %v2863
      %v2908 = vunpack.c.l.b16 %v2864
      %v2909 = vunpack.c.h.b16 %v2864
      %v2910 = vunpack.c.l.b16 %v2865
      %v2911 = vunpack.c.h.b16 %v2865
      %v2912 = vunpack.c.l.b16 %v2866
      %v2913 = vunpack.c.h.b16 %v2866
      %v2914 = vunpack.c.l.b16 %v2867
      %v2915 = vunpack.c.h.b16 %v2867
      %v2916 = vpack.c.b16 %v2884, %v2884
      %v2917 = vpack.c.b16 %v2885, %v2885
      %v2918 = vpack.c.b16 %v2886, %v2886
      %v2919 = vpack.c.b16 %v2887, %v2887
      %v2920 = vpack.c.b16 %v2888, %v2888
      %v2921 = vpack.c.b16 %v2889, %v2889
      %v2922 = vpack.c.b16 %v2890, %v2890
      %v2923 = vpack.c.b16 %v2891, %v2891
      %v2924 = vpack.c.b16 %v2892, %v2892
      %v2925 = vpack.c.b16 %v2893, %v2893
      %v2926 = vpack.c.b16 %v2894, %v2894
      %v2927 = vpack.c.b16 %v2895, %v2895
      %v2928 = vpack.c.b16 %v2896, %v2896
      %v2929 = vpack.c.b16 %v2897, %v2897
      %v2930 = vpack.c.b16 %v2898, %v2898
      %v2931 = vpack.c.b16 %v2899, %v2899
      %v2932 = vpack.c.b16 %v2900, %v2900
      %v2933 = vpack.c.b16 %v2901, %v2901
      %v2934 = vpack.c.b16 %v2902, %v2902
      %v2935 = vpack.c.b16 %v2903, %v2903
      %v2936 = vpack.c.b16 %v2904, %v2904
      %v2937 = vpack.c.b16 %v2905, %v2905
      %v2938 = vpack.c.b16 %v2906, %v2906
      %v2939 = vpack.c.b16 %v2907, %v2907
      %v2940 = vpack.c.b16 %v2908, %v2908
      %v2941 = vpack.c.b16 %v2909, %v2909
      %v2942 = vpack.c.b16 %v2910, %v2910
      %v2943 = vpack.c.b16 %v2911, %v2911
      %v2944 = vpack.c.b16 %v2912, %v2912
      %v2945 = vpack.c.b16 %v2913, %v2913
      %v2946 = vpack.c.b16 %v2914, %v2914
      %v2947 = vpack.c.b16 %v2915, %v2915
      %vm2980 = vcmask 60416
      %2981 = vst.msk [vmem:[%s435] sm:$0xf] %vm2980, %v2916
      %2982 = vst.msk [vmem:[%s435 + $0x4] sm:$0xf] %vm2980, %v2917
      %2983 = vst.msk [vmem:[%s435 + $0x8] sm:$0xf] %vm2980, %v2918
      %2984 = vst.msk [vmem:[%s435 + $0xc] sm:$0xf] %vm2980, %v2919
      %2985 = vst.msk [vmem:[%s435 + $0x10] sm:$0xf] %vm2980, %v2920
      %2986 = vst.msk [vmem:[%s435 + $0x14] sm:$0xf] %vm2980, %v2921
      %2987 = vst.msk [vmem:[%s435 + $0x18] sm:$0xf] %vm2980, %v2922
      %2988 = vst.msk [vmem:[%s435 + $0x1c] sm:$0xf] %vm2980, %v2923
      %2989 = vst.msk [vmem:[%s435 + $0x20] sm:$0xf] %vm2980, %v2924
      %2990 = vst.msk [vmem:[%s435 + $0x24] sm:$0xf] %vm2980, %v2925
      %2991 = vst.msk [vmem:[%s435 + $0x28] sm:$0xf] %vm2980, %v2926
      %2992 = vst.msk [vmem:[%s435 + $0x2c] sm:$0xf] %vm2980, %v2927
      %2993 = vst.msk [vmem:[%s435 + $0x30] sm:$0xf] %vm2980, %v2928
      %2994 = vst.msk [vmem:[%s435 + $0x34] sm:$0xf] %vm2980, %v2929
      %2995 = vst.msk [vmem:[%s435 + $0x38] sm:$0xf] %vm2980, %v2930
      %2996 = vst.msk [vmem:[%s435 + $0x3c] sm:$0xf] %vm2980, %v2931
      %2997 = vst.msk [vmem:[%s435 + $0x40] sm:$0xf] %vm2980, %v2932
      %2998 = vst.msk [vmem:[%s435 + $0x44] sm:$0xf] %vm2980, %v2933
      %2999 = vst.msk [vmem:[%s435 + $0x48] sm:$0xf] %vm2980, %v2934
      %3000 = vst.msk [vmem:[%s435 + $0x4c] sm:$0xf] %vm2980, %v2935
      %3001 = vst.msk [vmem:[%s435 + $0x50] sm:$0xf] %vm2980, %v2936
      %3002 = vst.msk [vmem:[%s435 + $0x54] sm:$0xf] %vm2980, %v2937
      %3003 = vst.msk [vmem:[%s435 + $0x58] sm:$0xf] %vm2980, %v2938
      %3004 = vst.msk [vmem:[%s435 + $0x5c] sm:$0xf] %vm2980, %v2939
      %3005 = vst.msk [vmem:[%s435 + $0x60] sm:$0xf] %vm2980, %v2940
      %3006 = vst.msk [vmem:[%s435 + $0x64] sm:$0xf] %vm2980, %v2941
      %3007 = vst.msk [vmem:[%s435 + $0x68] sm:$0xf] %vm2980, %v2942
      %3008 = vst.msk [vmem:[%s435 + $0x6c] sm:$0xf] %vm2980, %v2943
      %3009 = vst.msk [vmem:[%s435 + $0x70] sm:$0xf] %vm2980, %v2944
      %3010 = vst.msk [vmem:[%s435 + $0x74] sm:$0xf] %vm2980, %v2945
      %3011 = vst.msk [vmem:[%s435 + $0x78] sm:$0xf] %vm2980, %v2946
      %3012 = vst.msk [vmem:[%s435 + $0x7c] sm:$0xf] %vm2980, %v2947
      %v3013 = vmul.f32 %v1537, %v2780
      %v3014 = vmul.f32 %v1540, %v2780
      %v3015 = vmul.f32 %v1545, %v2780
      %v3016 = vmul.f32 %v1548, %v2780
      %v3017 = vmul.f32 %v1553, %v2780
      %v3018 = vmul.f32 %v1556, %v2780
      %v3019 = vmul.f32 %v1561, %v2780
      %v3020 = vmul.f32 %v1564, %v2780
      %v3021 = vmul.f32 %v1569, %v2780
      %v3022 = vmul.f32 %v1572, %v2780
      %v3023 = vmul.f32 %v1577, %v2780
      %v3024 = vmul.f32 %v1580, %v2780
      %v3025 = vmul.f32 %v1585, %v2780
      %v3026 = vmul.f32 %v1588, %v2780
      %v3027 = vmul.f32 %v1593, %v2780
      %v3028 = vmul.f32 %v1596, %v2780
      %v3029 = vmul.f32 %v1601, %v2780
      %v3030 = vmul.f32 %v1604, %v2780
      %v3031 = vmul.f32 %v1609, %v2780
      %v3032 = vmul.f32 %v1612, %v2780
      %v3033 = vmul.f32 %v1617, %v2780
      %v3034 = vmul.f32 %v1620, %v2780
      %v3035 = vmul.f32 %v1625, %v2780
      %v3036 = vmul.f32 %v1628, %v2780
      %v3037 = vmul.f32 %v1633, %v2780
      %v3038 = vmul.f32 %v1636, %v2780
      %v3039 = vmul.f32 %v1641, %v2780
      %v3040 = vmul.f32 %v1644, %v2780
      %v3041 = vmul.f32 %v1649, %v2780
      %v3042 = vmul.f32 %v1652, %v2780
      %v3043 = vmul.f32 %v1657, %v2780
      %v3044 = vmul.f32 %v1660, %v2780
      %v3045 = vadd.f32 %v3013, %v2818
      %v3046 = vadd.f32 %v3014, %v2818
      %v3047 = vadd.f32 %v3015, %v2818
      %v3048 = vadd.f32 %v3016, %v2818
      %v3049 = vadd.f32 %v3017, %v2818
      %v3050 = vadd.f32 %v3018, %v2818
      %v3051 = vadd.f32 %v3019, %v2818
      %v3052 = vadd.f32 %v3020, %v2818
      %v3053 = vadd.f32 %v3021, %v2818
      %v3054 = vadd.f32 %v3022, %v2818
      %v3055 = vadd.f32 %v3023, %v2818
      %v3056 = vadd.f32 %v3024, %v2818
      %v3057 = vadd.f32 %v3025, %v2818
      %v3058 = vadd.f32 %v3026, %v2818
      %v3059 = vadd.f32 %v3027, %v2818
      %v3060 = vadd.f32 %v3028, %v2818
      %v3061 = vadd.f32 %v3029, %v2818
      %v3062 = vadd.f32 %v3030, %v2818
      %v3063 = vadd.f32 %v3031, %v2818
      %v3064 = vadd.f32 %v3032, %v2818
      %v3065 = vadd.f32 %v3033, %v2818
      %v3066 = vadd.f32 %v3034, %v2818
      %v3067 = vadd.f32 %v3035, %v2818
      %v3068 = vadd.f32 %v3036, %v2818
      %v3069 = vadd.f32 %v3037, %v2818
      %v3070 = vadd.f32 %v3038, %v2818
      %v3071 = vadd.f32 %v3039, %v2818
      %v3072 = vadd.f32 %v3040, %v2818
      %v3073 = vadd.f32 %v3041, %v2818
      %v3074 = vadd.f32 %v3042, %v2818
      %v3075 = vadd.f32 %v3043, %v2818
      %v3076 = vadd.f32 %v3044, %v2818
      %v3077 = vpack.c.bf16 %v3046, %v3045
      %v3078 = vpack.c.bf16 %v3048, %v3047
      %v3079 = vpack.c.bf16 %v3050, %v3049
      %v3080 = vpack.c.bf16 %v3052, %v3051
      %v3081 = vpack.c.bf16 %v3054, %v3053
      %v3082 = vpack.c.bf16 %v3056, %v3055
      %v3083 = vpack.c.bf16 %v3058, %v3057
      %v3084 = vpack.c.bf16 %v3060, %v3059
      %v3085 = vpack.c.bf16 %v3062, %v3061
      %v3086 = vpack.c.bf16 %v3064, %v3063
      %v3087 = vpack.c.bf16 %v3066, %v3065
      %v3088 = vpack.c.bf16 %v3068, %v3067
      %v3089 = vpack.c.bf16 %v3070, %v3069
      %v3090 = vpack.c.bf16 %v3072, %v3071
      %v3091 = vpack.c.bf16 %v3074, %v3073
      %v3092 = vpack.c.bf16 %v3076, %v3075
      %v3109 = vunpack.c.l.b16 %v3077
      %v3110 = vunpack.c.h.b16 %v3077
      %v3111 = vunpack.c.l.b16 %v3078
      %v3112 = vunpack.c.h.b16 %v3078
      %v3113 = vunpack.c.l.b16 %v3079
      %v3114 = vunpack.c.h.b16 %v3079
      %v3115 = vunpack.c.l.b16 %v3080
      %v3116 = vunpack.c.h.b16 %v3080
      %v3117 = vunpack.c.l.b16 %v3081
      %v3118 = vunpack.c.h.b16 %v3081
      %v3119 = vunpack.c.l.b16 %v3082
      %v3120 = vunpack.c.h.b16 %v3082
      %v3121 = vunpack.c.l.b16 %v3083
      %v3122 = vunpack.c.h.b16 %v3083
      %v3123 = vunpack.c.l.b16 %v3084
      %v3124 = vunpack.c.h.b16 %v3084
      %v3125 = vunpack.c.l.b16 %v3085
      %v3126 = vunpack.c.h.b16 %v3085
      %v3127 = vunpack.c.l.b16 %v3086
      %v3128 = vunpack.c.h.b16 %v3086
      %v3129 = vunpack.c.l.b16 %v3087
      %v3130 = vunpack.c.h.b16 %v3087
      %v3131 = vunpack.c.l.b16 %v3088
      %v3132 = vunpack.c.h.b16 %v3088
      %v3133 = vunpack.c.l.b16 %v3089
      %v3134 = vunpack.c.h.b16 %v3089
      %v3135 = vunpack.c.l.b16 %v3090
      %v3136 = vunpack.c.h.b16 %v3090
      %v3137 = vunpack.c.l.b16 %v3091
      %v3138 = vunpack.c.h.b16 %v3091
      %v3139 = vunpack.c.l.b16 %v3092
      %v3140 = vunpack.c.h.b16 %v3092
      %v3141 = vpack.c.b16 %v3109, %v3109
      %v3142 = vpack.c.b16 %v3110, %v3110
      %v3143 = vpack.c.b16 %v3111, %v3111
      %v3144 = vpack.c.b16 %v3112, %v3112
      %v3145 = vpack.c.b16 %v3113, %v3113
      %v3146 = vpack.c.b16 %v3114, %v3114
      %v3147 = vpack.c.b16 %v3115, %v3115
      %v3148 = vpack.c.b16 %v3116, %v3116
      %v3149 = vpack.c.b16 %v3117, %v3117
      %v3150 = vpack.c.b16 %v3118, %v3118
      %v3151 = vpack.c.b16 %v3119, %v3119
      %v3152 = vpack.c.b16 %v3120, %v3120
      %v3153 = vpack.c.b16 %v3121, %v3121
      %v3154 = vpack.c.b16 %v3122, %v3122
      %v3155 = vpack.c.b16 %v3123, %v3123
      %v3156 = vpack.c.b16 %v3124, %v3124
      %v3157 = vpack.c.b16 %v3125, %v3125
      %v3158 = vpack.c.b16 %v3126, %v3126
      %v3159 = vpack.c.b16 %v3127, %v3127
      %v3160 = vpack.c.b16 %v3128, %v3128
      %v3161 = vpack.c.b16 %v3129, %v3129
      %v3162 = vpack.c.b16 %v3130, %v3130
      %v3163 = vpack.c.b16 %v3131, %v3131
      %v3164 = vpack.c.b16 %v3132, %v3132
      %v3165 = vpack.c.b16 %v3133, %v3133
      %v3166 = vpack.c.b16 %v3134, %v3134
      %v3167 = vpack.c.b16 %v3135, %v3135
      %v3168 = vpack.c.b16 %v3136, %v3136
      %v3169 = vpack.c.b16 %v3137, %v3137
      %v3170 = vpack.c.b16 %v3138, %v3138
      %v3171 = vpack.c.b16 %v3139, %v3139
      %v3172 = vpack.c.b16 %v3140, %v3140
      %s3205 = scalar_lea.vmem %s435, 128
      %3206 = vst.msk [vmem:[%s3205] sm:$0xf] %vm2980, %v3141
      %3207 = vst.msk [vmem:[%s3205 + $0x4] sm:$0xf] %vm2980, %v3142
      %3208 = vst.msk [vmem:[%s3205 + $0x8] sm:$0xf] %vm2980, %v3143
      %3209 = vst.msk [vmem:[%s3205 + $0xc] sm:$0xf] %vm2980, %v3144
      %3210 = vst.msk [vmem:[%s3205 + $0x10] sm:$0xf] %vm2980, %v3145
      %3211 = vst.msk [vmem:[%s3205 + $0x14] sm:$0xf] %vm2980, %v3146
      %3212 = vst.msk [vmem:[%s3205 + $0x18] sm:$0xf] %vm2980, %v3147
      %3213 = vst.msk [vmem:[%s3205 + $0x1c] sm:$0xf] %vm2980, %v3148
      %3214 = vst.msk [vmem:[%s3205 + $0x20] sm:$0xf] %vm2980, %v3149
      %3215 = vst.msk [vmem:[%s3205 + $0x24] sm:$0xf] %vm2980, %v3150
      %3216 = vst.msk [vmem:[%s3205 + $0x28] sm:$0xf] %vm2980, %v3151
      %3217 = vst.msk [vmem:[%s3205 + $0x2c] sm:$0xf] %vm2980, %v3152
      %3218 = vst.msk [vmem:[%s3205 + $0x30] sm:$0xf] %vm2980, %v3153
      %3219 = vst.msk [vmem:[%s3205 + $0x34] sm:$0xf] %vm2980, %v3154
      %3220 = vst.msk [vmem:[%s3205 + $0x38] sm:$0xf] %vm2980, %v3155
      %3221 = vst.msk [vmem:[%s3205 + $0x3c] sm:$0xf] %vm2980, %v3156
      %3222 = vst.msk [vmem:[%s3205 + $0x40] sm:$0xf] %vm2980, %v3157
      %3223 = vst.msk [vmem:[%s3205 + $0x44] sm:$0xf] %vm2980, %v3158
      %3224 = vst.msk [vmem:[%s3205 + $0x48] sm:$0xf] %vm2980, %v3159
      %3225 = vst.msk [vmem:[%s3205 + $0x4c] sm:$0xf] %vm2980, %v3160
      %3226 = vst.msk [vmem:[%s3205 + $0x50] sm:$0xf] %vm2980, %v3161
      %3227 = vst.msk [vmem:[%s3205 + $0x54] sm:$0xf] %vm2980, %v3162
      %3228 = vst.msk [vmem:[%s3205 + $0x58] sm:$0xf] %vm2980, %v3163
      %3229 = vst.msk [vmem:[%s3205 + $0x5c] sm:$0xf] %vm2980, %v3164
      %3230 = vst.msk [vmem:[%s3205 + $0x60] sm:$0xf] %vm2980, %v3165
      %3231 = vst.msk [vmem:[%s3205 + $0x64] sm:$0xf] %vm2980, %v3166
      %3232 = vst.msk [vmem:[%s3205 + $0x68] sm:$0xf] %vm2980, %v3167
      %3233 = vst.msk [vmem:[%s3205 + $0x6c] sm:$0xf] %vm2980, %v3168
      %3234 = vst.msk [vmem:[%s3205 + $0x70] sm:$0xf] %vm2980, %v3169
      %3235 = vst.msk [vmem:[%s3205 + $0x74] sm:$0xf] %vm2980, %v3170
      %3236 = vst.msk [vmem:[%s3205 + $0x78] sm:$0xf] %vm2980, %v3171
      %3237 = vst.msk [vmem:[%s3205 + $0x7c] sm:$0xf] %vm2980, %v3172
      %v3238 = vmul.f32 %v1750, %v2780
      %v3239 = vmul.f32 %v1753, %v2780
      %v3240 = vmul.f32 %v1758, %v2780
      %v3241 = vmul.f32 %v1761, %v2780
      %v3242 = vmul.f32 %v1766, %v2780
      %v3243 = vmul.f32 %v1769, %v2780
      %v3244 = vmul.f32 %v1774, %v2780
      %v3245 = vmul.f32 %v1777, %v2780
      %v3246 = vmul.f32 %v1782, %v2780
      %v3247 = vmul.f32 %v1785, %v2780
      %v3248 = vmul.f32 %v1790, %v2780
      %v3249 = vmul.f32 %v1793, %v2780
      %v3250 = vmul.f32 %v1798, %v2780
      %v3251 = vmul.f32 %v1801, %v2780
      %v3252 = vmul.f32 %v1806, %v2780
      %v3253 = vmul.f32 %v1809, %v2780
      %v3254 = vmul.f32 %v1814, %v2780
      %v3255 = vmul.f32 %v1817, %v2780
      %v3256 = vmul.f32 %v1822, %v2780
      %v3257 = vmul.f32 %v1825, %v2780
      %v3258 = vmul.f32 %v1830, %v2780
      %v3259 = vmul.f32 %v1833, %v2780
      %v3260 = vmul.f32 %v1838, %v2780
      %v3261 = vmul.f32 %v1841, %v2780
      %v3262 = vmul.f32 %v1846, %v2780
      %v3263 = vmul.f32 %v1849, %v2780
      %v3264 = vmul.f32 %v1854, %v2780
      %v3265 = vmul.f32 %v1857, %v2780
      %v3266 = vmul.f32 %v1862, %v2780
      %v3267 = vmul.f32 %v1865, %v2780
      %v3268 = vmul.f32 %v1870, %v2780
      %v3269 = vmul.f32 %v1873, %v2780
      %v3270 = vadd.f32 %v3238, %v2818
      %v3271 = vadd.f32 %v3239, %v2818
      %v3272 = vadd.f32 %v3240, %v2818
      %v3273 = vadd.f32 %v3241, %v2818
      %v3274 = vadd.f32 %v3242, %v2818
      %v3275 = vadd.f32 %v3243, %v2818
      %v3276 = vadd.f32 %v3244, %v2818
      %v3277 = vadd.f32 %v3245, %v2818
      %v3278 = vadd.f32 %v3246, %v2818
      %v3279 = vadd.f32 %v3247, %v2818
      %v3280 = vadd.f32 %v3248, %v2818
      %v3281 = vadd.f32 %v3249, %v2818
      %v3282 = vadd.f32 %v3250, %v2818
      %v3283 = vadd.f32 %v3251, %v2818
      %v3284 = vadd.f32 %v3252, %v2818
      %v3285 = vadd.f32 %v3253, %v2818
      %v3286 = vadd.f32 %v3254, %v2818
      %v3287 = vadd.f32 %v3255, %v2818
      %v3288 = vadd.f32 %v3256, %v2818
      %v3289 = vadd.f32 %v3257, %v2818
      %v3290 = vadd.f32 %v3258, %v2818
      %v3291 = vadd.f32 %v3259, %v2818
      %v3292 = vadd.f32 %v3260, %v2818
      %v3293 = vadd.f32 %v3261, %v2818
      %v3294 = vadd.f32 %v3262, %v2818
      %v3295 = vadd.f32 %v3263, %v2818
      %v3296 = vadd.f32 %v3264, %v2818
      %v3297 = vadd.f32 %v3265, %v2818
      %v3298 = vadd.f32 %v3266, %v2818
      %v3299 = vadd.f32 %v3267, %v2818
      %v3300 = vadd.f32 %v3268, %v2818
      %v3301 = vadd.f32 %v3269, %v2818
      %v3302 = vpack.c.bf16 %v3271, %v3270
      %v3303 = vpack.c.bf16 %v3273, %v3272
      %v3304 = vpack.c.bf16 %v3275, %v3274
      %v3305 = vpack.c.bf16 %v3277, %v3276
      %v3306 = vpack.c.bf16 %v3279, %v3278
      %v3307 = vpack.c.bf16 %v3281, %v3280
      %v3308 = vpack.c.bf16 %v3283, %v3282
      %v3309 = vpack.c.bf16 %v3285, %v3284
      %v3310 = vpack.c.bf16 %v3287, %v3286
      %v3311 = vpack.c.bf16 %v3289, %v3288
      %v3312 = vpack.c.bf16 %v3291, %v3290
      %v3313 = vpack.c.bf16 %v3293, %v3292
      %v3314 = vpack.c.bf16 %v3295, %v3294
      %v3315 = vpack.c.bf16 %v3297, %v3296
      %v3316 = vpack.c.bf16 %v3299, %v3298
      %v3317 = vpack.c.bf16 %v3301, %v3300
      %v3334 = vunpack.c.l.b16 %v3302
      %v3335 = vunpack.c.h.b16 %v3302
      %v3336 = vunpack.c.l.b16 %v3303
      %v3337 = vunpack.c.h.b16 %v3303
      %v3338 = vunpack.c.l.b16 %v3304
      %v3339 = vunpack.c.h.b16 %v3304
      %v3340 = vunpack.c.l.b16 %v3305
      %v3341 = vunpack.c.h.b16 %v3305
      %v3342 = vunpack.c.l.b16 %v3306
      %v3343 = vunpack.c.h.b16 %v3306
      %v3344 = vunpack.c.l.b16 %v3307
      %v3345 = vunpack.c.h.b16 %v3307
      %v3346 = vunpack.c.l.b16 %v3308
      %v3347 = vunpack.c.h.b16 %v3308
      %v3348 = vunpack.c.l.b16 %v3309
      %v3349 = vunpack.c.h.b16 %v3309
      %v3350 = vunpack.c.l.b16 %v3310
      %v3351 = vunpack.c.h.b16 %v3310
      %v3352 = vunpack.c.l.b16 %v3311
      %v3353 = vunpack.c.h.b16 %v3311
      %v3354 = vunpack.c.l.b16 %v3312
      %v3355 = vunpack.c.h.b16 %v3312
      %v3356 = vunpack.c.l.b16 %v3313
      %v3357 = vunpack.c.h.b16 %v3313
      %v3358 = vunpack.c.l.b16 %v3314
      %v3359 = vunpack.c.h.b16 %v3314
      %v3360 = vunpack.c.l.b16 %v3315
      %v3361 = vunpack.c.h.b16 %v3315
      %v3362 = vunpack.c.l.b16 %v3316
      %v3363 = vunpack.c.h.b16 %v3316
      %v3364 = vunpack.c.l.b16 %v3317
      %v3365 = vunpack.c.h.b16 %v3317
      %v3366 = vpack.c.b16 %v3334, %v3334
      %v3367 = vpack.c.b16 %v3335, %v3335
      %v3368 = vpack.c.b16 %v3336, %v3336
      %v3369 = vpack.c.b16 %v3337, %v3337
      %v3370 = vpack.c.b16 %v3338, %v3338
      %v3371 = vpack.c.b16 %v3339, %v3339
      %v3372 = vpack.c.b16 %v3340, %v3340
      %v3373 = vpack.c.b16 %v3341, %v3341
      %v3374 = vpack.c.b16 %v3342, %v3342
      %v3375 = vpack.c.b16 %v3343, %v3343
      %v3376 = vpack.c.b16 %v3344, %v3344
      %v3377 = vpack.c.b16 %v3345, %v3345
      %v3378 = vpack.c.b16 %v3346, %v3346
      %v3379 = vpack.c.b16 %v3347, %v3347
      %v3380 = vpack.c.b16 %v3348, %v3348
      %v3381 = vpack.c.b16 %v3349, %v3349
      %v3382 = vpack.c.b16 %v3350, %v3350
      %v3383 = vpack.c.b16 %v3351, %v3351
      %v3384 = vpack.c.b16 %v3352, %v3352
      %v3385 = vpack.c.b16 %v3353, %v3353
      %v3386 = vpack.c.b16 %v3354, %v3354
      %v3387 = vpack.c.b16 %v3355, %v3355
      %v3388 = vpack.c.b16 %v3356, %v3356
      %v3389 = vpack.c.b16 %v3357, %v3357
      %v3390 = vpack.c.b16 %v3358, %v3358
      %v3391 = vpack.c.b16 %v3359, %v3359
      %v3392 = vpack.c.b16 %v3360, %v3360
      %v3393 = vpack.c.b16 %v3361, %v3361
      %v3394 = vpack.c.b16 %v3362, %v3362
      %v3395 = vpack.c.b16 %v3363, %v3363
      %v3396 = vpack.c.b16 %v3364, %v3364
      %v3397 = vpack.c.b16 %v3365, %v3365
      %s3430 = scalar_lea.vmem %s435, 256
      %3431 = vst.msk [vmem:[%s3430] sm:$0xf] %vm2980, %v3366
      %3432 = vst.msk [vmem:[%s3430 + $0x4] sm:$0xf] %vm2980, %v3367
      %3433 = vst.msk [vmem:[%s3430 + $0x8] sm:$0xf] %vm2980, %v3368
      %3434 = vst.msk [vmem:[%s3430 + $0xc] sm:$0xf] %vm2980, %v3369
      %3435 = vst.msk [vmem:[%s3430 + $0x10] sm:$0xf] %vm2980, %v3370
      %3436 = vst.msk [vmem:[%s3430 + $0x14] sm:$0xf] %vm2980, %v3371
      %3437 = vst.msk [vmem:[%s3430 + $0x18] sm:$0xf] %vm2980, %v3372
      %3438 = vst.msk [vmem:[%s3430 + $0x1c] sm:$0xf] %vm2980, %v3373
      %3439 = vst.msk [vmem:[%s3430 + $0x20] sm:$0xf] %vm2980, %v3374
      %3440 = vst.msk [vmem:[%s3430 + $0x24] sm:$0xf] %vm2980, %v3375
      %3441 = vst.msk [vmem:[%s3430 + $0x28] sm:$0xf] %vm2980, %v3376
      %3442 = vst.msk [vmem:[%s3430 + $0x2c] sm:$0xf] %vm2980, %v3377
      %3443 = vst.msk [vmem:[%s3430 + $0x30] sm:$0xf] %vm2980, %v3378
      %3444 = vst.msk [vmem:[%s3430 + $0x34] sm:$0xf] %vm2980, %v3379
      %3445 = vst.msk [vmem:[%s3430 + $0x38] sm:$0xf] %vm2980, %v3380
      %3446 = vst.msk [vmem:[%s3430 + $0x3c] sm:$0xf] %vm2980, %v3381
      %3447 = vst.msk [vmem:[%s3430 + $0x40] sm:$0xf] %vm2980, %v3382
      %3448 = vst.msk [vmem:[%s3430 + $0x44] sm:$0xf] %vm2980, %v3383
      %3449 = vst.msk [vmem:[%s3430 + $0x48] sm:$0xf] %vm2980, %v3384
      %3450 = vst.msk [vmem:[%s3430 + $0x4c] sm:$0xf] %vm2980, %v3385
      %3451 = vst.msk [vmem:[%s3430 + $0x50] sm:$0xf] %vm2980, %v3386
      %3452 = vst.msk [vmem:[%s3430 + $0x54] sm:$0xf] %vm2980, %v3387
      %3453 = vst.msk [vmem:[%s3430 + $0x58] sm:$0xf] %vm2980, %v3388
      %3454 = vst.msk [vmem:[%s3430 + $0x5c] sm:$0xf] %vm2980, %v3389
      %3455 = vst.msk [vmem:[%s3430 + $0x60] sm:$0xf] %vm2980, %v3390
      %3456 = vst.msk [vmem:[%s3430 + $0x64] sm:$0xf] %vm2980, %v3391
      %3457 = vst.msk [vmem:[%s3430 + $0x68] sm:$0xf] %vm2980, %v3392
      %3458 = vst.msk [vmem:[%s3430 + $0x6c] sm:$0xf] %vm2980, %v3393
      %3459 = vst.msk [vmem:[%s3430 + $0x70] sm:$0xf] %vm2980, %v3394
      %3460 = vst.msk [vmem:[%s3430 + $0x74] sm:$0xf] %vm2980, %v3395
      %3461 = vst.msk [vmem:[%s3430 + $0x78] sm:$0xf] %vm2980, %v3396
      %3462 = vst.msk [vmem:[%s3430 + $0x7c] sm:$0xf] %vm2980, %v3397
      %v3463 = vmul.f32 %v1952, %v2780
      %v3464 = vmul.f32 %v1955, %v2780
      %v3465 = vmul.f32 %v1960, %v2780
      %v3466 = vmul.f32 %v1963, %v2780
      %v3467 = vmul.f32 %v1968, %v2780
      %v3468 = vmul.f32 %v1971, %v2780
      %v3469 = vmul.f32 %v1976, %v2780
      %v3470 = vmul.f32 %v1979, %v2780
      %v3471 = vmul.f32 %v1984, %v2780
      %v3472 = vmul.f32 %v1987, %v2780
      %v3473 = vmul.f32 %v1992, %v2780
      %v3474 = vmul.f32 %v1995, %v2780
      %v3475 = vmul.f32 %v2000, %v2780
      %v3476 = vmul.f32 %v2003, %v2780
      %v3477 = vmul.f32 %v2008, %v2780
      %v3478 = vmul.f32 %v2011, %v2780
      %v3479 = vmul.f32 %v2016, %v2780
      %v3480 = vmul.f32 %v2019, %v2780
      %v3481 = vmul.f32 %v2024, %v2780
      %v3482 = vmul.f32 %v2027, %v2780
      %v3483 = vmul.f32 %v2032, %v2780
      %v3484 = vmul.f32 %v2035, %v2780
      %v3485 = vmul.f32 %v2040, %v2780
      %v3486 = vmul.f32 %v2043, %v2780
      %v3487 = vmul.f32 %v2048, %v2780
      %v3488 = vmul.f32 %v2051, %v2780
      %v3489 = vmul.f32 %v2056, %v2780
      %v3490 = vmul.f32 %v2059, %v2780
      %v3491 = vmul.f32 %v2064, %v2780
      %v3492 = vmul.f32 %v2067, %v2780
      %v3493 = vmul.f32 %v2072, %v2780
      %v3494 = vmul.f32 %v2075, %v2780
      %v3495 = vadd.f32 %v3463, %v2818
      %v3496 = vadd.f32 %v3464, %v2818
      %v3497 = vadd.f32 %v3465, %v2818
      %v3498 = vadd.f32 %v3466, %v2818
      %v3499 = vadd.f32 %v3467, %v2818
      %v3500 = vadd.f32 %v3468, %v2818
      %v3501 = vadd.f32 %v3469, %v2818
      %v3502 = vadd.f32 %v3470, %v2818
      %v3503 = vadd.f32 %v3471, %v2818
      %v3504 = vadd.f32 %v3472, %v2818
      %v3505 = vadd.f32 %v3473, %v2818
      %v3506 = vadd.f32 %v3474, %v2818
      %v3507 = vadd.f32 %v3475, %v2818
      %v3508 = vadd.f32 %v3476, %v2818
      %v3509 = vadd.f32 %v3477, %v2818
      %v3510 = vadd.f32 %v3478, %v2818
      %v3511 = vadd.f32 %v3479, %v2818
      %v3512 = vadd.f32 %v3480, %v2818
      %v3513 = vadd.f32 %v3481, %v2818
      %v3514 = vadd.f32 %v3482, %v2818
      %v3515 = vadd.f32 %v3483, %v2818
      %v3516 = vadd.f32 %v3484, %v2818
      %v3517 = vadd.f32 %v3485, %v2818
      %v3518 = vadd.f32 %v3486, %v2818
      %v3519 = vadd.f32 %v3487, %v2818
      %v3520 = vadd.f32 %v3488, %v2818
      %v3521 = vadd.f32 %v3489, %v2818
      %v3522 = vadd.f32 %v3490, %v2818
      %v3523 = vadd.f32 %v3491, %v2818
      %v3524 = vadd.f32 %v3492, %v2818
      %v3525 = vadd.f32 %v3493, %v2818
      %v3526 = vadd.f32 %v3494, %v2818
      %v3527 = vpack.c.bf16 %v3496, %v3495
      %v3528 = vpack.c.bf16 %v3498, %v3497
      %v3529 = vpack.c.bf16 %v3500, %v3499
      %v3530 = vpack.c.bf16 %v3502, %v3501
      %v3531 = vpack.c.bf16 %v3504, %v3503
      %v3532 = vpack.c.bf16 %v3506, %v3505
      %v3533 = vpack.c.bf16 %v3508, %v3507
      %v3534 = vpack.c.bf16 %v3510, %v3509
      %v3535 = vpack.c.bf16 %v3512, %v3511
      %v3536 = vpack.c.bf16 %v3514, %v3513
      %v3537 = vpack.c.bf16 %v3516, %v3515
      %v3538 = vpack.c.bf16 %v3518, %v3517
      %v3539 = vpack.c.bf16 %v3520, %v3519
      %v3540 = vpack.c.bf16 %v3522, %v3521
      %v3541 = vpack.c.bf16 %v3524, %v3523
      %v3542 = vpack.c.bf16 %v3526, %v3525
      %v3559 = vunpack.c.l.b16 %v3527
      %v3560 = vunpack.c.h.b16 %v3527
      %v3561 = vunpack.c.l.b16 %v3528
      %v3562 = vunpack.c.h.b16 %v3528
      %v3563 = vunpack.c.l.b16 %v3529
      %v3564 = vunpack.c.h.b16 %v3529
      %v3565 = vunpack.c.l.b16 %v3530
      %v3566 = vunpack.c.h.b16 %v3530
      %v3567 = vunpack.c.l.b16 %v3531
      %v3568 = vunpack.c.h.b16 %v3531
      %v3569 = vunpack.c.l.b16 %v3532
      %v3570 = vunpack.c.h.b16 %v3532
      %v3571 = vunpack.c.l.b16 %v3533
      %v3572 = vunpack.c.h.b16 %v3533
      %v3573 = vunpack.c.l.b16 %v3534
      %v3574 = vunpack.c.h.b16 %v3534
      %v3575 = vunpack.c.l.b16 %v3535
      %v3576 = vunpack.c.h.b16 %v3535
      %v3577 = vunpack.c.l.b16 %v3536
      %v3578 = vunpack.c.h.b16 %v3536
      %v3579 = vunpack.c.l.b16 %v3537
      %v3580 = vunpack.c.h.b16 %v3537
      %v3581 = vunpack.c.l.b16 %v3538
      %v3582 = vunpack.c.h.b16 %v3538
      %v3583 = vunpack.c.l.b16 %v3539
      %v3584 = vunpack.c.h.b16 %v3539
      %v3585 = vunpack.c.l.b16 %v3540
      %v3586 = vunpack.c.h.b16 %v3540
      %v3587 = vunpack.c.l.b16 %v3541
      %v3588 = vunpack.c.h.b16 %v3541
      %v3589 = vunpack.c.l.b16 %v3542
      %v3590 = vunpack.c.h.b16 %v3542
      %v3591 = vpack.c.b16 %v3559, %v3559
      %v3592 = vpack.c.b16 %v3560, %v3560
      %v3593 = vpack.c.b16 %v3561, %v3561
      %v3594 = vpack.c.b16 %v3562, %v3562
      %v3595 = vpack.c.b16 %v3563, %v3563
      %v3596 = vpack.c.b16 %v3564, %v3564
      %v3597 = vpack.c.b16 %v3565, %v3565
      %v3598 = vpack.c.b16 %v3566, %v3566
      %v3599 = vpack.c.b16 %v3567, %v3567
      %v3600 = vpack.c.b16 %v3568, %v3568
      %v3601 = vpack.c.b16 %v3569, %v3569
      %v3602 = vpack.c.b16 %v3570, %v3570
      %v3603 = vpack.c.b16 %v3571, %v3571
      %v3604 = vpack.c.b16 %v3572, %v3572
      %v3605 = vpack.c.b16 %v3573, %v3573
      %v3606 = vpack.c.b16 %v3574, %v3574
      %v3607 = vpack.c.b16 %v3575, %v3575
      %v3608 = vpack.c.b16 %v3576, %v3576
      %v3609 = vpack.c.b16 %v3577, %v3577
      %v3610 = vpack.c.b16 %v3578, %v3578
      %v3611 = vpack.c.b16 %v3579, %v3579
      %v3612 = vpack.c.b16 %v3580, %v3580
      %v3613 = vpack.c.b16 %v3581, %v3581
      %v3614 = vpack.c.b16 %v3582, %v3582
      %v3615 = vpack.c.b16 %v3583, %v3583
      %v3616 = vpack.c.b16 %v3584, %v3584
      %v3617 = vpack.c.b16 %v3585, %v3585
      %v3618 = vpack.c.b16 %v3586, %v3586
      %v3619 = vpack.c.b16 %v3587, %v3587
      %v3620 = vpack.c.b16 %v3588, %v3588
      %v3621 = vpack.c.b16 %v3589, %v3589
      %v3622 = vpack.c.b16 %v3590, %v3590
      %s3655 = scalar_lea.vmem %s435, 384
      %3656 = vst.msk [vmem:[%s3655] sm:$0xf] %vm2980, %v3591
      %3657 = vst.msk [vmem:[%s3655 + $0x4] sm:$0xf] %vm2980, %v3592
      %3658 = vst.msk [vmem:[%s3655 + $0x8] sm:$0xf] %vm2980, %v3593
      %3659 = vst.msk [vmem:[%s3655 + $0xc] sm:$0xf] %vm2980, %v3594
      %3660 = vst.msk [vmem:[%s3655 + $0x10] sm:$0xf] %vm2980, %v3595
      %3661 = vst.msk [vmem:[%s3655 + $0x14] sm:$0xf] %vm2980, %v3596
      %3662 = vst.msk [vmem:[%s3655 + $0x18] sm:$0xf] %vm2980, %v3597
      %3663 = vst.msk [vmem:[%s3655 + $0x1c] sm:$0xf] %vm2980, %v3598
      %3664 = vst.msk [vmem:[%s3655 + $0x20] sm:$0xf] %vm2980, %v3599
      %3665 = vst.msk [vmem:[%s3655 + $0x24] sm:$0xf] %vm2980, %v3600
      %3666 = vst.msk [vmem:[%s3655 + $0x28] sm:$0xf] %vm2980, %v3601
      %3667 = vst.msk [vmem:[%s3655 + $0x2c] sm:$0xf] %vm2980, %v3602
      %3668 = vst.msk [vmem:[%s3655 + $0x30] sm:$0xf] %vm2980, %v3603
      %3669 = vst.msk [vmem:[%s3655 + $0x34] sm:$0xf] %vm2980, %v3604
      %3670 = vst.msk [vmem:[%s3655 + $0x38] sm:$0xf] %vm2980, %v3605
      %3671 = vst.msk [vmem:[%s3655 + $0x3c] sm:$0xf] %vm2980, %v3606
      %3672 = vst.msk [vmem:[%s3655 + $0x40] sm:$0xf] %vm2980, %v3607
      %3673 = vst.msk [vmem:[%s3655 + $0x44] sm:$0xf] %vm2980, %v3608
      %3674 = vst.msk [vmem:[%s3655 + $0x48] sm:$0xf] %vm2980, %v3609
      %3675 = vst.msk [vmem:[%s3655 + $0x4c] sm:$0xf] %vm2980, %v3610
      %3676 = vst.msk [vmem:[%s3655 + $0x50] sm:$0xf] %vm2980, %v3611
      %3677 = vst.msk [vmem:[%s3655 + $0x54] sm:$0xf] %vm2980, %v3612
      %3678 = vst.msk [vmem:[%s3655 + $0x58] sm:$0xf] %vm2980, %v3613
      %3679 = vst.msk [vmem:[%s3655 + $0x5c] sm:$0xf] %vm2980, %v3614
      %3680 = vst.msk [vmem:[%s3655 + $0x60] sm:$0xf] %vm2980, %v3615
      %3681 = vst.msk [vmem:[%s3655 + $0x64] sm:$0xf] %vm2980, %v3616
      %3682 = vst.msk [vmem:[%s3655 + $0x68] sm:$0xf] %vm2980, %v3617
      %3683 = vst.msk [vmem:[%s3655 + $0x6c] sm:$0xf] %vm2980, %v3618
      %3684 = vst.msk [vmem:[%s3655 + $0x70] sm:$0xf] %vm2980, %v3619
      %3685 = vst.msk [vmem:[%s3655 + $0x74] sm:$0xf] %vm2980, %v3620
      %3686 = vst.msk [vmem:[%s3655 + $0x78] sm:$0xf] %vm2980, %v3621
      %3687 = vst.msk [vmem:[%s3655 + $0x7c] sm:$0xf] %vm2980, %v3622
      %p3688 = scmp.lt.s32.totalorder %s23, 1
      %s3689 = scalar_select %p3688, %s23, 1
      %p3690 = scmp.lt.s32.totalorder %s24, 0
      %s3691 = scalar_select %p3690, %s24, 0
      %s3692 = smul.addr %s3689, 128
      %s3693 = sadd.s32 %s3691, %s3692
      %s3694 = smul.addr %s3693, 4
      %s3695 = scalar_lea.vmem %s8, %s3694
      // Predicated region
      $region57: #{upsample_conv_forward.1} parent=51 // pred_check
        %p3696 = pneg %p259
      $region58: #{upsample_conv_forward.1} parent=51 // pred_check_branch
        %3698 = sbr.rel (%p3696) target = $region60
      $region59: #{upsample_conv_forward.1} parent=51 // pred_region
        _
      $region60: #{upsample_conv_forward.1} parent=51 // pred_fallthru
        _
    $region52: #{upsample_conv_forward.1} parent=5 // pred_fallthru
      _
    %p3699 = scmp.le.s32.totalorder 2, %s14
    // Predicated region
    $region61: #{upsample_conv_forward.1} parent=5 // pred_check
      %p3700 = pneg %p3699
    $region62: #{upsample_conv_forward.1} parent=5 // pred_check_branch
      %3702 = sbr.rel (%p3700) target = $region64
    $region63: #{upsample_conv_forward.1} parent=5 // pred_region
      %s3703 = ssub.s32 %s14, 2
      // Predicated region
      $region65: #{upsample_conv_forward.1} parent=63 // pred_check
        %p3704 = pneg %p265
      $region66: #{upsample_conv_forward.1} parent=63 // pred_check_branch
        %3706 = sbr.rel (%p3704) target = $region68
      $region67: #{upsample_conv_forward.1} parent=63 // pred_region
        %p3707 = scmp.lt.s32.totalorder %s25, 1
        %s3708 = scalar_select %p3707, %s25, 1
        %p3709 = scmp.lt.s32.totalorder %s26, 0
        %s3710 = scalar_select %p3709, %s26, 0
        %s3711 = smul.addr %s3708, 128
        %s3712 = sadd.s32 %s3710, %s3711
        %s3713 = smul.addr %s3712, 4
        %s3714 = scalar_lea.vmem %s8, %s3713
      $region68: #{upsample_conv_forward.1} parent=63 // pred_fallthru
        _
    $region64: #{upsample_conv_forward.1} parent=5 // pred_fallthru
      _
  $region6: #{upsample_conv_forward.1} parent=0 // loop_footer
    %s18 = sadd.s32 1, %s14
  $region7: #{upsample_conv_forward.1} parent=0 // loop_footer_branch
    %13 = sbr.rel target = $region3
  $region8: #{upsample_conv_forward.1} parent=0 // loop_exit
    _

</llo_original>
